<compile_context>
chip_gen: v7x
topology: tpu7x:2x2x1
jax: 0.10.0
libtpu: 0.0.40
codegen_flags: <defaults>
</compile_context>

<pallas_src>
import numpy as np
import jax
import jax.numpy as jnp
from jax.experimental import pallas as pl
from jax.experimental.pallas import tpu as pltpu


# ----------------------------------------------------------------------------
# Fused Pallas kernel
# ----------------------------------------------------------------------------
def _hr_module_kernel(x0_ref, x1_ref,
                      b0bd1_ref, b0bd2_ref, b1bd1_ref, b1bd2_ref,
                      f10bd_ref, mcomp_ref,
                      sh0_ref, sh1_ref, rsel_ref, ahn_ref, bias_ref,
                      y0_ref, y1_ref):
    f32, bf16 = jnp.float32, jnp.bfloat16

    def conv3x3(x, bands_ref, sdn, sup, bias, relu, residual=None):
        """3x3 / stride-1 / pad-1 conv on a lane-dense slab.

        Y = Sdn @ X @ B0  +  X @ B1  +  Sup @ X @ B2
        Bk are host-built banded (W*Cin, W*Cout) matrices (kw shift + padding
        + BN scale folded); Sdn/Sup are block-diagonal +-1 row shifts (kh).
        bf16 MXU operands, f32 accumulation, f32 epilogue.
        """
        xdn = jnp.dot(sdn, x, preferred_element_type=f32)
        xup = jnp.dot(sup, x, preferred_element_type=f32)
        y = (jnp.dot(xdn.astype(bf16), bands_ref[0], preferred_element_type=f32)
             + jnp.dot(x.astype(bf16), bands_ref[1], preferred_element_type=f32)
             + jnp.dot(xup.astype(bf16), bands_ref[2], preferred_element_type=f32))
        y = y + bias
        if residual is not None:
            y = y + residual
        if relu:
            y = jnp.maximum(y, 0.0)
        return y

    x0 = x0_ref[...]                               # (N*H0, W0*C0) f32, lane-dense
    x1 = x1_ref[...]                               # (N*H1, W1*C1) f32, lane-dense
    sdn0, sup0 = sh0_ref[0], sh0_ref[1]
    sdn1, sup1 = sh1_ref[0], sh1_ref[1]

    # ---------------- branch 0 / branch 1 : BasicBlock ----------------
    h0 = conv3x3(x0, b0bd1_ref, sdn0, sup0, bias_ref[0:1, :], relu=True)
    x0b = conv3x3(h0, b0bd2_ref, sdn0, sup0, bias_ref[1:2, :], relu=True,
                  residual=x0)
    h1 = conv3x3(x1, b1bd1_ref, sdn1, sup1, bias_ref[2:3, :], relu=True)
    x1b = conv3x3(h1, b1bd2_ref, sdn1, sup1, bias_ref[3:4, :], relu=True,
                  residual=x1)

    # -------- fuse output 1 : ReLU( conv3x3_stride2_bn(x0b) + x1b ) --------
    # Row decimation = row-select matmul, column decimation folded into the
    # stride-2 band matrices -> only the H1*W1 outputs are ever computed.
    d = bias_ref[4:5, :]
    for kh in range(3):
        t = jnp.dot(rsel_ref[kh], x0b, preferred_element_type=f32)   # (N*H1, 128)
        d = d + jnp.dot(t.astype(bf16), f10bd_ref[kh],
                        preferred_element_type=f32)
    y1_ref[...] = jnp.maximum(d + x1b, 0.0)

    # ---- fuse output 0 : ReLU( x0b + upsample(conv1x1_bn(x1b)) ) ----
    # mcomp = kron(Aw^T, W_1x1) fuses the 1x1 conv with the W-interp (stays
    # lane-dense); ahn = kron(I_N, Ah) does the H-interp in one matmul; the
    # 1x1 bias commutes past the row-stochastic interps and is added last.
    p = jnp.dot(x1b.astype(bf16), mcomp_ref[...], preferred_element_type=f32)
    up = jnp.dot(ahn_ref[...], p, preferred_element_type=f32) + bias_ref[5:6, :]
    y0_ref[...] = jnp.maximum(x0b + up, 0.0)


# ----------------------------------------------------------------------------
# Host-side operand construction (all numpy, done once)
# ----------------------------------------------------------------------------
def _interp_matrix(out_size, in_size):
    """Row-stochastic bilinear interpolation matrix, align_corners=True."""
    if out_size == 1:
        a = np.zeros((1, in_size), np.float32)
        a[0, 0] = 1.0
        return a
    src = np.arange(out_size, dtype=np.float64) * (in_size - 1) / (out_size - 1)
    i0 = np.clip(np.floor(src).astype(np.int64), 0, in_size - 1)
    i1 = np.clip(i0 + 1, 0, in_size - 1)
    frac = (src - i0).astype(np.float32)
    a = np.zeros((out_size, in_size), np.float32)
    rows = np.arange(out_size)
    np.add.at(a, (rows, i0), 1.0 - frac)
    np.add.at(a, (rows, i1), frac)
    return a


def _band_matrices(w_hwio, w_in, w_out, stride):
    """Per-kh banded (w_in*Cin, w_out*Cout) matrices: kw shift + zero pad."""
    kh_, kw_, cin, cout = w_hwio.shape
    bands = np.zeros((kh_, w_in * cin, w_out * cout), np.float32)
    for kh in range(kh_):
        for ow in range(w_out):
            for kw in range(kw_):
                iw = stride * ow + kw - (kw_ // 2)
                if 0 <= iw < w_in:
                    bands[kh, iw * cin:(iw + 1) * cin,
                          ow * cout:(ow + 1) * cout] = w_hwio[kh, kw]
    return bands


def _shift_matrices(n, h):
    """(2, n*h, n*h): block-diag row shift down (kh=0) / up (kh=2)."""
    eye_n = np.eye(n, dtype=np.float32)
    sdn = np.kron(eye_n, np.eye(h, k=-1, dtype=np.float32))
    sup = np.kron(eye_n, np.eye(h, k=1, dtype=np.float32))
    return np.stack([sdn, sup])


def _row_select_s2(n, h_in, h_out):
    """(3, n*h_out, n*h_in): stride-2 row selection per kh (with zero pad)."""
    eye_n = np.eye(n, dtype=np.float32)
    out = []
    for kh in range(3):
        r = np.zeros((h_out, h_in), np.float32)
        for oh in range(h_out):
            ih = 2 * oh + kh - 1
            if 0 <= ih < h_in:
                r[oh, ih] = 1.0
        out.append(np.kron(eye_n, r))
    return np.stack(out)


def _prep_conv_bn(key, cin, cout, ksz, eps=1e-5):
    """Random PyTorch-layout conv + BN, folded to HWIO weight + bias (numpy)."""
    k1, k2, k3, k4, k5 = jax.random.split(key, 5)
    w = 0.1 * jax.random.normal(k1, (cout, cin, ksz, ksz), jnp.float32)   # OIHW
    gamma = 1.0 + 0.1 * jax.random.normal(k2, (cout,), jnp.float32)
    beta = 0.1 * jax.random.normal(k3, (cout,), jnp.float32)
    mean = 0.1 * jax.random.normal(k4, (cout,), jnp.float32)
    var = 1.0 + 0.1 * jnp.abs(jax.random.normal(k5, (cout,), jnp.float32))
    scale = gamma / jnp.sqrt(var + eps)
    bias = beta - mean * scale
    w_hwio = jnp.transpose(w, (2, 3, 1, 0)) * scale[None, None, None, :]
    return np.asarray(w_hwio), np.asarray(bias)


def build_operands(params, N, H0, W0, C0, H1, W1, C1):
    """Fold weights/BN/interp into the lane-dense matmul operands."""
    bf = jnp.bfloat16
    ops = {
        "b0bd1": jnp.asarray(_band_matrices(params["b0w1"], W0, W0, 1), bf),
        "b0bd2": jnp.asarray(_band_matrices(params["b0w2"], W0, W0, 1), bf),
        "b1bd1": jnp.asarray(_band_matrices(params["b1w1"], W1, W1, 1), bf),
        "b1bd2": jnp.asarray(_band_matrices(params["b1w2"], W1, W1, 1), bf),
        "f10bd": jnp.asarray(_band_matrices(params["f10w"], W0, W1, 2), bf),
        "sh0": jnp.asarray(_shift_matrices(N, H0), jnp.float32),
        "sh1": jnp.asarray(_shift_matrices(N, H1), jnp.float32),
        "rsel": jnp.asarray(_row_select_s2(N, H0, H1), jnp.float32),
    }
    ah = _interp_matrix(H0, H1)
    aw = _interp_matrix(W0, W1)
    ops["ahn"] = jnp.asarray(np.kron(np.eye(N, dtype=np.float32), ah), jnp.float32)
    w01 = params["f01w"][0, 0]                                   # (C1, C0) BN-folded
    ops["mcomp"] = jnp.asarray(np.kron(aw.T, w01), bf)           # (W1*C1, W0*C0)
    ops["bias"] = jnp.asarray(np.stack([
        np.tile(params["b0b1"], W0), np.tile(params["b0b2"], W0),
        np.tile(params["b1b1"], W1), np.tile(params["b1b2"], W1),
        np.tile(params["f10b"], W1), np.tile(params["f01b"], W0),
    ]), jnp.float32)
    return ops


def hr_module_forward(x0, x1, ops):
    """x0: (N,H0,W0,C0), x1: (N,H1,W1,C1) NHWC.  Returns [y0, y1] NHWC."""
    N, H0, W0, C0 = x0.shape
    _, H1, W1, C1 = x1.shape
    assert (H1, W1) == (H0 // 2, W0 // 2)

    # Lane-dense slabs (free contiguous reshapes).
    x0s = x0.reshape(N * H0, W0 * C0)
    x1s = x1.reshape(N * H1, W1 * C1)

    mm = lambda m, k, n: 2 * m * k * n
    flops = (2 * (2 * mm(N * H0, N * H0, W0 * C0) + 3 * mm(N * H0, W0 * C0, W0 * C0))
             + 2 * (2 * mm(N * H1, N * H1, W1 * C1) + 3 * mm(N * H1, W1 * C1, W1 * C1))
             + 3 * (mm(N * H1, N * H0, W0 * C0) + mm(N * H1, W0 * C0, W1 * C1))
             + mm(N * H1, W1 * C1, W0 * C0) + mm(N * H0, N * H1, W0 * C0))

    args = (x0s, x1s, ops["b0bd1"], ops["b0bd2"], ops["b1bd1"], ops["b1bd2"],
            ops["f10bd"], ops["mcomp"], ops["sh0"], ops["sh1"], ops["rsel"],
            ops["ahn"], ops["bias"])
    bytes_accessed = sum(int(np.prod(a.shape)) * a.dtype.itemsize for a in args)
    bytes_accessed += (N * H0 * W0 * C0 + N * H1 * W1 * C1) * 4   # outputs

    y0s, y1s = pl.pallas_call(
        _hr_module_kernel,
        out_shape=(jax.ShapeDtypeStruct((N * H0, W0 * C0), jnp.float32),
                   jax.ShapeDtypeStruct((N * H1, W1 * C1), jnp.float32)),
        compiler_params=pltpu.CompilerParams(vmem_limit_bytes=64 * 1024 * 1024),
        cost_estimate=pl.CostEstimate(flops=int(flops), transcendentals=0,
                                      bytes_accessed=int(bytes_accessed)),
    )(*args)

    return [y0s.reshape(N, H0, W0, C0), y1s.reshape(N, H1, W1, C1)]


# ----------------------------------------------------------------------------
# Pure-JAX reference (for correctness check only)
# ----------------------------------------------------------------------------
def _ref_forward(x0, x1, params):
    hp = jax.lax.Precision.HIGHEST

    def conv_bn(x, w_hwio, bias, stride):
        k = w_hwio.shape[0]
        pad = (k - 1) // 2
        y = jax.lax.conv_general_dilated(
            x, jnp.asarray(w_hwio), (stride, stride), [(pad, pad), (pad, pad)],
            dimension_numbers=("NHWC", "HWIO", "NHWC"), precision=hp)
        return y + jnp.asarray(bias).reshape(1, 1, 1, -1)

    def basic_block(x, w1, b1, w2, b2):
        h = jax.nn.relu(conv_bn(x, w1, b1, 1))
        return jax.nn.relu(conv_bn(h, w2, b2, 1) + x)

    x0b = basic_block(x0, params["b0w1"], params["b0b1"], params["b0w2"], params["b0b2"])
    x1b = basic_block(x1, params["b1w1"], params["b1b1"], params["b1w2"], params["b1b2"])

    H0, W0 = x0.shape[1:3]
    H1, W1 = x1.shape[1:3]
    u = conv_bn(x1b, params["f01w"], params["f01b"], 1)
    ah = jnp.asarray(_interp_matrix(H0, H1))
    aw = jnp.asarray(_interp_matrix(W0, W1))
    up = jnp.einsum("ah,bw,nhwc->nabc", ah, aw, u, precision=hp)   # bilinear, align_corners
    y0 = jax.nn.relu(x0b + up)
    d = conv_bn(x0b, params["f10w"], params["f10b"], 2)
    y1 = jax.nn.relu(d + x1b)
    return [y0, y1]


# ----------------------------------------------------------------------------
# Deterministic init + smoke run
# ----------------------------------------------------------------------------
if __name__ == "__main__":
    key = jax.random.PRNGKey(0)
    ks = iter(jax.random.split(key, 16))

    N, H0, W0, C0 = 2, 16, 16, 8
    H1, W1, C1 = 8, 8, 16

    params = {}
    params["b0w1"], params["b0b1"] = _prep_conv_bn(next(ks), C0, C0, 3)
    params["b0w2"], params["b0b2"] = _prep_conv_bn(next(ks), C0, C0, 3)
    params["b1w1"], params["b1b1"] = _prep_conv_bn(next(ks), C1, C1, 3)
    params["b1w2"], params["b1b2"] = _prep_conv_bn(next(ks), C1, C1, 3)
    # fuse_layers[0][1]: 1x1 conv C1->C0 + BN (upsample applied in forward)
    params["f01w"], params["f01b"] = _prep_conv_bn(next(ks), C1, C0, 1)
    # fuse_layers[1][0]: 3x3 stride-2 conv C0->C1 + BN (no ReLU)
    params["f10w"], params["f10b"] = _prep_conv_bn(next(ks), C0, C1, 3)

    x0 = jax.random.normal(next(ks), (N, H0, W0, C0), jnp.float32)    # NHWC
    x1 = jax.random.normal(next(ks), (N, H1, W1, C1), jnp.float32)    # NHWC

    ops = build_operands(params, N, H0, W0, C0, H1, W1, C1)

    outs = jax.block_until_ready(hr_module_forward(x0, x1, ops))
    refs = jax.block_until_ready(_ref_forward(x0, x1, params))

    assert outs[0].shape == (N, H0, W0, C0)
    assert outs[1].shape == (N, H1, W1, C1)
    for o, r in zip(outs, refs):
        assert bool(jnp.all(jnp.isfinite(o)))
        err = float(jnp.max(jnp.abs(o - r)))
        # bf16 MXU operands with f32 accumulation / f32 epilogue (reference is
        # full f32): tolerance relaxed from 2e-3 accordingly.
        assert err < 3e-2, f"max abs error vs reference: {err}"
    print("KERNEL_OK")
</pallas_src>

<mosaic_0001>
module attributes {stable_mosaic.version = 11 : i64} {
  func.func @_hr_module_kernel(%arg0: memref<32x128xf32, #tpu.memory_space<vmem>>, %arg1: memref<16x128xf32, #tpu.memory_space<vmem>>, %arg2: memref<3x128x128xbf16, #tpu.memory_space<vmem>>, %arg3: memref<3x128x128xbf16, #tpu.memory_space<vmem>>, %arg4: memref<3x128x128xbf16, #tpu.memory_space<vmem>>, %arg5: memref<3x128x128xbf16, #tpu.memory_space<vmem>>, %arg6: memref<3x128x128xbf16, #tpu.memory_space<vmem>>, %arg7: memref<128x128xbf16, #tpu.memory_space<vmem>>, %arg8: memref<2x32x32xf32, #tpu.memory_space<vmem>>, %arg9: memref<2x16x16xf32, #tpu.memory_space<vmem>>, %arg10: memref<3x16x32xf32, #tpu.memory_space<vmem>>, %arg11: memref<32x16xf32, #tpu.memory_space<vmem>>, %arg12: memref<6x128xf32, #tpu.memory_space<vmem>>, %arg13: memref<32x128xf32, #tpu.memory_space<vmem>>, %arg14: memref<16x128xf32, #tpu.memory_space<vmem>>) attributes {dimension_semantics = [], scalar_prefetch = 0 : i64, scratch_operands = 0 : i64, tpu.core_type = #tpu.core_type<tc>} {
    %c0 = arith.constant 0 : index
    %c0_0 = arith.constant 0 : index
    %0 = vector.load %arg0[%c0, %c0_0] : memref<32x128xf32, #tpu.memory_space<vmem>>, vector<32x128xf32>
    %c0_1 = arith.constant 0 : index
    %c0_2 = arith.constant 0 : index
    %1 = vector.load %arg1[%c0_1, %c0_2] : memref<16x128xf32, #tpu.memory_space<vmem>>, vector<16x128xf32>
    %c0_3 = arith.constant 0 : index
    %c0_4 = arith.constant 0 : index
    %c0_5 = arith.constant 0 : index
    %2 = vector.load %arg8[%c0_3, %c0_4, %c0_5] : memref<2x32x32xf32, #tpu.memory_space<vmem>>, vector<1x32x32xf32>
    %3 = vector.shape_cast %2 : vector<1x32x32xf32> to vector<32x32xf32>
    %c1 = arith.constant 1 : index
    %c0_6 = arith.constant 0 : index
    %c0_7 = arith.constant 0 : index
    %4 = vector.load %arg8[%c1, %c0_6, %c0_7] : memref<2x32x32xf32, #tpu.memory_space<vmem>>, vector<1x32x32xf32>
    %5 = vector.shape_cast %4 : vector<1x32x32xf32> to vector<32x32xf32>
    %c0_8 = arith.constant 0 : index
    %c0_9 = arith.constant 0 : index
    %c0_10 = arith.constant 0 : index
    %6 = vector.load %arg9[%c0_8, %c0_9, %c0_10] : memref<2x16x16xf32, #tpu.memory_space<vmem>>, vector<1x16x16xf32>
    %7 = vector.shape_cast %6 : vector<1x16x16xf32> to vector<16x16xf32>
    %c1_11 = arith.constant 1 : index
    %c0_12 = arith.constant 0 : index
    %c0_13 = arith.constant 0 : index
    %8 = vector.load %arg9[%c1_11, %c0_12, %c0_13] : memref<2x16x16xf32, #tpu.memory_space<vmem>>, vector<1x16x16xf32>
    %9 = vector.shape_cast %8 : vector<1x16x16xf32> to vector<16x16xf32>
    %c0_14 = arith.constant 0 : index
    %c0_15 = arith.constant 0 : index
    %10 = vector.load %arg12[%c0_14, %c0_15] : memref<6x128xf32, #tpu.memory_space<vmem>>, vector<1x128xf32>
    %cst = arith.constant dense<0.000000e+00> : vector<32x128xf32>
    %11 = tpu.matmul %3, %0, %cst {dimension_numbers = #tpu.dot_dimension_numbers<[1], [0], [0], [1], [0, 0, 1, 1], [], []>} : vector<32x32xf32>, vector<32x128xf32>, vector<32x128xf32> -> vector<32x128xf32>
    %cst_16 = arith.constant dense<0.000000e+00> : vector<32x128xf32>
    %12 = tpu.matmul %5, %0, %cst_16 {dimension_numbers = #tpu.dot_dimension_numbers<[1], [0], [0], [1], [0, 0, 1, 1], [], []>} : vector<32x32xf32>, vector<32x128xf32>, vector<32x128xf32> -> vector<32x128xf32>
    %13 = arith.truncf %11 : vector<32x128xf32> to vector<32x128xbf16>
    %c0_17 = arith.constant 0 : index
    %c0_18 = arith.constant 0 : index
    %c0_19 = arith.constant 0 : index
    %14 = vector.load %arg2[%c0_17, %c0_18, %c0_19] : memref<3x128x128xbf16, #tpu.memory_space<vmem>>, vector<1x128x128xbf16>
    %15 = vector.shape_cast %14 : vector<1x128x128xbf16> to vector<128x128xbf16>
    %cst_20 = arith.constant dense<0.000000e+00> : vector<32x128xf32>
    %16 = tpu.matmul %13, %15, %cst_20 {dimension_numbers = #tpu.dot_dimension_numbers<[1], [0], [0], [1], [0, 0, 1, 1], [], []>} : vector<32x128xbf16>, vector<128x128xbf16>, vector<32x128xf32> -> vector<32x128xf32>
    %17 = arith.truncf %0 : vector<32x128xf32> to vector<32x128xbf16>
    %c1_21 = arith.constant 1 : index
    %c0_22 = arith.constant 0 : index
    %c0_23 = arith.constant 0 : index
    %18 = vector.load %arg2[%c1_21, %c0_22, %c0_23] : memref<3x128x128xbf16, #tpu.memory_space<vmem>>, vector<1x128x128xbf16>
    %19 = vector.shape_cast %18 : vector<1x128x128xbf16> to vector<128x128xbf16>
    %cst_24 = arith.constant dense<0.000000e+00> : vector<32x128xf32>
    %20 = tpu.matmul %17, %19, %cst_24 {dimension_numbers = #tpu.dot_dimension_numbers<[1], [0], [0], [1], [0, 0, 1, 1], [], []>} : vector<32x128xbf16>, vector<128x128xbf16>, vector<32x128xf32> -> vector<32x128xf32>
    %21 = arith.addf %16, %20 : vector<32x128xf32>
    %22 = arith.truncf %12 : vector<32x128xf32> to vector<32x128xbf16>
    %c2 = arith.constant 2 : index
    %c0_25 = arith.constant 0 : index
    %c0_26 = arith.constant 0 : index
    %23 = vector.load %arg2[%c2, %c0_25, %c0_26] : memref<3x128x128xbf16, #tpu.memory_space<vmem>>, vector<1x128x128xbf16>
    %24 = vector.shape_cast %23 : vector<1x128x128xbf16> to vector<128x128xbf16>
    %cst_27 = arith.constant dense<0.000000e+00> : vector<32x128xf32>
    %25 = tpu.matmul %22, %24, %cst_27 {dimension_numbers = #tpu.dot_dimension_numbers<[1], [0], [0], [1], [0, 0, 1, 1], [], []>} : vector<32x128xbf16>, vector<128x128xbf16>, vector<32x128xf32> -> vector<32x128xf32>
    %26 = arith.addf %21, %25 : vector<32x128xf32>
    %27 = vector.broadcast %10 : vector<1x128xf32> to vector<32x128xf32>
    %28 = arith.addf %26, %27 : vector<32x128xf32>
    %cst_28 = arith.constant 0.000000e+00 : f32
    %29 = vector.broadcast %cst_28 : f32 to vector<32x128xf32>
    %30 = arith.maximumf %28, %29 : vector<32x128xf32>
    %c1_29 = arith.constant 1 : index
    %c0_30 = arith.constant 0 : index
    %31 = vector.load %arg12[%c1_29, %c0_30] : memref<6x128xf32, #tpu.memory_space<vmem>>, vector<1x128xf32>
    %cst_31 = arith.constant dense<0.000000e+00> : vector<32x128xf32>
    %32 = tpu.matmul %3, %30, %cst_31 {dimension_numbers = #tpu.dot_dimension_numbers<[1], [0], [0], [1], [0, 0, 1, 1], [], []>} : vector<32x32xf32>, vector<32x128xf32>, vector<32x128xf32> -> vector<32x128xf32>
    %cst_32 = arith.constant dense<0.000000e+00> : vector<32x128xf32>
    %33 = tpu.matmul %5, %30, %cst_32 {dimension_numbers = #tpu.dot_dimension_numbers<[1], [0], [0], [1], [0, 0, 1, 1], [], []>} : vector<32x32xf32>, vector<32x128xf32>, vector<32x128xf32> -> vector<32x128xf32>
    %34 = arith.truncf %32 : vector<32x128xf32> to vector<32x128xbf16>
    %c0_33 = arith.constant 0 : index
    %c0_34 = arith.constant 0 : index
    %c0_35 = arith.constant 0 : index
    %35 = vector.load %arg3[%c0_33, %c0_34, %c0_35] : memref<3x128x128xbf16, #tpu.memory_space<vmem>>, vector<1x128x128xbf16>
    %36 = vector.shape_cast %35 : vector<1x128x128xbf16> to vector<128x128xbf16>
    %cst_36 = arith.constant dense<0.000000e+00> : vector<32x128xf32>
    %37 = tpu.matmul %34, %36, %cst_36 {dimension_numbers = #tpu.dot_dimension_numbers<[1], [0], [0], [1], [0, 0, 1, 1], [], []>} : vector<32x128xbf16>, vector<128x128xbf16>, vector<32x128xf32> -> vector<32x128xf32>
    %38 = arith.truncf %30 : vector<32x128xf32> to vector<32x128xbf16>
    %c1_37 = arith.constant 1 : index
    %c0_38 = arith.constant 0 : index
    %c0_39 = arith.constant 0 : index
    %39 = vector.load %arg3[%c1_37, %c0_38, %c0_39] : memref<3x128x128xbf16, #tpu.memory_space<vmem>>, vector<1x128x128xbf16>
    %40 = vector.shape_cast %39 : vector<1x128x128xbf16> to vector<128x128xbf16>
    %cst_40 = arith.constant dense<0.000000e+00> : vector<32x128xf32>
    %41 = tpu.matmul %38, %40, %cst_40 {dimension_numbers = #tpu.dot_dimension_numbers<[1], [0], [0], [1], [0, 0, 1, 1], [], []>} : vector<32x128xbf16>, vector<128x128xbf16>, vector<32x128xf32> -> vector<32x128xf32>
    %42 = arith.addf %37, %41 : vector<32x128xf32>
    %43 = arith.truncf %33 : vector<32x128xf32> to vector<32x128xbf16>
    %c2_41 = arith.constant 2 : index
    %c0_42 = arith.constant 0 : index
    %c0_43 = arith.constant 0 : index
    %44 = vector.load %arg3[%c2_41, %c0_42, %c0_43] : memref<3x128x128xbf16, #tpu.memory_space<vmem>>, vector<1x128x128xbf16>
    %45 = vector.shape_cast %44 : vector<1x128x128xbf16> to vector<128x128xbf16>
    %cst_44 = arith.constant dense<0.000000e+00> : vector<32x128xf32>
    %46 = tpu.matmul %43, %45, %cst_44 {dimension_numbers = #tpu.dot_dimension_numbers<[1], [0], [0], [1], [0, 0, 1, 1], [], []>} : vector<32x128xbf16>, vector<128x128xbf16>, vector<32x128xf32> -> vector<32x128xf32>
    %47 = arith.addf %42, %46 : vector<32x128xf32>
    %48 = vector.broadcast %31 : vector<1x128xf32> to vector<32x128xf32>
    %49 = arith.addf %47, %48 : vector<32x128xf32>
    %50 = arith.addf %49, %0 : vector<32x128xf32>
    %cst_45 = arith.constant 0.000000e+00 : f32
    %51 = vector.broadcast %cst_45 : f32 to vector<32x128xf32>
    %52 = arith.maximumf %50, %51 : vector<32x128xf32>
    %c2_46 = arith.constant 2 : index
    %c0_47 = arith.constant 0 : index
    %53 = vector.load %arg12[%c2_46, %c0_47] : memref<6x128xf32, #tpu.memory_space<vmem>>, vector<1x128xf32>
    %cst_48 = arith.constant dense<0.000000e+00> : vector<16x128xf32>
    %54 = tpu.matmul %7, %1, %cst_48 {dimension_numbers = #tpu.dot_dimension_numbers<[1], [0], [0], [1], [0, 0, 1, 1], [], []>} : vector<16x16xf32>, vector<16x128xf32>, vector<16x128xf32> -> vector<16x128xf32>
    %cst_49 = arith.constant dense<0.000000e+00> : vector<16x128xf32>
    %55 = tpu.matmul %9, %1, %cst_49 {dimension_numbers = #tpu.dot_dimension_numbers<[1], [0], [0], [1], [0, 0, 1, 1], [], []>} : vector<16x16xf32>, vector<16x128xf32>, vector<16x128xf32> -> vector<16x128xf32>
    %56 = arith.truncf %54 : vector<16x128xf32> to vector<16x128xbf16>
    %c0_50 = arith.constant 0 : index
    %c0_51 = arith.constant 0 : index
    %c0_52 = arith.constant 0 : index
    %57 = vector.load %arg4[%c0_50, %c0_51, %c0_52] : memref<3x128x128xbf16, #tpu.memory_space<vmem>>, vector<1x128x128xbf16>
    %58 = vector.shape_cast %57 : vector<1x128x128xbf16> to vector<128x128xbf16>
    %cst_53 = arith.constant dense<0.000000e+00> : vector<16x128xf32>
    %59 = tpu.matmul %56, %58, %cst_53 {dimension_numbers = #tpu.dot_dimension_numbers<[1], [0], [0], [1], [0, 0, 1, 1], [], []>} : vector<16x128xbf16>, vector<128x128xbf16>, vector<16x128xf32> -> vector<16x128xf32>
    %60 = arith.truncf %1 : vector<16x128xf32> to vector<16x128xbf16>
    %c1_54 = arith.constant 1 : index
    %c0_55 = arith.constant 0 : index
    %c0_56 = arith.constant 0 : index
    %61 = vector.load %arg4[%c1_54, %c0_55, %c0_56] : memref<3x128x128xbf16, #tpu.memory_space<vmem>>, vector<1x128x128xbf16>
    %62 = vector.shape_cast %61 : vector<1x128x128xbf16> to vector<128x128xbf16>
    %cst_57 = arith.constant dense<0.000000e+00> : vector<16x128xf32>
    %63 = tpu.matmul %60, %62, %cst_57 {dimension_numbers = #tpu.dot_dimension_numbers<[1], [0], [0], [1], [0, 0, 1, 1], [], []>} : vector<16x128xbf16>, vector<128x128xbf16>, vector<16x128xf32> -> vector<16x128xf32>
    %64 = arith.addf %59, %63 : vector<16x128xf32>
    %65 = arith.truncf %55 : vector<16x128xf32> to vector<16x128xbf16>
    %c2_58 = arith.constant 2 : index
    %c0_59 = arith.constant 0 : index
    %c0_60 = arith.constant 0 : index
    %66 = vector.load %arg4[%c2_58, %c0_59, %c0_60] : memref<3x128x128xbf16, #tpu.memory_space<vmem>>, vector<1x128x128xbf16>
    %67 = vector.shape_cast %66 : vector<1x128x128xbf16> to vector<128x128xbf16>
    %cst_61 = arith.constant dense<0.000000e+00> : vector<16x128xf32>
    %68 = tpu.matmul %65, %67, %cst_61 {dimension_numbers = #tpu.dot_dimension_numbers<[1], [0], [0], [1], [0, 0, 1, 1], [], []>} : vector<16x128xbf16>, vector<128x128xbf16>, vector<16x128xf32> -> vector<16x128xf32>
    %69 = arith.addf %64, %68 : vector<16x128xf32>
    %70 = vector.broadcast %53 : vector<1x128xf32> to vector<16x128xf32>
    %71 = arith.addf %69, %70 : vector<16x128xf32>
    %cst_62 = arith.constant 0.000000e+00 : f32
    %72 = vector.broadcast %cst_62 : f32 to vector<16x128xf32>
    %73 = arith.maximumf %71, %72 : vector<16x128xf32>
    %c3 = arith.constant 3 : index
    %c0_63 = arith.constant 0 : index
    %74 = vector.load %arg12[%c3, %c0_63] : memref<6x128xf32, #tpu.memory_space<vmem>>, vector<1x128xf32>
    %cst_64 = arith.constant dense<0.000000e+00> : vector<16x128xf32>
    %75 = tpu.matmul %7, %73, %cst_64 {dimension_numbers = #tpu.dot_dimension_numbers<[1], [0], [0], [1], [0, 0, 1, 1], [], []>} : vector<16x16xf32>, vector<16x128xf32>, vector<16x128xf32> -> vector<16x128xf32>
    %cst_65 = arith.constant dense<0.000000e+00> : vector<16x128xf32>
    %76 = tpu.matmul %9, %73, %cst_65 {dimension_numbers = #tpu.dot_dimension_numbers<[1], [0], [0], [1], [0, 0, 1, 1], [], []>} : vector<16x16xf32>, vector<16x128xf32>, vector<16x128xf32> -> vector<16x128xf32>
    %77 = arith.truncf %75 : vector<16x128xf32> to vector<16x128xbf16>
    %c0_66 = arith.constant 0 : index
    %c0_67 = arith.constant 0 : index
    %c0_68 = arith.constant 0 : index
    %78 = vector.load %arg5[%c0_66, %c0_67, %c0_68] : memref<3x128x128xbf16, #tpu.memory_space<vmem>>, vector<1x128x128xbf16>
    %79 = vector.shape_cast %78 : vector<1x128x128xbf16> to vector<128x128xbf16>
    %cst_69 = arith.constant dense<0.000000e+00> : vector<16x128xf32>
    %80 = tpu.matmul %77, %79, %cst_69 {dimension_numbers = #tpu.dot_dimension_numbers<[1], [0], [0], [1], [0, 0, 1, 1], [], []>} : vector<16x128xbf16>, vector<128x128xbf16>, vector<16x128xf32> -> vector<16x128xf32>
    %81 = arith.truncf %73 : vector<16x128xf32> to vector<16x128xbf16>
    %c1_70 = arith.constant 1 : index
    %c0_71 = arith.constant 0 : index
    %c0_72 = arith.constant 0 : index
    %82 = vector.load %arg5[%c1_70, %c0_71, %c0_72] : memref<3x128x128xbf16, #tpu.memory_space<vmem>>, vector<1x128x128xbf16>
    %83 = vector.shape_cast %82 : vector<1x128x128xbf16> to vector<128x128xbf16>
    %cst_73 = arith.constant dense<0.000000e+00> : vector<16x128xf32>
    %84 = tpu.matmul %81, %83, %cst_73 {dimension_numbers = #tpu.dot_dimension_numbers<[1], [0], [0], [1], [0, 0, 1, 1], [], []>} : vector<16x128xbf16>, vector<128x128xbf16>, vector<16x128xf32> -> vector<16x128xf32>
    %85 = arith.addf %80, %84 : vector<16x128xf32>
    %86 = arith.truncf %76 : vector<16x128xf32> to vector<16x128xbf16>
    %c2_74 = arith.constant 2 : index
    %c0_75 = arith.constant 0 : index
    %c0_76 = arith.constant 0 : index
    %87 = vector.load %arg5[%c2_74, %c0_75, %c0_76] : memref<3x128x128xbf16, #tpu.memory_space<vmem>>, vector<1x128x128xbf16>
    %88 = vector.shape_cast %87 : vector<1x128x128xbf16> to vector<128x128xbf16>
    %cst_77 = arith.constant dense<0.000000e+00> : vector<16x128xf32>
    %89 = tpu.matmul %86, %88, %cst_77 {dimension_numbers = #tpu.dot_dimension_numbers<[1], [0], [0], [1], [0, 0, 1, 1], [], []>} : vector<16x128xbf16>, vector<128x128xbf16>, vector<16x128xf32> -> vector<16x128xf32>
    %90 = arith.addf %85, %89 : vector<16x128xf32>
    %91 = vector.broadcast %74 : vector<1x128xf32> to vector<16x128xf32>
    %92 = arith.addf %90, %91 : vector<16x128xf32>
    %93 = arith.addf %92, %1 : vector<16x128xf32>
    %cst_78 = arith.constant 0.000000e+00 : f32
    %94 = vector.broadcast %cst_78 : f32 to vector<16x128xf32>
    %95 = arith.maximumf %93, %94 : vector<16x128xf32>
    %c4 = arith.constant 4 : index
    %c0_79 = arith.constant 0 : index
    %96 = vector.load %arg12[%c4, %c0_79] : memref<6x128xf32, #tpu.memory_space<vmem>>, vector<1x128xf32>
    %c0_80 = arith.constant 0 : index
    %c0_81 = arith.constant 0 : index
    %c0_82 = arith.constant 0 : index
    %97 = vector.load %arg10[%c0_80, %c0_81, %c0_82] : memref<3x16x32xf32, #tpu.memory_space<vmem>>, vector<1x16x32xf32>
    %98 = vector.shape_cast %97 : vector<1x16x32xf32> to vector<16x32xf32>
    %cst_83 = arith.constant dense<0.000000e+00> : vector<16x128xf32>
    %99 = tpu.matmul %98, %52, %cst_83 {dimension_numbers = #tpu.dot_dimension_numbers<[1], [0], [0], [1], [0, 0, 1, 1], [], []>} : vector<16x32xf32>, vector<32x128xf32>, vector<16x128xf32> -> vector<16x128xf32>
    %100 = arith.truncf %99 : vector<16x128xf32> to vector<16x128xbf16>
    %c0_84 = arith.constant 0 : index
    %c0_85 = arith.constant 0 : index
    %c0_86 = arith.constant 0 : index
    %101 = vector.load %arg6[%c0_84, %c0_85, %c0_86] : memref<3x128x128xbf16, #tpu.memory_space<vmem>>, vector<1x128x128xbf16>
    %102 = vector.shape_cast %101 : vector<1x128x128xbf16> to vector<128x128xbf16>
    %cst_87 = arith.constant dense<0.000000e+00> : vector<16x128xf32>
    %103 = tpu.matmul %100, %102, %cst_87 {dimension_numbers = #tpu.dot_dimension_numbers<[1], [0], [0], [1], [0, 0, 1, 1], [], []>} : vector<16x128xbf16>, vector<128x128xbf16>, vector<16x128xf32> -> vector<16x128xf32>
    %104 = vector.broadcast %96 : vector<1x128xf32> to vector<16x128xf32>
    %105 = arith.addf %104, %103 : vector<16x128xf32>
    %c1_88 = arith.constant 1 : index
    %c0_89 = arith.constant 0 : index
    %c0_90 = arith.constant 0 : index
    %106 = vector.load %arg10[%c1_88, %c0_89, %c0_90] : memref<3x16x32xf32, #tpu.memory_space<vmem>>, vector<1x16x32xf32>
    %107 = vector.shape_cast %106 : vector<1x16x32xf32> to vector<16x32xf32>
    %cst_91 = arith.constant dense<0.000000e+00> : vector<16x128xf32>
    %108 = tpu.matmul %107, %52, %cst_91 {dimension_numbers = #tpu.dot_dimension_numbers<[1], [0], [0], [1], [0, 0, 1, 1], [], []>} : vector<16x32xf32>, vector<32x128xf32>, vector<16x128xf32> -> vector<16x128xf32>
    %109 = arith.truncf %108 : vector<16x128xf32> to vector<16x128xbf16>
    %c1_92 = arith.constant 1 : index
    %c0_93 = arith.constant 0 : index
    %c0_94 = arith.constant 0 : index
    %110 = vector.load %arg6[%c1_92, %c0_93, %c0_94] : memref<3x128x128xbf16, #tpu.memory_space<vmem>>, vector<1x128x128xbf16>
    %111 = vector.shape_cast %110 : vector<1x128x128xbf16> to vector<128x128xbf16>
    %cst_95 = arith.constant dense<0.000000e+00> : vector<16x128xf32>
    %112 = tpu.matmul %109, %111, %cst_95 {dimension_numbers = #tpu.dot_dimension_numbers<[1], [0], [0], [1], [0, 0, 1, 1], [], []>} : vector<16x128xbf16>, vector<128x128xbf16>, vector<16x128xf32> -> vector<16x128xf32>
    %113 = arith.addf %105, %112 : vector<16x128xf32>
    %c2_96 = arith.constant 2 : index
    %c0_97 = arith.constant 0 : index
    %c0_98 = arith.constant 0 : index
    %114 = vector.load %arg10[%c2_96, %c0_97, %c0_98] : memref<3x16x32xf32, #tpu.memory_space<vmem>>, vector<1x16x32xf32>
    %115 = vector.shape_cast %114 : vector<1x16x32xf32> to vector<16x32xf32>
    %cst_99 = arith.constant dense<0.000000e+00> : vector<16x128xf32>
    %116 = tpu.matmul %115, %52, %cst_99 {dimension_numbers = #tpu.dot_dimension_numbers<[1], [0], [0], [1], [0, 0, 1, 1], [], []>} : vector<16x32xf32>, vector<32x128xf32>, vector<16x128xf32> -> vector<16x128xf32>
    %117 = arith.truncf %116 : vector<16x128xf32> to vector<16x128xbf16>
    %c2_100 = arith.constant 2 : index
    %c0_101 = arith.constant 0 : index
    %c0_102 = arith.constant 0 : index
    %118 = vector.load %arg6[%c2_100, %c0_101, %c0_102] : memref<3x128x128xbf16, #tpu.memory_space<vmem>>, vector<1x128x128xbf16>
    %119 = vector.shape_cast %118 : vector<1x128x128xbf16> to vector<128x128xbf16>
    %cst_103 = arith.constant dense<0.000000e+00> : vector<16x128xf32>
    %120 = tpu.matmul %117, %119, %cst_103 {dimension_numbers = #tpu.dot_dimension_numbers<[1], [0], [0], [1], [0, 0, 1, 1], [], []>} : vector<16x128xbf16>, vector<128x128xbf16>, vector<16x128xf32> -> vector<16x128xf32>
    %121 = arith.addf %113, %120 : vector<16x128xf32>
    %122 = arith.addf %121, %95 : vector<16x128xf32>
    %cst_104 = arith.constant 0.000000e+00 : f32
    %123 = vector.broadcast %cst_104 : f32 to vector<16x128xf32>
    %124 = arith.maximumf %122, %123 : vector<16x128xf32>
    %c0_105 = arith.constant 0 : index
    %c0_106 = arith.constant 0 : index
    %125 = vector.load %arg14[%c0_105, %c0_106] : memref<16x128xf32, #tpu.memory_space<vmem>>, vector<16x128xf32>
    tpu.vector_store %arg14[%c0_105, %c0_106], %124 {strides = array<i32>} : memref<16x128xf32, #tpu.memory_space<vmem>>, vector<16x128xf32>,
    %126 = arith.truncf %95 : vector<16x128xf32> to vector<16x128xbf16>
    %c0_107 = arith.constant 0 : index
    %c0_108 = arith.constant 0 : index
    %127 = vector.load %arg7[%c0_107, %c0_108] : memref<128x128xbf16, #tpu.memory_space<vmem>>, vector<128x128xbf16>
    %cst_109 = arith.constant dense<0.000000e+00> : vector<16x128xf32>
    %128 = tpu.matmul %126, %127, %cst_109 {dimension_numbers = #tpu.dot_dimension_numbers<[1], [0], [0], [1], [0, 0, 1, 1], [], []>} : vector<16x128xbf16>, vector<128x128xbf16>, vector<16x128xf32> -> vector<16x128xf32>
    %c0_110 = arith.constant 0 : index
    %c0_111 = arith.constant 0 : index
    %129 = vector.load %arg11[%c0_110, %c0_111] : memref<32x16xf32, #tpu.memory_space<vmem>>, vector<32x16xf32>
    %cst_112 = arith.constant dense<0.000000e+00> : vector<32x128xf32>
    %130 = tpu.matmul %129, %128, %cst_112 {dimension_numbers = #tpu.dot_dimension_numbers<[1], [0], [0], [1], [0, 0, 1, 1], [], []>} : vector<32x16xf32>, vector<16x128xf32>, vector<32x128xf32> -> vector<32x128xf32>
    %c5 = arith.constant 5 : index
    %c0_113 = arith.constant 0 : index
    %131 = vector.load %arg12[%c5, %c0_113] : memref<6x128xf32, #tpu.memory_space<vmem>>, vector<1x128xf32>
    %132 = vector.broadcast %131 : vector<1x128xf32> to vector<32x128xf32>
    %133 = arith.addf %130, %132 : vector<32x128xf32>
    %134 = arith.addf %52, %133 : vector<32x128xf32>
    %cst_114 = arith.constant 0.000000e+00 : f32
    %135 = vector.broadcast %cst_114 : f32 to vector<32x128xf32>
    %136 = arith.maximumf %134, %135 : vector<32x128xf32>
    %c0_115 = arith.constant 0 : index
    %c0_116 = arith.constant 0 : index
    %137 = vector.load %arg13[%c0_115, %c0_116] : memref<32x128xf32, #tpu.memory_space<vmem>>, vector<32x128xf32>
    tpu.vector_store %arg13[%c0_115, %c0_116], %136 {strides = array<i32>} : memref<32x128xf32, #tpu.memory_space<vmem>>, vector<32x128xf32>,
    return
  }
}

</mosaic_0001>

<llo_original>
// kernel: tpu_custom_call.1
$region0: #{tpu_custom_call.1}
  #allocation0 [shape = 'u32[]', space=smem, size = 0x4, offset = 0x4, fixed_abs, tag = 'smem constant byte address 0x4 - core index']
  #allocation1 [shape = 'u32[144,128]{1,0:T(1,128)}', space=vmem, size = 0x12000, scoped, tag = 'internal scratch']
  %s0 = inlined_call_operand.hbm [shape: f32[32,128], index: 0, kind: input, shape index: {}]
  %s1 = inlined_call_operand.hbm [shape: f32[16,128], index: 1, kind: input, shape index: {}]
  %s2 = inlined_call_operand.hbm [shape: bf16[3,128,128], index: 2, kind: input, shape index: {}]
  %s3 = inlined_call_operand.hbm [shape: bf16[3,128,128], index: 3, kind: input, shape index: {}]
  %s4 = inlined_call_operand.hbm [shape: bf16[3,128,128], index: 4, kind: input, shape index: {}]
  %s5 = inlined_call_operand.hbm [shape: bf16[3,128,128], index: 5, kind: input, shape index: {}]
  %s6 = inlined_call_operand.hbm [shape: bf16[3,128,128], index: 6, kind: input, shape index: {}]
  %s7 = inlined_call_operand.hbm [shape: bf16[128,128], index: 7, kind: input, shape index: {}]
  %s8 = inlined_call_operand.hbm [shape: f32[2,32,32], index: 8, kind: input, shape index: {}]
  %s9 = inlined_call_operand.hbm [shape: f32[2,16,16], index: 9, kind: input, shape index: {}]
  %s10 = inlined_call_operand.hbm [shape: f32[3,16,32], index: 10, kind: input, shape index: {}]
  %s11 = inlined_call_operand.hbm [shape: f32[32,16], index: 11, kind: input, shape index: {}]
  %s12 = inlined_call_operand.hbm [shape: f32[6,128], index: 12, kind: input, shape index: {}]
  %s13 = inlined_call_operand.hbm [shape: f32[32,128], index: 13, kind: output, shape index: {0}]
  %s14 = inlined_call_operand.hbm [shape: f32[16,128], index: 14, kind: output, shape index: {1}]
  %15 = xla_tuple %s13, %s14
  %s16 = sld [smem:[#allocation0]]
  $region122: #{tpu_custom_call.1} parent=0
    _
  %s18 = ssub.s32 1, %s16
  %s19 = scalar_select 0, %s18, %s16
  $region1: #{tpu_custom_call.1} parent=0
    #allocation2 [shape = 'u8[16384]{0}', space=vmem, size = 0x4000, scoped, tag = 'input window, operand 0, single buffered']
    #allocation3 [shape = 's32[1]{0}', space=sflag, size = 0x4, scoped, tag = 'scoped memory for tpu_custom_call.1']
    #allocation4 [shape = 's32[1]{0}', space=sflag, size = 0x4, scoped, tag = 'scoped memory for tpu_custom_call.1']
    #allocation5 [shape = 'u8[8192]{0}', space=vmem, size = 0x2000, scoped, tag = 'input window, operand 1, single buffered']
    #allocation6 [shape = 's32[1]{0}', space=sflag, size = 0x4, scoped, tag = 'scoped memory for tpu_custom_call.1']
    #allocation7 [shape = 'u8[98304]{0}', space=vmem, size = 0x18000, scoped, tag = 'input window, operand 2, single buffered']
    #allocation8 [shape = 'u8[98304]{0}', space=vmem, size = 0x18000, scoped, tag = 'input window, operand 3, single buffered']
    #allocation9 [shape = 's32[1]{0}', space=sflag, size = 0x4, scoped, tag = 'scoped memory for tpu_custom_call.1']
    #allocation10 [shape = 'u8[98304]{0}', space=vmem, size = 0x18000, scoped, tag = 'input window, operand 4, single buffered']
    #allocation11 [shape = 'u8[98304]{0}', space=vmem, size = 0x18000, scoped, tag = 'input window, operand 5, single buffered']
    #allocation12 [shape = 's32[1]{0}', space=sflag, size = 0x4, scoped, tag = 'scoped memory for tpu_custom_call.1']
    #allocation13 [shape = 'u8[98304]{0}', space=vmem, size = 0x18000, scoped, tag = 'input window, operand 6, single buffered']
    #allocation14 [shape = 'u8[32768]{0}', space=vmem, size = 0x8000, scoped, tag = 'input window, operand 7, single buffered']
    #allocation15 [shape = 's32[1]{0}', space=sflag, size = 0x4, scoped, tag = 'scoped memory for tpu_custom_call.1']
    #allocation16 [shape = 'u8[32768]{0}', space=vmem, size = 0x8000, scoped, tag = 'input window, operand 8, single buffered']
    #allocation17 [shape = 'u8[16384]{0}', space=vmem, size = 0x4000, scoped, tag = 'input window, operand 9, single buffered']
    #allocation18 [shape = 's32[1]{0}', space=sflag, size = 0x4, scoped, tag = 'scoped memory for tpu_custom_call.1']
    #allocation19 [shape = 'u8[24576]{0}', space=vmem, size = 0x6000, scoped, tag = 'input window, operand 10, single buffered']
    #allocation20 [shape = 'u8[16384]{0}', space=vmem, size = 0x4000, scoped, tag = 'input window, operand 11, single buffered']
    #allocation21 [shape = 's32[1]{0}', space=sflag, size = 0x4, scoped, tag = 'scoped memory for tpu_custom_call.1']
    #allocation22 [shape = 'u8[4096]{0}', space=vmem, size = 0x1000, scoped, tag = 'input window, operand 12, single buffered']
    #allocation23 [shape = 'u8[16384]{0}', space=vmem, size = 0x4000, scoped, tag = 'output window, operand 0, single buffered']
    #allocation24 [shape = 'u8[8192]{0}', space=vmem, size = 0x2000, scoped, tag = 'output window, operand 1, single buffered']
    #allocation25 [shape = 's32[1]{0}', space=sflag, size = 0x4, scoped, tag = 'scoped memory for tpu_custom_call.1']
    %20 = vsyncpa [#allocation3], 0
    %21 = vsyncpa [#allocation6], 0
    %22 = vsyncpa [#allocation9], 0
    %23 = vsyncpa [#allocation12], 0
    %24 = vsyncpa [#allocation15], 0
    %25 = vsyncpa [#allocation18], 0
    %26 = vsyncpa [#allocation21], 0
    %27 = vsyncpa [#allocation4], 0
    %28 = vsyncpa [#allocation25], 0
    // Predicated region
    $region2: #{tpu_custom_call.1} parent=1 // pred_check
      _
    $region3: #{tpu_custom_call.1} parent=1 // pred_check_branch
      %30 = sbr.rel (0) target = $region5
    $region4: #{tpu_custom_call.1} parent=1 // pred_region
      %s32 = ssub.s32 512, 512
      %33 = vsyncadd [#allocation3], %s32
      %s34 = sshll.u32 [#allocation2], 4
      %s35 = int_to_ptr.vmem [resolvable:$true] %s34
      %40 = dma.hbm_to_vmem [thread:$0]  %s0, 512, %s35, [#allocation3], 128, 128, 8
    $region5: #{tpu_custom_call.1} parent=1 // pred_fallthru
      _
    // Predicated region
    $region6: #{tpu_custom_call.1} parent=1 // pred_check
      _
    $region7: #{tpu_custom_call.1} parent=1 // pred_check_branch
      %42 = sbr.rel (0) target = $region9
    $region8: #{tpu_custom_call.1} parent=1 // pred_region
      %s44 = ssub.s32 256, 256
      %45 = vsyncadd [#allocation6], %s44
      %s46 = sshll.u32 [#allocation5], 4
      %s47 = int_to_ptr.vmem [resolvable:$true] %s46
      %52 = dma.hbm_to_vmem [thread:$0]  %s1, 256, %s47, [#allocation6], 128, 128, 8
    $region9: #{tpu_custom_call.1} parent=1 // pred_fallthru
      _
    // Predicated region
    $region10: #{tpu_custom_call.1} parent=1 // pred_check
      _
    $region11: #{tpu_custom_call.1} parent=1 // pred_check_branch
      %54 = sbr.rel (0) target = $region13
    $region12: #{tpu_custom_call.1} parent=1 // pred_region
      %s56 = ssub.s32 3072, 3072
      %57 = vsyncadd [#allocation6], %s56
      %s58 = sshll.u32 [#allocation7], 4
      %s59 = int_to_ptr.vmem [resolvable:$true] %s58
      %64 = dma.hbm_to_vmem [thread:$0]  %s2, 3072, %s59, [#allocation6], 64, 64, 4
    $region13: #{tpu_custom_call.1} parent=1 // pred_fallthru
      _
    // Predicated region
    $region14: #{tpu_custom_call.1} parent=1 // pred_check
      _
    $region15: #{tpu_custom_call.1} parent=1 // pred_check_branch
      %66 = sbr.rel (0) target = $region17
    $region16: #{tpu_custom_call.1} parent=1 // pred_region
      %s68 = ssub.s32 3072, 3072
      %69 = vsyncadd [#allocation9], %s68
      %s70 = sshll.u32 [#allocation8], 4
      %s71 = int_to_ptr.vmem [resolvable:$true] %s70
      %76 = dma.hbm_to_vmem [thread:$0]  %s3, 3072, %s71, [#allocation9], 64, 64, 4
    $region17: #{tpu_custom_call.1} parent=1 // pred_fallthru
      _
    // Predicated region
    $region18: #{tpu_custom_call.1} parent=1 // pred_check
      _
    $region19: #{tpu_custom_call.1} parent=1 // pred_check_branch
      %78 = sbr.rel (0) target = $region21
    $region20: #{tpu_custom_call.1} parent=1 // pred_region
      %s80 = ssub.s32 3072, 3072
      %81 = vsyncadd [#allocation9], %s80
      %s82 = sshll.u32 [#allocation10], 4
      %s83 = int_to_ptr.vmem [resolvable:$true] %s82
      %88 = dma.hbm_to_vmem [thread:$0]  %s4, 3072, %s83, [#allocation9], 64, 64, 4
    $region21: #{tpu_custom_call.1} parent=1 // pred_fallthru
      _
    // Predicated region
    $region22: #{tpu_custom_call.1} parent=1 // pred_check
      _
    $region23: #{tpu_custom_call.1} parent=1 // pred_check_branch
      %90 = sbr.rel (0) target = $region25
    $region24: #{tpu_custom_call.1} parent=1 // pred_region
      %s92 = ssub.s32 3072, 3072
      %93 = vsyncadd [#allocation12], %s92
      %s94 = sshll.u32 [#allocation11], 4
      %s95 = int_to_ptr.vmem [resolvable:$true] %s94
      %100 = dma.hbm_to_vmem [thread:$0]  %s5, 3072, %s95, [#allocation12], 64, 64, 4
    $region25: #{tpu_custom_call.1} parent=1 // pred_fallthru
      _
    // Predicated region
    $region26: #{tpu_custom_call.1} parent=1 // pred_check
      _
    $region27: #{tpu_custom_call.1} parent=1 // pred_check_branch
      %102 = sbr.rel (0) target = $region29
    $region28: #{tpu_custom_call.1} parent=1 // pred_region
      %s104 = ssub.s32 3072, 3072
      %105 = vsyncadd [#allocation12], %s104
      %s106 = sshll.u32 [#allocation13], 4
      %s107 = int_to_ptr.vmem [resolvable:$true] %s106
      %112 = dma.hbm_to_vmem [thread:$0]  %s6, 3072, %s107, [#allocation12], 64, 64, 4
    $region29: #{tpu_custom_call.1} parent=1 // pred_fallthru
      _
    // Predicated region
    $region30: #{tpu_custom_call.1} parent=1 // pred_check
      _
    $region31: #{tpu_custom_call.1} parent=1 // pred_check_branch
      %114 = sbr.rel (0) target = $region33
    $region32: #{tpu_custom_call.1} parent=1 // pred_region
      %s116 = ssub.s32 1024, 1024
      %117 = vsyncadd [#allocation15], %s116
      %s118 = sshll.u32 [#allocation14], 4
      %s119 = int_to_ptr.vmem [resolvable:$true] %s118
      %124 = dma.hbm_to_vmem [thread:$0]  %s7, 1024, %s119, [#allocation15], 64, 64, 4
    $region33: #{tpu_custom_call.1} parent=1 // pred_fallthru
      _
    // Predicated region
    $region34: #{tpu_custom_call.1} parent=1 // pred_check
      _
    $region35: #{tpu_custom_call.1} parent=1 // pred_check_branch
      %126 = sbr.rel (0) target = $region37
    $region36: #{tpu_custom_call.1} parent=1 // pred_region
      %s128 = ssub.s32 1024, 1024
      %129 = vsyncadd [#allocation15], %s128
      %s130 = sshll.u32 [#allocation16], 4
      %s131 = int_to_ptr.vmem [resolvable:$true] %s130
      %136 = dma.hbm_to_vmem [thread:$0]  %s8, 1024, %s131, [#allocation15], 128, 128, 8
    $region37: #{tpu_custom_call.1} parent=1 // pred_fallthru
      _
    // Predicated region
    $region38: #{tpu_custom_call.1} parent=1 // pred_check
      _
    $region39: #{tpu_custom_call.1} parent=1 // pred_check_branch
      %138 = sbr.rel (0) target = $region41
    $region40: #{tpu_custom_call.1} parent=1 // pred_region
      %s140 = ssub.s32 512, 512
      %141 = vsyncadd [#allocation18], %s140
      %s142 = sshll.u32 [#allocation17], 4
      %s143 = int_to_ptr.vmem [resolvable:$true] %s142
      %148 = dma.hbm_to_vmem [thread:$0]  %s9, 512, %s143, [#allocation18], 128, 128, 8
    $region41: #{tpu_custom_call.1} parent=1 // pred_fallthru
      _
    // Predicated region
    $region42: #{tpu_custom_call.1} parent=1 // pred_check
      _
    $region43: #{tpu_custom_call.1} parent=1 // pred_check_branch
      %150 = sbr.rel (0) target = $region45
    $region44: #{tpu_custom_call.1} parent=1 // pred_region
      %s152 = ssub.s32 768, 768
      %153 = vsyncadd [#allocation18], %s152
      %s154 = sshll.u32 [#allocation19], 4
      %s155 = int_to_ptr.vmem [resolvable:$true] %s154
      %160 = dma.hbm_to_vmem [thread:$0]  %s10, 768, %s155, [#allocation18], 128, 128, 8
    $region45: #{tpu_custom_call.1} parent=1 // pred_fallthru
      _
    // Predicated region
    $region46: #{tpu_custom_call.1} parent=1 // pred_check
      _
    $region47: #{tpu_custom_call.1} parent=1 // pred_check_branch
      %162 = sbr.rel (0) target = $region49
    $region48: #{tpu_custom_call.1} parent=1 // pred_region
      %s164 = ssub.s32 512, 512
      %165 = vsyncadd [#allocation21], %s164
      %s166 = sshll.u32 [#allocation20], 4
      %s167 = int_to_ptr.vmem [resolvable:$true] %s166
      %172 = dma.hbm_to_vmem [thread:$0]  %s11, 512, %s167, [#allocation21], 128, 128, 8
    $region49: #{tpu_custom_call.1} parent=1 // pred_fallthru
      _
    // Predicated region
    $region50: #{tpu_custom_call.1} parent=1 // pred_check
      _
    $region51: #{tpu_custom_call.1} parent=1 // pred_check_branch
      %174 = sbr.rel (0) target = $region53
    $region52: #{tpu_custom_call.1} parent=1 // pred_region
      %s176 = ssub.s32 128, 128
      %177 = vsyncadd [#allocation21], %s176
      %s179 = sshll.u32 [#allocation22], 4
      %s180 = int_to_ptr.vmem [resolvable:$true] %s179
      %182 = dma.hbm_to_vmem [thread:$0]  %s12, 128, %s180, [#allocation21]
    $region53: #{tpu_custom_call.1} parent=1 // pred_fallthru
      _
    // Predicated region
    $region54: #{tpu_custom_call.1} parent=1 // pred_check
      _
    $region55: #{tpu_custom_call.1} parent=1 // pred_check_branch
      %184 = sbr.rel (0) target = $region57
    $region56: #{tpu_custom_call.1} parent=1 // pred_region
      %185 = dma.done [#allocation3], 512
    $region57: #{tpu_custom_call.1} parent=1 // pred_fallthru
      _
    // Predicated region
    $region58: #{tpu_custom_call.1} parent=1 // pred_check
      _
    $region59: #{tpu_custom_call.1} parent=1 // pred_check_branch
      %187 = sbr.rel (0) target = $region61
    $region60: #{tpu_custom_call.1} parent=1 // pred_region
      %188 = dma.done [#allocation6], 256
    $region61: #{tpu_custom_call.1} parent=1 // pred_fallthru
      _
    // Predicated region
    $region62: #{tpu_custom_call.1} parent=1 // pred_check
      _
    $region63: #{tpu_custom_call.1} parent=1 // pred_check_branch
      %190 = sbr.rel (0) target = $region65
    $region64: #{tpu_custom_call.1} parent=1 // pred_region
      %191 = dma.done [#allocation6], 3072
    $region65: #{tpu_custom_call.1} parent=1 // pred_fallthru
      _
    // Predicated region
    $region66: #{tpu_custom_call.1} parent=1 // pred_check
      _
    $region67: #{tpu_custom_call.1} parent=1 // pred_check_branch
      %193 = sbr.rel (0) target = $region69
    $region68: #{tpu_custom_call.1} parent=1 // pred_region
      %194 = dma.done [#allocation9], 3072
    $region69: #{tpu_custom_call.1} parent=1 // pred_fallthru
      _
    // Predicated region
    $region70: #{tpu_custom_call.1} parent=1 // pred_check
      _
    $region71: #{tpu_custom_call.1} parent=1 // pred_check_branch
      %196 = sbr.rel (0) target = $region73
    $region72: #{tpu_custom_call.1} parent=1 // pred_region
      %197 = dma.done [#allocation9], 3072
    $region73: #{tpu_custom_call.1} parent=1 // pred_fallthru
      _
    // Predicated region
    $region74: #{tpu_custom_call.1} parent=1 // pred_check
      _
    $region75: #{tpu_custom_call.1} parent=1 // pred_check_branch
      %199 = sbr.rel (0) target = $region77
    $region76: #{tpu_custom_call.1} parent=1 // pred_region
      %200 = dma.done [#allocation12], 3072
    $region77: #{tpu_custom_call.1} parent=1 // pred_fallthru
      _
    // Predicated region
    $region78: #{tpu_custom_call.1} parent=1 // pred_check
      _
    $region79: #{tpu_custom_call.1} parent=1 // pred_check_branch
      %202 = sbr.rel (0) target = $region81
    $region80: #{tpu_custom_call.1} parent=1 // pred_region
      %203 = dma.done [#allocation12], 3072
    $region81: #{tpu_custom_call.1} parent=1 // pred_fallthru
      _
    // Predicated region
    $region82: #{tpu_custom_call.1} parent=1 // pred_check
      _
    $region83: #{tpu_custom_call.1} parent=1 // pred_check_branch
      %205 = sbr.rel (0) target = $region85
    $region84: #{tpu_custom_call.1} parent=1 // pred_region
      %206 = dma.done [#allocation15], 1024
    $region85: #{tpu_custom_call.1} parent=1 // pred_fallthru
      _
    // Predicated region
    $region86: #{tpu_custom_call.1} parent=1 // pred_check
      _
    $region87: #{tpu_custom_call.1} parent=1 // pred_check_branch
      %208 = sbr.rel (0) target = $region89
    $region88: #{tpu_custom_call.1} parent=1 // pred_region
      %209 = dma.done [#allocation15], 1024
    $region89: #{tpu_custom_call.1} parent=1 // pred_fallthru
      _
    // Predicated region
    $region90: #{tpu_custom_call.1} parent=1 // pred_check
      _
    $region91: #{tpu_custom_call.1} parent=1 // pred_check_branch
      %211 = sbr.rel (0) target = $region93
    $region92: #{tpu_custom_call.1} parent=1 // pred_region
      %212 = dma.done [#allocation18], 512
    $region93: #{tpu_custom_call.1} parent=1 // pred_fallthru
      _
    // Predicated region
    $region94: #{tpu_custom_call.1} parent=1 // pred_check
      _
    $region95: #{tpu_custom_call.1} parent=1 // pred_check_branch
      %214 = sbr.rel (0) target = $region97
    $region96: #{tpu_custom_call.1} parent=1 // pred_region
      %215 = dma.done [#allocation18], 768
    $region97: #{tpu_custom_call.1} parent=1 // pred_fallthru
      _
    // Predicated region
    $region98: #{tpu_custom_call.1} parent=1 // pred_check
      _
    $region99: #{tpu_custom_call.1} parent=1 // pred_check_branch
      %217 = sbr.rel (0) target = $region101
    $region100: #{tpu_custom_call.1} parent=1 // pred_region
      %218 = dma.done [#allocation21], 512
    $region101: #{tpu_custom_call.1} parent=1 // pred_fallthru
      _
    // Predicated region
    $region102: #{tpu_custom_call.1} parent=1 // pred_check
      _
    $region103: #{tpu_custom_call.1} parent=1 // pred_check_branch
      %220 = sbr.rel (0) target = $region105
    $region104: #{tpu_custom_call.1} parent=1 // pred_region
      %221 = dma.done [#allocation21], 128
    $region105: #{tpu_custom_call.1} parent=1 // pred_fallthru
      _
    %v223 = vld [vmem:[#allocation2] sm:$0xff]
    %v224 = vld [vmem:[#allocation2 + $0x8] sm:$0xff]
    %v225 = vld [vmem:[#allocation2 + $0x10] sm:$0xff]
    %v226 = vld [vmem:[#allocation2 + $0x18] sm:$0xff]
    %v227 = vld [vmem:[#allocation5] sm:$0xff]
    %v228 = vld [vmem:[#allocation5 + $0x8] sm:$0xff]
    %v229 = vld [vmem:[#allocation16] sm:$0xff]
    %v230 = vld [vmem:[#allocation16 + $0x8] sm:$0xff]
    %v231 = vld [vmem:[#allocation16 + $0x10] sm:$0xff]
    %v232 = vld [vmem:[#allocation16 + $0x18] sm:$0xff]
    %s233 = scalar_lea.vmem [#allocation16], 32
    %v234 = vld [vmem:[%s233] sm:$0xff]
    %v235 = vld [vmem:[%s233 + $0x8] sm:$0xff]
    %v236 = vld [vmem:[%s233 + $0x10] sm:$0xff]
    %v237 = vld [vmem:[%s233 + $0x18] sm:$0xff]
    %v238 = vld [vmem:[#allocation17] sm:$0xff]
    %v239 = vld [vmem:[#allocation17 + $0x8] sm:$0xff]
    %s240 = scalar_lea.vmem [#allocation17], 16
    %v241 = vld [vmem:[%s240] sm:$0xff]
    %v242 = vld [vmem:[%s240 + $0x8] sm:$0xff]
    %v243 = vld [vmem:[#allocation22] sm:$0x1]
    %vm244 = vcmask 261120
    %v246 = vsel %vm244, %v229, 0
    %v249 = vsel %vm244, %v230, 0
    %v252 = vsel %vm244, %v231, 0
    %v255 = vsel %vm244, %v232, 0
    %257 = vmatprep.subr.mxu0 0.0
    %258 = vmatpush1.msra.mxu0 %v223
    %259 = vmatprep.subr.mxu0 0.0
    %260 = vmatpush1.msra.mxu0 %v224
    %261 = vmatprep.subr.mxu0 0.0
    %262 = vmatpush1.msra.mxu0 %v225
    %263 = vmatprep.subr.mxu0 0.0
    %264 = vmatpush1.msra.mxu0 %v226
    %265 = vmatprep.subr.mxu0 0.0
    %266 = vmatpush1.msra.mxu0 0.0
    %267 = vmatprep.subr.mxu0 0.0
    %268 = vmatpush1.msra.mxu0 0.0
    %269 = vmatprep.subr.mxu0 0.0
    %270 = vmatpush1.msra.mxu0 0.0
    %271 = vmatprep.subr.mxu0 0.0
    %272 = vmatpush1.msra.mxu0 0.0
    %273 = vmatprep.subr.mxu0 0.0
    %274 = vmatpush1.msra.mxu0 0.0
    %275 = vmatprep.subr.mxu0 0.0
    %276 = vmatpush1.msra.mxu0 0.0
    %277 = vmatprep.subr.mxu0 0.0
    %278 = vmatpush1.msra.mxu0 0.0
    %279 = vmatprep.subr.mxu0 0.0
    %280 = vmatpush1.msra.mxu0 0.0
    %281 = vmatprep.subr.mxu0 0.0
    %282 = vmatpush1.msra.mxu0 0.0
    %283 = vmatprep.subr.mxu0 0.0
    %284 = vmatpush1.msra.mxu0 0.0
    %285 = vmatprep.subr.mxu0 0.0
    %286 = vmatpush1.msra.mxu0 0.0
    %287 = vmatprep.subr.mxu0 0.0
    %288 = vmatpush1.msra.mxu0 0.0
    %289 = vmatprep.subr.mxu0 0.0
    %290 = vmatpush1.msra.mxu0 0.0
    %291 = vmatprep.subr.mxu0 0.0
    %292 = vmatpush1.msra.mxu0 0.0
    %293 = vmatprep.subr.mxu0 0.0
    %294 = vmatpush1.msra.mxu0 0.0
    %295 = vmatprep.subr.mxu0 0.0
    %296 = vmatpush1.msra.mxu0 0.0
    %297 = vmatprep.subr.mxu0 0.0
    %298 = vmatpush1.msra.mxu0 0.0
    %299 = vmatprep.subr.mxu0 0.0
    %300 = vmatpush1.msra.mxu0 0.0
    %301 = vmatprep.subr.mxu0 0.0
    %302 = vmatpush1.msra.mxu0 0.0
    %303 = vmatprep.subr.mxu0 0.0
    %304 = vmatpush1.msra.mxu0 0.0
    %305 = vmatprep.subr.mxu0 0.0
    %306 = vmatpush1.msra.mxu0 0.0
    %307 = vmatprep.subr.mxu0 0.0
    %308 = vmatpush1.msra.mxu0 0.0
    %309 = vmatprep.subr.mxu0 0.0
    %310 = vmatpush1.msra.mxu0 0.0
    %311 = vmatprep.subr.mxu0 0.0
    %312 = vmatpush1.msra.mxu0 0.0
    %313 = vmatprep.subr.mxu0 0.0
    %314 = vmatpush1.msra.mxu0 0.0
    %315 = vmatprep.subr.mxu0 0.0
    %316 = vmatpush1.msra.mxu0 0.0
    %317 = vmatprep.subr.mxu0 0.0
    %318 = vmatpush1.msra.mxu0 0.0
    %319 = vmatprep.subr.mxu0 0.0
    %320 = vmatpush1.msra.mxu0 0.0
    %321 = vmatprep.mubr.f32.mxu0 0.0
    %322 = vmatmul.mubr.f32.gmra.mrb[0].mxu0 %v246
    %v323 = vpop.f32.mrb[0].mxu0
    %v324 = vadd.f32 0.0, %v323
    %v325 = vpop.f32.mrb[0].mxu0
    %326 = vmatprep.mubr.f32.mxu0 0.0
    %327 = vmatmul.mubr.f32.gmra.mrb[0].mxu0 %v249
    %v328 = vpop.f32.mrb[0].mxu0
    %v329 = vadd.f32 0.0, %v328
    %v330 = vpop.f32.mrb[0].mxu0
    %331 = vmatprep.mubr.f32.mxu0 0.0
    %332 = vmatmul.mubr.f32.gmra.mrb[0].mxu0 %v252
    %v333 = vpop.f32.mrb[0].mxu0
    %v334 = vadd.f32 0.0, %v333
    %v335 = vpop.f32.mrb[0].mxu0
    %336 = vmatprep.mubr.f32.mxu0 0.0
    %337 = vmatmul.mubr.f32.gmra.mrb[0].mxu0 %v255
    %v338 = vpop.f32.mrb[0].mxu0
    %v339 = vadd.f32 0.0, %v338
    %v340 = vpop.f32.mrb[0].mxu0
    %341 = vdwg.mxu0
    %v343 = vsel %vm244, %v234, 0
    %v346 = vsel %vm244, %v235, 0
    %v349 = vsel %vm244, %v236, 0
    %v352 = vsel %vm244, %v237, 0
    %354 = vmatprep.subr.mxu0 0.0
    %355 = vmatpush1.msra.mxu0 %v223
    %356 = vmatprep.subr.mxu0 0.0
    %357 = vmatpush1.msra.mxu0 %v224
    %358 = vmatprep.subr.mxu0 0.0
    %359 = vmatpush1.msra.mxu0 %v225
    %360 = vmatprep.subr.mxu0 0.0
    %361 = vmatpush1.msra.mxu0 %v226
    %362 = vmatprep.subr.mxu0 0.0
    %363 = vmatpush1.msra.mxu0 0.0
    %364 = vmatprep.subr.mxu0 0.0
    %365 = vmatpush1.msra.mxu0 0.0
    %366 = vmatprep.subr.mxu0 0.0
    %367 = vmatpush1.msra.mxu0 0.0
    %368 = vmatprep.subr.mxu0 0.0
    %369 = vmatpush1.msra.mxu0 0.0
    %370 = vmatprep.subr.mxu0 0.0
    %371 = vmatpush1.msra.mxu0 0.0
    %372 = vmatprep.subr.mxu0 0.0
    %373 = vmatpush1.msra.mxu0 0.0
    %374 = vmatprep.subr.mxu0 0.0
    %375 = vmatpush1.msra.mxu0 0.0
    %376 = vmatprep.subr.mxu0 0.0
    %377 = vmatpush1.msra.mxu0 0.0
    %378 = vmatprep.subr.mxu0 0.0
    %379 = vmatpush1.msra.mxu0 0.0
    %380 = vmatprep.subr.mxu0 0.0
    %381 = vmatpush1.msra.mxu0 0.0
    %382 = vmatprep.subr.mxu0 0.0
    %383 = vmatpush1.msra.mxu0 0.0
    %384 = vmatprep.subr.mxu0 0.0
    %385 = vmatpush1.msra.mxu0 0.0
    %386 = vmatprep.subr.mxu0 0.0
    %387 = vmatpush1.msra.mxu0 0.0
    %388 = vmatprep.subr.mxu0 0.0
    %389 = vmatpush1.msra.mxu0 0.0
    %390 = vmatprep.subr.mxu0 0.0
    %391 = vmatpush1.msra.mxu0 0.0
    %392 = vmatprep.subr.mxu0 0.0
    %393 = vmatpush1.msra.mxu0 0.0
    %394 = vmatprep.subr.mxu0 0.0
    %395 = vmatpush1.msra.mxu0 0.0
    %396 = vmatprep.subr.mxu0 0.0
    %397 = vmatpush1.msra.mxu0 0.0
    %398 = vmatprep.subr.mxu0 0.0
    %399 = vmatpush1.msra.mxu0 0.0
    %400 = vmatprep.subr.mxu0 0.0
    %401 = vmatpush1.msra.mxu0 0.0
    %402 = vmatprep.subr.mxu0 0.0
    %403 = vmatpush1.msra.mxu0 0.0
    %404 = vmatprep.subr.mxu0 0.0
    %405 = vmatpush1.msra.mxu0 0.0
    %406 = vmatprep.subr.mxu0 0.0
    %407 = vmatpush1.msra.mxu0 0.0
    %408 = vmatprep.subr.mxu0 0.0
    %409 = vmatpush1.msra.mxu0 0.0
    %410 = vmatprep.subr.mxu0 0.0
    %411 = vmatpush1.msra.mxu0 0.0
    %412 = vmatprep.subr.mxu0 0.0
    %413 = vmatpush1.msra.mxu0 0.0
    %414 = vmatprep.subr.mxu0 0.0
    %415 = vmatpush1.msra.mxu0 0.0
    %416 = vmatprep.subr.mxu0 0.0
    %417 = vmatpush1.msra.mxu0 0.0
    %418 = vmatprep.mubr.f32.mxu0 0.0
    %419 = vmatmul.mubr.f32.gmra.mrb[0].mxu0 %v343
    %v420 = vpop.f32.mrb[0].mxu0
    %v421 = vadd.f32 0.0, %v420
    %v422 = vpop.f32.mrb[0].mxu0
    %423 = vmatprep.mubr.f32.mxu0 0.0
    %424 = vmatmul.mubr.f32.gmra.mrb[0].mxu0 %v346
    %v425 = vpop.f32.mrb[0].mxu0
    %v426 = vadd.f32 0.0, %v425
    %v427 = vpop.f32.mrb[0].mxu0
    %428 = vmatprep.mubr.f32.mxu0 0.0
    %429 = vmatmul.mubr.f32.gmra.mrb[0].mxu0 %v349
    %v430 = vpop.f32.mrb[0].mxu0
    %v431 = vadd.f32 0.0, %v430
    %v432 = vpop.f32.mrb[0].mxu0
    %433 = vmatprep.mubr.f32.mxu0 0.0
    %434 = vmatmul.mubr.f32.gmra.mrb[0].mxu0 %v352
    %v435 = vpop.f32.mrb[0].mxu0
    %v436 = vadd.f32 0.0, %v435
    %v437 = vpop.f32.mrb[0].mxu0
    %438 = vdwg.mxu0
    %v439 = vpack.c.bf16 %v329, %v324
    %v440 = vpack.c.bf16 %v339, %v334
    %v441 = vld [vmem:[#allocation7] sm:$0xf]
    %v442 = vld [vmem:[#allocation7 + $0x4] sm:$0xf]
    %v443 = vld [vmem:[#allocation7 + $0x8] sm:$0xf]
    %v444 = vld [vmem:[#allocation7 + $0xc] sm:$0xf]
    %v445 = vld [vmem:[#allocation7 + $0x10] sm:$0xf]
    %v446 = vld [vmem:[#allocation7 + $0x14] sm:$0xf]
    %v447 = vld [vmem:[#allocation7 + $0x18] sm:$0xf]
    %v448 = vld [vmem:[#allocation7 + $0x1c] sm:$0xf]
    %v449 = vld [vmem:[#allocation7 + $0x20] sm:$0xf]
    %v450 = vld [vmem:[#allocation7 + $0x24] sm:$0xf]
    %v451 = vld [vmem:[#allocation7 + $0x28] sm:$0xf]
    %v452 = vld [vmem:[#allocation7 + $0x2c] sm:$0xf]
    %v453 = vld [vmem:[#allocation7 + $0x30] sm:$0xf]
    %v454 = vld [vmem:[#allocation7 + $0x34] sm:$0xf]
    %v455 = vld [vmem:[#allocation7 + $0x38] sm:$0xf]
    %v456 = vld [vmem:[#allocation7 + $0x3c] sm:$0xf]
    %v457 = vpack.c.bf16 %v224, %v223
    %v458 = vpack.c.bf16 %v226, %v225
    %s459 = scalar_lea.vmem [#allocation7], 64
    %v460 = vld [vmem:[%s459] sm:$0xf]
    %v461 = vld [vmem:[%s459 + $0x4] sm:$0xf]
    %v462 = vld [vmem:[%s459 + $0x8] sm:$0xf]
    %v463 = vld [vmem:[%s459 + $0xc] sm:$0xf]
    %v464 = vld [vmem:[%s459 + $0x10] sm:$0xf]
    %v465 = vld [vmem:[%s459 + $0x14] sm:$0xf]
    %v466 = vld [vmem:[%s459 + $0x18] sm:$0xf]
    %v467 = vld [vmem:[%s459 + $0x1c] sm:$0xf]
    %v468 = vld [vmem:[%s459 + $0x20] sm:$0xf]
    %v469 = vld [vmem:[%s459 + $0x24] sm:$0xf]
    %v470 = vld [vmem:[%s459 + $0x28] sm:$0xf]
    %v471 = vld [vmem:[%s459 + $0x2c] sm:$0xf]
    %v472 = vld [vmem:[%s459 + $0x30] sm:$0xf]
    %v473 = vld [vmem:[%s459 + $0x34] sm:$0xf]
    %v474 = vld [vmem:[%s459 + $0x38] sm:$0xf]
    %v475 = vld [vmem:[%s459 + $0x3c] sm:$0xf]
    %v492 = vunpack.c.l.b16 %v460
    %v493 = vunpack.c.l.b16 %v461
    %v494 = vunpack.c.l.b16 %v462
    %v495 = vunpack.c.l.b16 %v463
    %v496 = vunpack.c.l.b16 %v464
    %v497 = vunpack.c.l.b16 %v465
    %v498 = vunpack.c.l.b16 %v466
    %v499 = vunpack.c.l.b16 %v467
    %v500 = vunpack.c.l.b16 %v468
    %v501 = vunpack.c.l.b16 %v469
    %v502 = vunpack.c.l.b16 %v470
    %v503 = vunpack.c.l.b16 %v471
    %v504 = vunpack.c.l.b16 %v472
    %v505 = vunpack.c.l.b16 %v473
    %v506 = vunpack.c.l.b16 %v474
    %v507 = vunpack.c.l.b16 %v475
    %v508 = vpack.c.b16 %v493, %v492
    %v509 = vpack.c.b16 %v495, %v494
    %v510 = vpack.c.b16 %v497, %v496
    %v511 = vpack.c.b16 %v499, %v498
    %v512 = vpack.c.b16 %v501, %v500
    %v513 = vpack.c.b16 %v503, %v502
    %v514 = vpack.c.b16 %v505, %v504
    %v515 = vpack.c.b16 %v507, %v506
    %524 = vmatprep.subr.bf16.mxu0 0
    %525 = vmatpush1.bf16.msra.mxu0 %v508
    %526 = vmatprep.subr.bf16.mxu0 0
    %527 = vmatpush1.bf16.msra.mxu0 %v509
    %528 = vmatprep.subr.bf16.mxu0 0
    %529 = vmatpush1.bf16.msra.mxu0 %v510
    %530 = vmatprep.subr.bf16.mxu0 0
    %531 = vmatpush1.bf16.msra.mxu0 %v511
    %532 = vmatprep.subr.bf16.mxu0 0
    %533 = vmatpush1.bf16.msra.mxu0 %v512
    %534 = vmatprep.subr.bf16.mxu0 0
    %535 = vmatpush1.bf16.msra.mxu0 %v513
    %536 = vmatprep.subr.bf16.mxu0 0
    %537 = vmatpush1.bf16.msra.mxu0 %v514
    %538 = vmatprep.subr.bf16.mxu0 0
    %539 = vmatpush1.bf16.msra.mxu0 %v515
    %540 = vmatprep.subr.bf16.mxu0 0
    %541 = vmatpush1.bf16.msra.mxu0 0
    %542 = vmatprep.subr.bf16.mxu0 0
    %543 = vmatpush1.bf16.msra.mxu0 0
    %544 = vmatprep.subr.bf16.mxu0 0
    %545 = vmatpush1.bf16.msra.mxu0 0
    %546 = vmatprep.subr.bf16.mxu0 0
    %547 = vmatpush1.bf16.msra.mxu0 0
    %548 = vmatprep.subr.bf16.mxu0 0
    %549 = vmatpush1.bf16.msra.mxu0 0
    %550 = vmatprep.subr.bf16.mxu0 0
    %551 = vmatpush1.bf16.msra.mxu0 0
    %552 = vmatprep.subr.bf16.mxu0 0
    %553 = vmatpush1.bf16.msra.mxu0 0
    %554 = vmatprep.subr.bf16.mxu0 0
    %555 = vmatpush1.bf16.msra.mxu0 0
    %556 = vmatprep.mubr.bf16.mxu0 0
    %557 = vmatmul.mubr.bf16.gmra.mrb[0].mxu0 %v457
    %v558 = vpop.f32.mrb[0].mxu0
    %v559 = vadd.f32 0.0, %v558
    %v560 = vpop.f32.mrb[0].mxu0
    %v561 = vpop.f32.mrb[0].mxu0
    %v562 = vadd.f32 0.0, %v561
    %v563 = vpop.f32.mrb[0].mxu0
    %564 = vmatprep.mubr.bf16.mxu0 0
    %565 = vmatmul.mubr.bf16.gmra.mrb[0].mxu0 %v458
    %v566 = vpop.f32.mrb[0].mxu0
    %v567 = vadd.f32 0.0, %v566
    %v568 = vpop.f32.mrb[0].mxu0
    %v569 = vpop.f32.mrb[0].mxu0
    %v570 = vadd.f32 0.0, %v569
    %v571 = vpop.f32.mrb[0].mxu0
    %572 = vdwg.mxu0
    %v589 = vunpack.c.l.b16 %v441
    %v590 = vunpack.c.l.b16 %v442
    %v591 = vunpack.c.l.b16 %v443
    %v592 = vunpack.c.l.b16 %v444
    %v593 = vunpack.c.l.b16 %v445
    %v594 = vunpack.c.l.b16 %v446
    %v595 = vunpack.c.l.b16 %v447
    %v596 = vunpack.c.l.b16 %v448
    %v597 = vunpack.c.l.b16 %v449
    %v598 = vunpack.c.l.b16 %v450
    %v599 = vunpack.c.l.b16 %v451
    %v600 = vunpack.c.l.b16 %v452
    %v601 = vunpack.c.l.b16 %v453
    %v602 = vunpack.c.l.b16 %v454
    %v603 = vunpack.c.l.b16 %v455
    %v604 = vunpack.c.l.b16 %v456
    %v605 = vpack.c.b16 %v590, %v589
    %v606 = vpack.c.b16 %v592, %v591
    %v607 = vpack.c.b16 %v594, %v593
    %v608 = vpack.c.b16 %v596, %v595
    %v609 = vpack.c.b16 %v598, %v597
    %v610 = vpack.c.b16 %v600, %v599
    %v611 = vpack.c.b16 %v602, %v601
    %v612 = vpack.c.b16 %v604, %v603
    %621 = vmatprep.subr.bf16.mxu0 0
    %622 = vmatpush1.bf16.msra.mxu0 %v605
    %623 = vmatprep.subr.bf16.mxu0 0
    %624 = vmatpush1.bf16.msra.mxu0 %v606
    %625 = vmatprep.subr.bf16.mxu0 0
    %626 = vmatpush1.bf16.msra.mxu0 %v607
    %627 = vmatprep.subr.bf16.mxu0 0
    %628 = vmatpush1.bf16.msra.mxu0 %v608
    %629 = vmatprep.subr.bf16.mxu0 0
    %630 = vmatpush1.bf16.msra.mxu0 %v609
    %631 = vmatprep.subr.bf16.mxu0 0
    %632 = vmatpush1.bf16.msra.mxu0 %v610
    %633 = vmatprep.subr.bf16.mxu0 0
    %634 = vmatpush1.bf16.msra.mxu0 %v611
    %635 = vmatprep.subr.bf16.mxu0 0
    %636 = vmatpush1.bf16.msra.mxu0 %v612
    %637 = vmatprep.subr.bf16.mxu0 0
    %638 = vmatpush1.bf16.msra.mxu0 0
    %639 = vmatprep.subr.bf16.mxu0 0
    %640 = vmatpush1.bf16.msra.mxu0 0
    %641 = vmatprep.subr.bf16.mxu0 0
    %642 = vmatpush1.bf16.msra.mxu0 0
    %643 = vmatprep.subr.bf16.mxu0 0
    %644 = vmatpush1.bf16.msra.mxu0 0
    %645 = vmatprep.subr.bf16.mxu0 0
    %646 = vmatpush1.bf16.msra.mxu0 0
    %647 = vmatprep.subr.bf16.mxu0 0
    %648 = vmatpush1.bf16.msra.mxu0 0
    %649 = vmatprep.subr.bf16.mxu0 0
    %650 = vmatpush1.bf16.msra.mxu0 0
    %651 = vmatprep.subr.bf16.mxu0 0
    %652 = vmatpush1.bf16.msra.mxu0 0
    %653 = vmatprep.mubr.bf16.mxu0 0
    %654 = vmatmul.mubr.bf16.gmra.mrb[0].mxu0 %v439
    %v655 = vpop.f32.mrb[0].mxu0
    %v656 = vadd.f32 %v559, %v655
    %v657 = vpop.f32.mrb[0].mxu0
    %v658 = vpop.f32.mrb[0].mxu0
    %v659 = vadd.f32 %v562, %v658
    %v660 = vpop.f32.mrb[0].mxu0
    %661 = vmatprep.mubr.bf16.mxu0 0
    %662 = vmatmul.mubr.bf16.gmra.mrb[0].mxu0 %v440
    %v663 = vpop.f32.mrb[0].mxu0
    %v664 = vadd.f32 %v567, %v663
    %v665 = vpop.f32.mrb[0].mxu0
    %v666 = vpop.f32.mrb[0].mxu0
    %v667 = vadd.f32 %v570, %v666
    %v668 = vpop.f32.mrb[0].mxu0
    %669 = vdwg.mxu0
    %v670 = vpack.c.bf16 %v426, %v421
    %v671 = vpack.c.bf16 %v436, %v431
    %s672 = scalar_lea.vmem [#allocation7], 128
    %v673 = vld [vmem:[%s672] sm:$0xf]
    %v674 = vld [vmem:[%s672 + $0x4] sm:$0xf]
    %v675 = vld [vmem:[%s672 + $0x8] sm:$0xf]
    %v676 = vld [vmem:[%s672 + $0xc] sm:$0xf]
    %v677 = vld [vmem:[%s672 + $0x10] sm:$0xf]
    %v678 = vld [vmem:[%s672 + $0x14] sm:$0xf]
    %v679 = vld [vmem:[%s672 + $0x18] sm:$0xf]
    %v680 = vld [vmem:[%s672 + $0x1c] sm:$0xf]
    %v681 = vld [vmem:[%s672 + $0x20] sm:$0xf]
    %v682 = vld [vmem:[%s672 + $0x24] sm:$0xf]
    %v683 = vld [vmem:[%s672 + $0x28] sm:$0xf]
    %v684 = vld [vmem:[%s672 + $0x2c] sm:$0xf]
    %v685 = vld [vmem:[%s672 + $0x30] sm:$0xf]
    %v686 = vld [vmem:[%s672 + $0x34] sm:$0xf]
    %v687 = vld [vmem:[%s672 + $0x38] sm:$0xf]
    %v688 = vld [vmem:[%s672 + $0x3c] sm:$0xf]
    %v705 = vunpack.c.l.b16 %v673
    %v706 = vunpack.c.l.b16 %v674
    %v707 = vunpack.c.l.b16 %v675
    %v708 = vunpack.c.l.b16 %v676
    %v709 = vunpack.c.l.b16 %v677
    %v710 = vunpack.c.l.b16 %v678
    %v711 = vunpack.c.l.b16 %v679
    %v712 = vunpack.c.l.b16 %v680
    %v713 = vunpack.c.l.b16 %v681
    %v714 = vunpack.c.l.b16 %v682
    %v715 = vunpack.c.l.b16 %v683
    %v716 = vunpack.c.l.b16 %v684
    %v717 = vunpack.c.l.b16 %v685
    %v718 = vunpack.c.l.b16 %v686
    %v719 = vunpack.c.l.b16 %v687
    %v720 = vunpack.c.l.b16 %v688
    %v721 = vpack.c.b16 %v706, %v705
    %v722 = vpack.c.b16 %v708, %v707
    %v723 = vpack.c.b16 %v710, %v709
    %v724 = vpack.c.b16 %v712, %v711
    %v725 = vpack.c.b16 %v714, %v713
    %v726 = vpack.c.b16 %v716, %v715
    %v727 = vpack.c.b16 %v718, %v717
    %v728 = vpack.c.b16 %v720, %v719
    %737 = vmatprep.subr.bf16.mxu0 0
    %738 = vmatpush1.bf16.msra.mxu0 %v721
    %739 = vmatprep.subr.bf16.mxu0 0
    %740 = vmatpush1.bf16.msra.mxu0 %v722
    %741 = vmatprep.subr.bf16.mxu0 0
    %742 = vmatpush1.bf16.msra.mxu0 %v723
    %743 = vmatprep.subr.bf16.mxu0 0
    %744 = vmatpush1.bf16.msra.mxu0 %v724
    %745 = vmatprep.subr.bf16.mxu0 0
    %746 = vmatpush1.bf16.msra.mxu0 %v725
    %747 = vmatprep.subr.bf16.mxu0 0
    %748 = vmatpush1.bf16.msra.mxu0 %v726
    %749 = vmatprep.subr.bf16.mxu0 0
    %750 = vmatpush1.bf16.msra.mxu0 %v727
    %751 = vmatprep.subr.bf16.mxu0 0
    %752 = vmatpush1.bf16.msra.mxu0 %v728
    %753 = vmatprep.subr.bf16.mxu0 0
    %754 = vmatpush1.bf16.msra.mxu0 0
    %755 = vmatprep.subr.bf16.mxu0 0
    %756 = vmatpush1.bf16.msra.mxu0 0
    %757 = vmatprep.subr.bf16.mxu0 0
    %758 = vmatpush1.bf16.msra.mxu0 0
    %759 = vmatprep.subr.bf16.mxu0 0
    %760 = vmatpush1.bf16.msra.mxu0 0
    %761 = vmatprep.subr.bf16.mxu0 0
    %762 = vmatpush1.bf16.msra.mxu0 0
    %763 = vmatprep.subr.bf16.mxu0 0
    %764 = vmatpush1.bf16.msra.mxu0 0
    %765 = vmatprep.subr.bf16.mxu0 0
    %766 = vmatpush1.bf16.msra.mxu0 0
    %767 = vmatprep.subr.bf16.mxu0 0
    %768 = vmatpush1.bf16.msra.mxu0 0
    %769 = vmatprep.mubr.bf16.mxu0 0
    %770 = vmatmul.mubr.bf16.gmra.mrb[0].mxu0 %v670
    %v771 = vpop.f32.mrb[0].mxu0
    %v772 = vadd.f32 0.0, %v771
    %v773 = vpop.f32.mrb[0].mxu0
    %v774 = vpop.f32.mrb[0].mxu0
    %v775 = vadd.f32 0.0, %v774
    %v776 = vpop.f32.mrb[0].mxu0
    %777 = vmatprep.mubr.bf16.mxu0 0
    %778 = vmatmul.mubr.bf16.gmra.mrb[0].mxu0 %v671
    %v779 = vpop.f32.mrb[0].mxu0
    %v780 = vadd.f32 0.0, %v779
    %v781 = vpop.f32.mrb[0].mxu0
    %v782 = vpop.f32.mrb[0].mxu0
    %v783 = vadd.f32 0.0, %v782
    %v784 = vpop.f32.mrb[0].mxu0
    %785 = vdwg.mxu0
    %v786 = vadd.f32 %v656, %v772
    %v787 = vadd.f32 %v659, %v775
    %v788 = vadd.f32 %v664, %v780
    %v789 = vadd.f32 %v667, %v783
    %v790 = vlaneseq
    %v791 = vshrl.u32 %v790, 7
    %v792 = vsub.s32 0, %v791
    %v793 = vrot.slane %v243, %v792
    %v794 = vadd.f32 %v786, %v793
    %v795 = vadd.f32 %v787, %v793
    %v796 = vadd.f32 %v788, %v793
    %v797 = vadd.f32 %v789, %v793
    %v798 = vmax.f32 %v794, 0.0
    %v799 = vmax.f32 %v795, 0.0
    %v800 = vmax.f32 %v796, 0.0
    %v801 = vmax.f32 %v797, 0.0
    %v802 = vld [vmem:[#allocation22 + $0x1] sm:$0x1]
    %803 = vmatprep.subr.mxu0 0.0
    %804 = vmatpush1.msra.mxu0 %v798
    %805 = vmatprep.subr.mxu0 0.0
    %806 = vmatpush1.msra.mxu0 %v799
    %807 = vmatprep.subr.mxu0 0.0
    %808 = vmatpush1.msra.mxu0 %v800
    %809 = vmatprep.subr.mxu0 0.0
    %810 = vmatpush1.msra.mxu0 %v801
    %811 = vmatprep.subr.mxu0 0.0
    %812 = vmatpush1.msra.mxu0 0.0
    %813 = vmatprep.subr.mxu0 0.0
    %814 = vmatpush1.msra.mxu0 0.0
    %815 = vmatprep.subr.mxu0 0.0
    %816 = vmatpush1.msra.mxu0 0.0
    %817 = vmatprep.subr.mxu0 0.0
    %818 = vmatpush1.msra.mxu0 0.0
    %819 = vmatprep.subr.mxu0 0.0
    %820 = vmatpush1.msra.mxu0 0.0
    %821 = vmatprep.subr.mxu0 0.0
    %822 = vmatpush1.msra.mxu0 0.0
    %823 = vmatprep.subr.mxu0 0.0
    %824 = vmatpush1.msra.mxu0 0.0
    %825 = vmatprep.subr.mxu0 0.0
    %826 = vmatpush1.msra.mxu0 0.0
    %827 = vmatprep.subr.mxu0 0.0
    %828 = vmatpush1.msra.mxu0 0.0
    %829 = vmatprep.subr.mxu0 0.0
    %830 = vmatpush1.msra.mxu0 0.0
    %831 = vmatprep.subr.mxu0 0.0
    %832 = vmatpush1.msra.mxu0 0.0
    %833 = vmatprep.subr.mxu0 0.0
    %834 = vmatpush1.msra.mxu0 0.0
    %835 = vmatprep.subr.mxu0 0.0
    %836 = vmatpush1.msra.mxu0 0.0
    %837 = vmatprep.subr.mxu0 0.0
    %838 = vmatpush1.msra.mxu0 0.0
    %839 = vmatprep.subr.mxu0 0.0
    %840 = vmatpush1.msra.mxu0 0.0
    %841 = vmatprep.subr.mxu0 0.0
    %842 = vmatpush1.msra.mxu0 0.0
    %843 = vmatprep.subr.mxu0 0.0
    %844 = vmatpush1.msra.mxu0 0.0
    %845 = vmatprep.subr.mxu0 0.0
    %846 = vmatpush1.msra.mxu0 0.0
    %847 = vmatprep.subr.mxu0 0.0
    %848 = vmatpush1.msra.mxu0 0.0
    %849 = vmatprep.subr.mxu0 0.0
    %850 = vmatpush1.msra.mxu0 0.0
    %851 = vmatprep.subr.mxu0 0.0
    %852 = vmatpush1.msra.mxu0 0.0
    %853 = vmatprep.subr.mxu0 0.0
    %854 = vmatpush1.msra.mxu0 0.0
    %855 = vmatprep.subr.mxu0 0.0
    %856 = vmatpush1.msra.mxu0 0.0
    %857 = vmatprep.subr.mxu0 0.0
    %858 = vmatpush1.msra.mxu0 0.0
    %859 = vmatprep.subr.mxu0 0.0
    %860 = vmatpush1.msra.mxu0 0.0
    %861 = vmatprep.subr.mxu0 0.0
    %862 = vmatpush1.msra.mxu0 0.0
    %863 = vmatprep.subr.mxu0 0.0
    %864 = vmatpush1.msra.mxu0 0.0
    %865 = vmatprep.subr.mxu0 0.0
    %866 = vmatpush1.msra.mxu0 0.0
    %867 = vmatprep.mubr.f32.mxu0 0.0
    %868 = vmatmul.mubr.f32.gmra.mrb[0].mxu0 %v246
    %v869 = vpop.f32.mrb[0].mxu0
    %v870 = vadd.f32 0.0, %v869
    %v871 = vpop.f32.mrb[0].mxu0
    %872 = vmatprep.mubr.f32.mxu0 0.0
    %873 = vmatmul.mubr.f32.gmra.mrb[0].mxu0 %v249
    %v874 = vpop.f32.mrb[0].mxu0
    %v875 = vadd.f32 0.0, %v874
    %v876 = vpop.f32.mrb[0].mxu0
    %877 = vmatprep.mubr.f32.mxu0 0.0
    %878 = vmatmul.mubr.f32.gmra.mrb[0].mxu0 %v252
    %v879 = vpop.f32.mrb[0].mxu0
    %v880 = vadd.f32 0.0, %v879
    %v881 = vpop.f32.mrb[0].mxu0
    %882 = vmatprep.mubr.f32.mxu0 0.0
    %883 = vmatmul.mubr.f32.gmra.mrb[0].mxu0 %v255
    %v884 = vpop.f32.mrb[0].mxu0
    %v885 = vadd.f32 0.0, %v884
    %v886 = vpop.f32.mrb[0].mxu0
    %887 = vdwg.mxu0
    %888 = vmatprep.subr.mxu0 0.0
    %889 = vmatpush1.msra.mxu0 %v798
    %890 = vmatprep.subr.mxu0 0.0
    %891 = vmatpush1.msra.mxu0 %v799
    %892 = vmatprep.subr.mxu0 0.0
    %893 = vmatpush1.msra.mxu0 %v800
    %894 = vmatprep.subr.mxu0 0.0
    %895 = vmatpush1.msra.mxu0 %v801
    %896 = vmatprep.subr.mxu0 0.0
    %897 = vmatpush1.msra.mxu0 0.0
    %898 = vmatprep.subr.mxu0 0.0
    %899 = vmatpush1.msra.mxu0 0.0
    %900 = vmatprep.subr.mxu0 0.0
    %901 = vmatpush1.msra.mxu0 0.0
    %902 = vmatprep.subr.mxu0 0.0
    %903 = vmatpush1.msra.mxu0 0.0
    %904 = vmatprep.subr.mxu0 0.0
    %905 = vmatpush1.msra.mxu0 0.0
    %906 = vmatprep.subr.mxu0 0.0
    %907 = vmatpush1.msra.mxu0 0.0
    %908 = vmatprep.subr.mxu0 0.0
    %909 = vmatpush1.msra.mxu0 0.0
    %910 = vmatprep.subr.mxu0 0.0
    %911 = vmatpush1.msra.mxu0 0.0
    %912 = vmatprep.subr.mxu0 0.0
    %913 = vmatpush1.msra.mxu0 0.0
    %914 = vmatprep.subr.mxu0 0.0
    %915 = vmatpush1.msra.mxu0 0.0
    %916 = vmatprep.subr.mxu0 0.0
    %917 = vmatpush1.msra.mxu0 0.0
    %918 = vmatprep.subr.mxu0 0.0
    %919 = vmatpush1.msra.mxu0 0.0
    %920 = vmatprep.subr.mxu0 0.0
    %921 = vmatpush1.msra.mxu0 0.0
    %922 = vmatprep.subr.mxu0 0.0
    %923 = vmatpush1.msra.mxu0 0.0
    %924 = vmatprep.subr.mxu0 0.0
    %925 = vmatpush1.msra.mxu0 0.0
    %926 = vmatprep.subr.mxu0 0.0
    %927 = vmatpush1.msra.mxu0 0.0
    %928 = vmatprep.subr.mxu0 0.0
    %929 = vmatpush1.msra.mxu0 0.0
    %930 = vmatprep.subr.mxu0 0.0
    %931 = vmatpush1.msra.mxu0 0.0
    %932 = vmatprep.subr.mxu0 0.0
    %933 = vmatpush1.msra.mxu0 0.0
    %934 = vmatprep.subr.mxu0 0.0
    %935 = vmatpush1.msra.mxu0 0.0
    %936 = vmatprep.subr.mxu0 0.0
    %937 = vmatpush1.msra.mxu0 0.0
    %938 = vmatprep.subr.mxu0 0.0
    %939 = vmatpush1.msra.mxu0 0.0
    %940 = vmatprep.subr.mxu0 0.0
    %941 = vmatpush1.msra.mxu0 0.0
    %942 = vmatprep.subr.mxu0 0.0
    %943 = vmatpush1.msra.mxu0 0.0
    %944 = vmatprep.subr.mxu0 0.0
    %945 = vmatpush1.msra.mxu0 0.0
    %946 = vmatprep.subr.mxu0 0.0
    %947 = vmatpush1.msra.mxu0 0.0
    %948 = vmatprep.subr.mxu0 0.0
    %949 = vmatpush1.msra.mxu0 0.0
    %950 = vmatprep.subr.mxu0 0.0
    %951 = vmatpush1.msra.mxu0 0.0
    %952 = vmatprep.mubr.f32.mxu0 0.0
    %953 = vmatmul.mubr.f32.gmra.mrb[0].mxu0 %v343
    %v954 = vpop.f32.mrb[0].mxu0
    %v955 = vadd.f32 0.0, %v954
    %v956 = vpop.f32.mrb[0].mxu0
    %957 = vmatprep.mubr.f32.mxu0 0.0
    %958 = vmatmul.mubr.f32.gmra.mrb[0].mxu0 %v346
    %v959 = vpop.f32.mrb[0].mxu0
    %v960 = vadd.f32 0.0, %v959
    %v961 = vpop.f32.mrb[0].mxu0
    %962 = vmatprep.mubr.f32.mxu0 0.0
    %963 = vmatmul.mubr.f32.gmra.mrb[0].mxu0 %v349
    %v964 = vpop.f32.mrb[0].mxu0
    %v965 = vadd.f32 0.0, %v964
    %v966 = vpop.f32.mrb[0].mxu0
    %967 = vmatprep.mubr.f32.mxu0 0.0
    %968 = vmatmul.mubr.f32.gmra.mrb[0].mxu0 %v352
    %v969 = vpop.f32.mrb[0].mxu0
    %v970 = vadd.f32 0.0, %v969
    %v971 = vpop.f32.mrb[0].mxu0
    %972 = vdwg.mxu0
    %v973 = vpack.c.bf16 %v875, %v870
    %v974 = vpack.c.bf16 %v885, %v880
    %v975 = vld [vmem:[#allocation8] sm:$0xf]
    %v976 = vld [vmem:[#allocation8 + $0x4] sm:$0xf]
    %v977 = vld [vmem:[#allocation8 + $0x8] sm:$0xf]
    %v978 = vld [vmem:[#allocation8 + $0xc] sm:$0xf]
    %v979 = vld [vmem:[#allocation8 + $0x10] sm:$0xf]
    %v980 = vld [vmem:[#allocation8 + $0x14] sm:$0xf]
    %v981 = vld [vmem:[#allocation8 + $0x18] sm:$0xf]
    %v982 = vld [vmem:[#allocation8 + $0x1c] sm:$0xf]
    %v983 = vld [vmem:[#allocation8 + $0x20] sm:$0xf]
    %v984 = vld [vmem:[#allocation8 + $0x24] sm:$0xf]
    %v985 = vld [vmem:[#allocation8 + $0x28] sm:$0xf]
    %v986 = vld [vmem:[#allocation8 + $0x2c] sm:$0xf]
    %v987 = vld [vmem:[#allocation8 + $0x30] sm:$0xf]
    %v988 = vld [vmem:[#allocation8 + $0x34] sm:$0xf]
    %v989 = vld [vmem:[#allocation8 + $0x38] sm:$0xf]
    %v990 = vld [vmem:[#allocation8 + $0x3c] sm:$0xf]
    %v991 = vpack.c.bf16 %v799, %v798
    %v992 = vpack.c.bf16 %v801, %v800
    %s993 = scalar_lea.vmem [#allocation8], 64
    %v994 = vld [vmem:[%s993] sm:$0xf]
    %v995 = vld [vmem:[%s993 + $0x4] sm:$0xf]
    %v996 = vld [vmem:[%s993 + $0x8] sm:$0xf]
    %v997 = vld [vmem:[%s993 + $0xc] sm:$0xf]
    %v998 = vld [vmem:[%s993 + $0x10] sm:$0xf]
    %v999 = vld [vmem:[%s993 + $0x14] sm:$0xf]
    %v1000 = vld [vmem:[%s993 + $0x18] sm:$0xf]
    %v1001 = vld [vmem:[%s993 + $0x1c] sm:$0xf]
    %v1002 = vld [vmem:[%s993 + $0x20] sm:$0xf]
    %v1003 = vld [vmem:[%s993 + $0x24] sm:$0xf]
    %v1004 = vld [vmem:[%s993 + $0x28] sm:$0xf]
    %v1005 = vld [vmem:[%s993 + $0x2c] sm:$0xf]
    %v1006 = vld [vmem:[%s993 + $0x30] sm:$0xf]
    %v1007 = vld [vmem:[%s993 + $0x34] sm:$0xf]
    %v1008 = vld [vmem:[%s993 + $0x38] sm:$0xf]
    %v1009 = vld [vmem:[%s993 + $0x3c] sm:$0xf]
    %v1026 = vunpack.c.l.b16 %v994
    %v1027 = vunpack.c.l.b16 %v995
    %v1028 = vunpack.c.l.b16 %v996
    %v1029 = vunpack.c.l.b16 %v997
    %v1030 = vunpack.c.l.b16 %v998
    %v1031 = vunpack.c.l.b16 %v999
    %v1032 = vunpack.c.l.b16 %v1000
    %v1033 = vunpack.c.l.b16 %v1001
    %v1034 = vunpack.c.l.b16 %v1002
    %v1035 = vunpack.c.l.b16 %v1003
    %v1036 = vunpack.c.l.b16 %v1004
    %v1037 = vunpack.c.l.b16 %v1005
    %v1038 = vunpack.c.l.b16 %v1006
    %v1039 = vunpack.c.l.b16 %v1007
    %v1040 = vunpack.c.l.b16 %v1008
    %v1041 = vunpack.c.l.b16 %v1009
    %v1042 = vpack.c.b16 %v1027, %v1026
    %v1043 = vpack.c.b16 %v1029, %v1028
    %v1044 = vpack.c.b16 %v1031, %v1030
    %v1045 = vpack.c.b16 %v1033, %v1032
    %v1046 = vpack.c.b16 %v1035, %v1034
    %v1047 = vpack.c.b16 %v1037, %v1036
    %v1048 = vpack.c.b16 %v1039, %v1038
    %v1049 = vpack.c.b16 %v1041, %v1040
    %1058 = vmatprep.subr.bf16.mxu0 0
    %1059 = vmatpush1.bf16.msra.mxu0 %v1042
    %1060 = vmatprep.subr.bf16.mxu0 0
    %1061 = vmatpush1.bf16.msra.mxu0 %v1043
    %1062 = vmatprep.subr.bf16.mxu0 0
    %1063 = vmatpush1.bf16.msra.mxu0 %v1044
    %1064 = vmatprep.subr.bf16.mxu0 0
    %1065 = vmatpush1.bf16.msra.mxu0 %v1045
    %1066 = vmatprep.subr.bf16.mxu0 0
    %1067 = vmatpush1.bf16.msra.mxu0 %v1046
    %1068 = vmatprep.subr.bf16.mxu0 0
    %1069 = vmatpush1.bf16.msra.mxu0 %v1047
    %1070 = vmatprep.subr.bf16.mxu0 0
    %1071 = vmatpush1.bf16.msra.mxu0 %v1048
    %1072 = vmatprep.subr.bf16.mxu0 0
    %1073 = vmatpush1.bf16.msra.mxu0 %v1049
    %1074 = vmatprep.subr.bf16.mxu0 0
    %1075 = vmatpush1.bf16.msra.mxu0 0
    %1076 = vmatprep.subr.bf16.mxu0 0
    %1077 = vmatpush1.bf16.msra.mxu0 0
    %1078 = vmatprep.subr.bf16.mxu0 0
    %1079 = vmatpush1.bf16.msra.mxu0 0
    %1080 = vmatprep.subr.bf16.mxu0 0
    %1081 = vmatpush1.bf16.msra.mxu0 0
    %1082 = vmatprep.subr.bf16.mxu0 0
    %1083 = vmatpush1.bf16.msra.mxu0 0
    %1084 = vmatprep.subr.bf16.mxu0 0
    %1085 = vmatpush1.bf16.msra.mxu0 0
    %1086 = vmatprep.subr.bf16.mxu0 0
    %1087 = vmatpush1.bf16.msra.mxu0 0
    %1088 = vmatprep.subr.bf16.mxu0 0
    %1089 = vmatpush1.bf16.msra.mxu0 0
    %1090 = vmatprep.mubr.bf16.mxu0 0
    %1091 = vmatmul.mubr.bf16.gmra.mrb[0].mxu0 %v991
    %v1092 = vpop.f32.mrb[0].mxu0
    %v1093 = vadd.f32 0.0, %v1092
    %v1094 = vpop.f32.mrb[0].mxu0
    %v1095 = vpop.f32.mrb[0].mxu0
    %v1096 = vadd.f32 0.0, %v1095
    %v1097 = vpop.f32.mrb[0].mxu0
    %1098 = vmatprep.mubr.bf16.mxu0 0
    %1099 = vmatmul.mubr.bf16.gmra.mrb[0].mxu0 %v992
    %v1100 = vpop.f32.mrb[0].mxu0
    %v1101 = vadd.f32 0.0, %v1100
    %v1102 = vpop.f32.mrb[0].mxu0
    %v1103 = vpop.f32.mrb[0].mxu0
    %v1104 = vadd.f32 0.0, %v1103
    %v1105 = vpop.f32.mrb[0].mxu0
    %1106 = vdwg.mxu0
    %v1123 = vunpack.c.l.b16 %v975
    %v1124 = vunpack.c.l.b16 %v976
    %v1125 = vunpack.c.l.b16 %v977
    %v1126 = vunpack.c.l.b16 %v978
    %v1127 = vunpack.c.l.b16 %v979
    %v1128 = vunpack.c.l.b16 %v980
    %v1129 = vunpack.c.l.b16 %v981
    %v1130 = vunpack.c.l.b16 %v982
    %v1131 = vunpack.c.l.b16 %v983
    %v1132 = vunpack.c.l.b16 %v984
    %v1133 = vunpack.c.l.b16 %v985
    %v1134 = vunpack.c.l.b16 %v986
    %v1135 = vunpack.c.l.b16 %v987
    %v1136 = vunpack.c.l.b16 %v988
    %v1137 = vunpack.c.l.b16 %v989
    %v1138 = vunpack.c.l.b16 %v990
    %v1139 = vpack.c.b16 %v1124, %v1123
    %v1140 = vpack.c.b16 %v1126, %v1125
    %v1141 = vpack.c.b16 %v1128, %v1127
    %v1142 = vpack.c.b16 %v1130, %v1129
    %v1143 = vpack.c.b16 %v1132, %v1131
    %v1144 = vpack.c.b16 %v1134, %v1133
    %v1145 = vpack.c.b16 %v1136, %v1135
    %v1146 = vpack.c.b16 %v1138, %v1137
    %1155 = vmatprep.subr.bf16.mxu0 0
    %1156 = vmatpush1.bf16.msra.mxu0 %v1139
    %1157 = vmatprep.subr.bf16.mxu0 0
    %1158 = vmatpush1.bf16.msra.mxu0 %v1140
    %1159 = vmatprep.subr.bf16.mxu0 0
    %1160 = vmatpush1.bf16.msra.mxu0 %v1141
    %1161 = vmatprep.subr.bf16.mxu0 0
    %1162 = vmatpush1.bf16.msra.mxu0 %v1142
    %1163 = vmatprep.subr.bf16.mxu0 0
    %1164 = vmatpush1.bf16.msra.mxu0 %v1143
    %1165 = vmatprep.subr.bf16.mxu0 0
    %1166 = vmatpush1.bf16.msra.mxu0 %v1144
    %1167 = vmatprep.subr.bf16.mxu0 0
    %1168 = vmatpush1.bf16.msra.mxu0 %v1145
    %1169 = vmatprep.subr.bf16.mxu0 0
    %1170 = vmatpush1.bf16.msra.mxu0 %v1146
    %1171 = vmatprep.subr.bf16.mxu0 0
    %1172 = vmatpush1.bf16.msra.mxu0 0
    %1173 = vmatprep.subr.bf16.mxu0 0
    %1174 = vmatpush1.bf16.msra.mxu0 0
    %1175 = vmatprep.subr.bf16.mxu0 0
    %1176 = vmatpush1.bf16.msra.mxu0 0
    %1177 = vmatprep.subr.bf16.mxu0 0
    %1178 = vmatpush1.bf16.msra.mxu0 0
    %1179 = vmatprep.subr.bf16.mxu0 0
    %1180 = vmatpush1.bf16.msra.mxu0 0
    %1181 = vmatprep.subr.bf16.mxu0 0
    %1182 = vmatpush1.bf16.msra.mxu0 0
    %1183 = vmatprep.subr.bf16.mxu0 0
    %1184 = vmatpush1.bf16.msra.mxu0 0
    %1185 = vmatprep.subr.bf16.mxu0 0
    %1186 = vmatpush1.bf16.msra.mxu0 0
    %1187 = vmatprep.mubr.bf16.mxu0 0
    %1188 = vmatmul.mubr.bf16.gmra.mrb[0].mxu0 %v973
    %v1189 = vpop.f32.mrb[0].mxu0
    %v1190 = vadd.f32 %v1093, %v1189
    %v1191 = vpop.f32.mrb[0].mxu0
    %v1192 = vpop.f32.mrb[0].mxu0
    %v1193 = vadd.f32 %v1096, %v1192
    %v1194 = vpop.f32.mrb[0].mxu0
    %1195 = vmatprep.mubr.bf16.mxu0 0
    %1196 = vmatmul.mubr.bf16.gmra.mrb[0].mxu0 %v974
    %v1197 = vpop.f32.mrb[0].mxu0
    %v1198 = vadd.f32 %v1101, %v1197
    %v1199 = vpop.f32.mrb[0].mxu0
    %v1200 = vpop.f32.mrb[0].mxu0
    %v1201 = vadd.f32 %v1104, %v1200
    %v1202 = vpop.f32.mrb[0].mxu0
    %1203 = vdwg.mxu0
    %v1204 = vpack.c.bf16 %v960, %v955
    %v1205 = vpack.c.bf16 %v970, %v965
    %s1206 = scalar_lea.vmem [#allocation8], 128
    %v1207 = vld [vmem:[%s1206] sm:$0xf]
    %v1208 = vld [vmem:[%s1206 + $0x4] sm:$0xf]
    %v1209 = vld [vmem:[%s1206 + $0x8] sm:$0xf]
    %v1210 = vld [vmem:[%s1206 + $0xc] sm:$0xf]
    %v1211 = vld [vmem:[%s1206 + $0x10] sm:$0xf]
    %v1212 = vld [vmem:[%s1206 + $0x14] sm:$0xf]
    %v1213 = vld [vmem:[%s1206 + $0x18] sm:$0xf]
    %v1214 = vld [vmem:[%s1206 + $0x1c] sm:$0xf]
    %v1215 = vld [vmem:[%s1206 + $0x20] sm:$0xf]
    %v1216 = vld [vmem:[%s1206 + $0x24] sm:$0xf]
    %v1217 = vld [vmem:[%s1206 + $0x28] sm:$0xf]
    %v1218 = vld [vmem:[%s1206 + $0x2c] sm:$0xf]
    %v1219 = vld [vmem:[%s1206 + $0x30] sm:$0xf]
    %v1220 = vld [vmem:[%s1206 + $0x34] sm:$0xf]
    %v1221 = vld [vmem:[%s1206 + $0x38] sm:$0xf]
    %v1222 = vld [vmem:[%s1206 + $0x3c] sm:$0xf]
    %v1239 = vunpack.c.l.b16 %v1207
    %v1240 = vunpack.c.l.b16 %v1208
    %v1241 = vunpack.c.l.b16 %v1209
    %v1242 = vunpack.c.l.b16 %v1210
    %v1243 = vunpack.c.l.b16 %v1211
    %v1244 = vunpack.c.l.b16 %v1212
    %v1245 = vunpack.c.l.b16 %v1213
    %v1246 = vunpack.c.l.b16 %v1214
    %v1247 = vunpack.c.l.b16 %v1215
    %v1248 = vunpack.c.l.b16 %v1216
    %v1249 = vunpack.c.l.b16 %v1217
    %v1250 = vunpack.c.l.b16 %v1218
    %v1251 = vunpack.c.l.b16 %v1219
    %v1252 = vunpack.c.l.b16 %v1220
    %v1253 = vunpack.c.l.b16 %v1221
    %v1254 = vunpack.c.l.b16 %v1222
    %v1255 = vpack.c.b16 %v1240, %v1239
    %v1256 = vpack.c.b16 %v1242, %v1241
    %v1257 = vpack.c.b16 %v1244, %v1243
    %v1258 = vpack.c.b16 %v1246, %v1245
    %v1259 = vpack.c.b16 %v1248, %v1247
    %v1260 = vpack.c.b16 %v1250, %v1249
    %v1261 = vpack.c.b16 %v1252, %v1251
    %v1262 = vpack.c.b16 %v1254, %v1253
    %1271 = vmatprep.subr.bf16.mxu0 0
    %1272 = vmatpush1.bf16.msra.mxu0 %v1255
    %1273 = vmatprep.subr.bf16.mxu0 0
    %1274 = vmatpush1.bf16.msra.mxu0 %v1256
    %1275 = vmatprep.subr.bf16.mxu0 0
    %1276 = vmatpush1.bf16.msra.mxu0 %v1257
    %1277 = vmatprep.subr.bf16.mxu0 0
    %1278 = vmatpush1.bf16.msra.mxu0 %v1258
    %1279 = vmatprep.subr.bf16.mxu0 0
    %1280 = vmatpush1.bf16.msra.mxu0 %v1259
    %1281 = vmatprep.subr.bf16.mxu0 0
    %1282 = vmatpush1.bf16.msra.mxu0 %v1260
    %1283 = vmatprep.subr.bf16.mxu0 0
    %1284 = vmatpush1.bf16.msra.mxu0 %v1261
    %1285 = vmatprep.subr.bf16.mxu0 0
    %1286 = vmatpush1.bf16.msra.mxu0 %v1262
    %1287 = vmatprep.subr.bf16.mxu0 0
    %1288 = vmatpush1.bf16.msra.mxu0 0
    %1289 = vmatprep.subr.bf16.mxu0 0
    %1290 = vmatpush1.bf16.msra.mxu0 0
    %1291 = vmatprep.subr.bf16.mxu0 0
    %1292 = vmatpush1.bf16.msra.mxu0 0
    %1293 = vmatprep.subr.bf16.mxu0 0
    %1294 = vmatpush1.bf16.msra.mxu0 0
    %1295 = vmatprep.subr.bf16.mxu0 0
    %1296 = vmatpush1.bf16.msra.mxu0 0
    %1297 = vmatprep.subr.bf16.mxu0 0
    %1298 = vmatpush1.bf16.msra.mxu0 0
    %1299 = vmatprep.subr.bf16.mxu0 0
    %1300 = vmatpush1.bf16.msra.mxu0 0
    %1301 = vmatprep.subr.bf16.mxu0 0
    %1302 = vmatpush1.bf16.msra.mxu0 0
    %1303 = vmatprep.mubr.bf16.mxu0 0
    %1304 = vmatmul.mubr.bf16.gmra.mrb[0].mxu0 %v1204
    %v1305 = vpop.f32.mrb[0].mxu0
    %v1306 = vadd.f32 0.0, %v1305
    %v1307 = vpop.f32.mrb[0].mxu0
    %v1308 = vpop.f32.mrb[0].mxu0
    %v1309 = vadd.f32 0.0, %v1308
    %v1310 = vpop.f32.mrb[0].mxu0
    %1311 = vmatprep.mubr.bf16.mxu0 0
    %1312 = vmatmul.mubr.bf16.gmra.mrb[0].mxu0 %v1205
    %v1313 = vpop.f32.mrb[0].mxu0
    %v1314 = vadd.f32 0.0, %v1313
    %v1315 = vpop.f32.mrb[0].mxu0
    %v1316 = vpop.f32.mrb[0].mxu0
    %v1317 = vadd.f32 0.0, %v1316
    %v1318 = vpop.f32.mrb[0].mxu0
    %1319 = vdwg.mxu0
    %v1320 = vadd.f32 %v1190, %v1306
    %v1321 = vadd.f32 %v1193, %v1309
    %v1322 = vadd.f32 %v1198, %v1314
    %v1323 = vadd.f32 %v1201, %v1317
    %v1324 = vlaneseq
    %v1325 = vshrl.u32 %v1324, 7
    %v1326 = vsub.s32 0, %v1325
    %v1327 = vrot.slane %v802, %v1326
    %v1328 = vadd.f32 %v1320, %v1327
    %v1329 = vadd.f32 %v1321, %v1327
    %v1330 = vadd.f32 %v1322, %v1327
    %v1331 = vadd.f32 %v1323, %v1327
    %v1332 = vadd.f32 %v1328, %v223
    %v1333 = vadd.f32 %v1329, %v224
    %v1334 = vadd.f32 %v1330, %v225
    %v1335 = vadd.f32 %v1331, %v226
    %v1336 = vmax.f32 %v1332, 0.0
    %v1337 = vmax.f32 %v1333, 0.0
    %v1338 = vmax.f32 %v1334, 0.0
    %v1339 = vmax.f32 %v1335, 0.0
    %v1340 = vld [vmem:[#allocation22 + $0x2] sm:$0x1]
    %vm1341 = vcmask 130048
    %v1343 = vsel %vm1341, %v238, 0
    %v1346 = vsel %vm1341, %v239, 0
    %1348 = vmatprep.subr.mxu0 0.0
    %1349 = vmatpush1.msra.mxu0 %v227
    %1350 = vmatprep.subr.mxu0 0.0
    %1351 = vmatpush1.msra.mxu0 %v228
    %1352 = vmatprep.subr.mxu0 0.0
    %1353 = vmatpush1.msra.mxu0 0.0
    %1354 = vmatprep.subr.mxu0 0.0
    %1355 = vmatpush1.msra.mxu0 0.0
    %1356 = vmatprep.subr.mxu0 0.0
    %1357 = vmatpush1.msra.mxu0 0.0
    %1358 = vmatprep.subr.mxu0 0.0
    %1359 = vmatpush1.msra.mxu0 0.0
    %1360 = vmatprep.subr.mxu0 0.0
    %1361 = vmatpush1.msra.mxu0 0.0
    %1362 = vmatprep.subr.mxu0 0.0
    %1363 = vmatpush1.msra.mxu0 0.0
    %1364 = vmatprep.subr.mxu0 0.0
    %1365 = vmatpush1.msra.mxu0 0.0
    %1366 = vmatprep.subr.mxu0 0.0
    %1367 = vmatpush1.msra.mxu0 0.0
    %1368 = vmatprep.subr.mxu0 0.0
    %1369 = vmatpush1.msra.mxu0 0.0
    %1370 = vmatprep.subr.mxu0 0.0
    %1371 = vmatpush1.msra.mxu0 0.0
    %1372 = vmatprep.subr.mxu0 0.0
    %1373 = vmatpush1.msra.mxu0 0.0
    %1374 = vmatprep.subr.mxu0 0.0
    %1375 = vmatpush1.msra.mxu0 0.0
    %1376 = vmatprep.subr.mxu0 0.0
    %1377 = vmatpush1.msra.mxu0 0.0
    %1378 = vmatprep.subr.mxu0 0.0
    %1379 = vmatpush1.msra.mxu0 0.0
    %1380 = vmatprep.subr.mxu0 0.0
    %1381 = vmatpush1.msra.mxu0 0.0
    %1382 = vmatprep.subr.mxu0 0.0
    %1383 = vmatpush1.msra.mxu0 0.0
    %1384 = vmatprep.subr.mxu0 0.0
    %1385 = vmatpush1.msra.mxu0 0.0
    %1386 = vmatprep.subr.mxu0 0.0
    %1387 = vmatpush1.msra.mxu0 0.0
    %1388 = vmatprep.subr.mxu0 0.0
    %1389 = vmatpush1.msra.mxu0 0.0
    %1390 = vmatprep.subr.mxu0 0.0
    %1391 = vmatpush1.msra.mxu0 0.0
    %1392 = vmatprep.subr.mxu0 0.0
    %1393 = vmatpush1.msra.mxu0 0.0
    %1394 = vmatprep.subr.mxu0 0.0
    %1395 = vmatpush1.msra.mxu0 0.0
    %1396 = vmatprep.subr.mxu0 0.0
    %1397 = vmatpush1.msra.mxu0 0.0
    %1398 = vmatprep.subr.mxu0 0.0
    %1399 = vmatpush1.msra.mxu0 0.0
    %1400 = vmatprep.subr.mxu0 0.0
    %1401 = vmatpush1.msra.mxu0 0.0
    %1402 = vmatprep.subr.mxu0 0.0
    %1403 = vmatpush1.msra.mxu0 0.0
    %1404 = vmatprep.subr.mxu0 0.0
    %1405 = vmatpush1.msra.mxu0 0.0
    %1406 = vmatprep.subr.mxu0 0.0
    %1407 = vmatpush1.msra.mxu0 0.0
    %1408 = vmatprep.subr.mxu0 0.0
    %1409 = vmatpush1.msra.mxu0 0.0
    %1410 = vmatprep.subr.mxu0 0.0
    %1411 = vmatpush1.msra.mxu0 0.0
    %1412 = vmatprep.mubr.f32.mxu0 0.0
    %1413 = vmatmul.mubr.f32.gmra.mrb[0].mxu0 %v1343
    %v1414 = vpop.f32.mrb[0].mxu0
    %v1415 = vadd.f32 0.0, %v1414
    %v1416 = vpop.f32.mrb[0].mxu0
    %1417 = vmatprep.mubr.f32.mxu0 0.0
    %1418 = vmatmul.mubr.f32.gmra.mrb[0].mxu0 %v1346
    %v1419 = vpop.f32.mrb[0].mxu0
    %v1420 = vadd.f32 0.0, %v1419
    %v1421 = vpop.f32.mrb[0].mxu0
    %1422 = vdwg.mxu0
    %v1424 = vsel %vm1341, %v241, 0
    %v1427 = vsel %vm1341, %v242, 0
    %1429 = vmatprep.subr.mxu0 0.0
    %1430 = vmatpush1.msra.mxu0 %v227
    %1431 = vmatprep.subr.mxu0 0.0
    %1432 = vmatpush1.msra.mxu0 %v228
    %1433 = vmatprep.subr.mxu0 0.0
    %1434 = vmatpush1.msra.mxu0 0.0
    %1435 = vmatprep.subr.mxu0 0.0
    %1436 = vmatpush1.msra.mxu0 0.0
    %1437 = vmatprep.subr.mxu0 0.0
    %1438 = vmatpush1.msra.mxu0 0.0
    %1439 = vmatprep.subr.mxu0 0.0
    %1440 = vmatpush1.msra.mxu0 0.0
    %1441 = vmatprep.subr.mxu0 0.0
    %1442 = vmatpush1.msra.mxu0 0.0
    %1443 = vmatprep.subr.mxu0 0.0
    %1444 = vmatpush1.msra.mxu0 0.0
    %1445 = vmatprep.subr.mxu0 0.0
    %1446 = vmatpush1.msra.mxu0 0.0
    %1447 = vmatprep.subr.mxu0 0.0
    %1448 = vmatpush1.msra.mxu0 0.0
    %1449 = vmatprep.subr.mxu0 0.0
    %1450 = vmatpush1.msra.mxu0 0.0
    %1451 = vmatprep.subr.mxu0 0.0
    %1452 = vmatpush1.msra.mxu0 0.0
    %1453 = vmatprep.subr.mxu0 0.0
    %1454 = vmatpush1.msra.mxu0 0.0
    %1455 = vmatprep.subr.mxu0 0.0
    %1456 = vmatpush1.msra.mxu0 0.0
    %1457 = vmatprep.subr.mxu0 0.0
    %1458 = vmatpush1.msra.mxu0 0.0
    %1459 = vmatprep.subr.mxu0 0.0
    %1460 = vmatpush1.msra.mxu0 0.0
    %1461 = vmatprep.subr.mxu0 0.0
    %1462 = vmatpush1.msra.mxu0 0.0
    %1463 = vmatprep.subr.mxu0 0.0
    %1464 = vmatpush1.msra.mxu0 0.0
    %1465 = vmatprep.subr.mxu0 0.0
    %1466 = vmatpush1.msra.mxu0 0.0
    %1467 = vmatprep.subr.mxu0 0.0
    %1468 = vmatpush1.msra.mxu0 0.0
    %1469 = vmatprep.subr.mxu0 0.0
    %1470 = vmatpush1.msra.mxu0 0.0
    %1471 = vmatprep.subr.mxu0 0.0
    %1472 = vmatpush1.msra.mxu0 0.0
    %1473 = vmatprep.subr.mxu0 0.0
    %1474 = vmatpush1.msra.mxu0 0.0
    %1475 = vmatprep.subr.mxu0 0.0
    %1476 = vmatpush1.msra.mxu0 0.0
    %1477 = vmatprep.subr.mxu0 0.0
    %1478 = vmatpush1.msra.mxu0 0.0
    %1479 = vmatprep.subr.mxu0 0.0
    %1480 = vmatpush1.msra.mxu0 0.0
    %1481 = vmatprep.subr.mxu0 0.0
    %1482 = vmatpush1.msra.mxu0 0.0
    %1483 = vmatprep.subr.mxu0 0.0
    %1484 = vmatpush1.msra.mxu0 0.0
    %1485 = vmatprep.subr.mxu0 0.0
    %1486 = vmatpush1.msra.mxu0 0.0
    %1487 = vmatprep.subr.mxu0 0.0
    %1488 = vmatpush1.msra.mxu0 0.0
    %1489 = vmatprep.subr.mxu0 0.0
    %1490 = vmatpush1.msra.mxu0 0.0
    %1491 = vmatprep.subr.mxu0 0.0
    %1492 = vmatpush1.msra.mxu0 0.0
    %1493 = vmatprep.mubr.f32.mxu0 0.0
    %1494 = vmatmul.mubr.f32.gmra.mrb[0].mxu0 %v1424
    %v1495 = vpop.f32.mrb[0].mxu0
    %v1496 = vadd.f32 0.0, %v1495
    %v1497 = vpop.f32.mrb[0].mxu0
    %1498 = vmatprep.mubr.f32.mxu0 0.0
    %1499 = vmatmul.mubr.f32.gmra.mrb[0].mxu0 %v1427
    %v1500 = vpop.f32.mrb[0].mxu0
    %v1501 = vadd.f32 0.0, %v1500
    %v1502 = vpop.f32.mrb[0].mxu0
    %1503 = vdwg.mxu0
    %v1504 = vpack.c.bf16 %v1420, %v1415
    %v1505 = vld [vmem:[#allocation10] sm:$0xf]
    %v1506 = vld [vmem:[#allocation10 + $0x4] sm:$0xf]
    %v1507 = vld [vmem:[#allocation10 + $0x8] sm:$0xf]
    %v1508 = vld [vmem:[#allocation10 + $0xc] sm:$0xf]
    %v1509 = vld [vmem:[#allocation10 + $0x10] sm:$0xf]
    %v1510 = vld [vmem:[#allocation10 + $0x14] sm:$0xf]
    %v1511 = vld [vmem:[#allocation10 + $0x18] sm:$0xf]
    %v1512 = vld [vmem:[#allocation10 + $0x1c] sm:$0xf]
    %v1513 = vld [vmem:[#allocation10 + $0x20] sm:$0xf]
    %v1514 = vld [vmem:[#allocation10 + $0x24] sm:$0xf]
    %v1515 = vld [vmem:[#allocation10 + $0x28] sm:$0xf]
    %v1516 = vld [vmem:[#allocation10 + $0x2c] sm:$0xf]
    %v1517 = vld [vmem:[#allocation10 + $0x30] sm:$0xf]
    %v1518 = vld [vmem:[#allocation10 + $0x34] sm:$0xf]
    %v1519 = vld [vmem:[#allocation10 + $0x38] sm:$0xf]
    %v1520 = vld [vmem:[#allocation10 + $0x3c] sm:$0xf]
    %v1521 = vpack.c.bf16 %v228, %v227
    %s1522 = scalar_lea.vmem [#allocation10], 64
    %v1523 = vld [vmem:[%s1522] sm:$0xf]
    %v1524 = vld [vmem:[%s1522 + $0x4] sm:$0xf]
    %v1525 = vld [vmem:[%s1522 + $0x8] sm:$0xf]
    %v1526 = vld [vmem:[%s1522 + $0xc] sm:$0xf]
    %v1527 = vld [vmem:[%s1522 + $0x10] sm:$0xf]
    %v1528 = vld [vmem:[%s1522 + $0x14] sm:$0xf]
    %v1529 = vld [vmem:[%s1522 + $0x18] sm:$0xf]
    %v1530 = vld [vmem:[%s1522 + $0x1c] sm:$0xf]
    %v1531 = vld [vmem:[%s1522 + $0x20] sm:$0xf]
    %v1532 = vld [vmem:[%s1522 + $0x24] sm:$0xf]
    %v1533 = vld [vmem:[%s1522 + $0x28] sm:$0xf]
    %v1534 = vld [vmem:[%s1522 + $0x2c] sm:$0xf]
    %v1535 = vld [vmem:[%s1522 + $0x30] sm:$0xf]
    %v1536 = vld [vmem:[%s1522 + $0x34] sm:$0xf]
    %v1537 = vld [vmem:[%s1522 + $0x38] sm:$0xf]
    %v1538 = vld [vmem:[%s1522 + $0x3c] sm:$0xf]
    %v1555 = vunpack.c.l.b16 %v1523
    %v1556 = vunpack.c.l.b16 %v1524
    %v1557 = vunpack.c.l.b16 %v1525
    %v1558 = vunpack.c.l.b16 %v1526
    %v1559 = vunpack.c.l.b16 %v1527
    %v1560 = vunpack.c.l.b16 %v1528
    %v1561 = vunpack.c.l.b16 %v1529
    %v1562 = vunpack.c.l.b16 %v1530
    %v1563 = vunpack.c.l.b16 %v1531
    %v1564 = vunpack.c.l.b16 %v1532
    %v1565 = vunpack.c.l.b16 %v1533
    %v1566 = vunpack.c.l.b16 %v1534
    %v1567 = vunpack.c.l.b16 %v1535
    %v1568 = vunpack.c.l.b16 %v1536
    %v1569 = vunpack.c.l.b16 %v1537
    %v1570 = vunpack.c.l.b16 %v1538
    %v1571 = vpack.c.b16 %v1556, %v1555
    %v1572 = vpack.c.b16 %v1558, %v1557
    %v1573 = vpack.c.b16 %v1560, %v1559
    %v1574 = vpack.c.b16 %v1562, %v1561
    %v1575 = vpack.c.b16 %v1564, %v1563
    %v1576 = vpack.c.b16 %v1566, %v1565
    %v1577 = vpack.c.b16 %v1568, %v1567
    %v1578 = vpack.c.b16 %v1570, %v1569
    %1587 = vmatprep.subr.bf16.mxu0 0
    %1588 = vmatpush1.bf16.msra.mxu0 %v1571
    %1589 = vmatprep.subr.bf16.mxu0 0
    %1590 = vmatpush1.bf16.msra.mxu0 %v1572
    %1591 = vmatprep.subr.bf16.mxu0 0
    %1592 = vmatpush1.bf16.msra.mxu0 %v1573
    %1593 = vmatprep.subr.bf16.mxu0 0
    %1594 = vmatpush1.bf16.msra.mxu0 %v1574
    %1595 = vmatprep.subr.bf16.mxu0 0
    %1596 = vmatpush1.bf16.msra.mxu0 %v1575
    %1597 = vmatprep.subr.bf16.mxu0 0
    %1598 = vmatpush1.bf16.msra.mxu0 %v1576
    %1599 = vmatprep.subr.bf16.mxu0 0
    %1600 = vmatpush1.bf16.msra.mxu0 %v1577
    %1601 = vmatprep.subr.bf16.mxu0 0
    %1602 = vmatpush1.bf16.msra.mxu0 %v1578
    %1603 = vmatprep.subr.bf16.mxu0 0
    %1604 = vmatpush1.bf16.msra.mxu0 0
    %1605 = vmatprep.subr.bf16.mxu0 0
    %1606 = vmatpush1.bf16.msra.mxu0 0
    %1607 = vmatprep.subr.bf16.mxu0 0
    %1608 = vmatpush1.bf16.msra.mxu0 0
    %1609 = vmatprep.subr.bf16.mxu0 0
    %1610 = vmatpush1.bf16.msra.mxu0 0
    %1611 = vmatprep.subr.bf16.mxu0 0
    %1612 = vmatpush1.bf16.msra.mxu0 0
    %1613 = vmatprep.subr.bf16.mxu0 0
    %1614 = vmatpush1.bf16.msra.mxu0 0
    %1615 = vmatprep.subr.bf16.mxu0 0
    %1616 = vmatpush1.bf16.msra.mxu0 0
    %1617 = vmatprep.subr.bf16.mxu0 0
    %1618 = vmatpush1.bf16.msra.mxu0 0
    %1619 = vmatprep.mubr.bf16.mxu0 0
    %1620 = vmatmul.mubr.bf16.gmra.mrb[0].mxu0 %v1521
    %v1621 = vpop.f32.mrb[0].mxu0
    %v1622 = vadd.f32 0.0, %v1621
    %v1623 = vpop.f32.mrb[0].mxu0
    %v1624 = vpop.f32.mrb[0].mxu0
    %v1625 = vadd.f32 0.0, %v1624
    %v1626 = vpop.f32.mrb[0].mxu0
    %1627 = vdwg.mxu0
    %v1644 = vunpack.c.l.b16 %v1505
    %v1645 = vunpack.c.l.b16 %v1506
    %v1646 = vunpack.c.l.b16 %v1507
    %v1647 = vunpack.c.l.b16 %v1508
    %v1648 = vunpack.c.l.b16 %v1509
    %v1649 = vunpack.c.l.b16 %v1510
    %v1650 = vunpack.c.l.b16 %v1511
    %v1651 = vunpack.c.l.b16 %v1512
    %v1652 = vunpack.c.l.b16 %v1513
    %v1653 = vunpack.c.l.b16 %v1514
    %v1654 = vunpack.c.l.b16 %v1515
    %v1655 = vunpack.c.l.b16 %v1516
    %v1656 = vunpack.c.l.b16 %v1517
    %v1657 = vunpack.c.l.b16 %v1518
    %v1658 = vunpack.c.l.b16 %v1519
    %v1659 = vunpack.c.l.b16 %v1520
    %v1660 = vpack.c.b16 %v1645, %v1644
    %v1661 = vpack.c.b16 %v1647, %v1646
    %v1662 = vpack.c.b16 %v1649, %v1648
    %v1663 = vpack.c.b16 %v1651, %v1650
    %v1664 = vpack.c.b16 %v1653, %v1652
    %v1665 = vpack.c.b16 %v1655, %v1654
    %v1666 = vpack.c.b16 %v1657, %v1656
    %v1667 = vpack.c.b16 %v1659, %v1658
    %1676 = vmatprep.subr.bf16.mxu0 0
    %1677 = vmatpush1.bf16.msra.mxu0 %v1660
    %1678 = vmatprep.subr.bf16.mxu0 0
    %1679 = vmatpush1.bf16.msra.mxu0 %v1661
    %1680 = vmatprep.subr.bf16.mxu0 0
    %1681 = vmatpush1.bf16.msra.mxu0 %v1662
    %1682 = vmatprep.subr.bf16.mxu0 0
    %1683 = vmatpush1.bf16.msra.mxu0 %v1663
    %1684 = vmatprep.subr.bf16.mxu0 0
    %1685 = vmatpush1.bf16.msra.mxu0 %v1664
    %1686 = vmatprep.subr.bf16.mxu0 0
    %1687 = vmatpush1.bf16.msra.mxu0 %v1665
    %1688 = vmatprep.subr.bf16.mxu0 0
    %1689 = vmatpush1.bf16.msra.mxu0 %v1666
    %1690 = vmatprep.subr.bf16.mxu0 0
    %1691 = vmatpush1.bf16.msra.mxu0 %v1667
    %1692 = vmatprep.subr.bf16.mxu0 0
    %1693 = vmatpush1.bf16.msra.mxu0 0
    %1694 = vmatprep.subr.bf16.mxu0 0
    %1695 = vmatpush1.bf16.msra.mxu0 0
    %1696 = vmatprep.subr.bf16.mxu0 0
    %1697 = vmatpush1.bf16.msra.mxu0 0
    %1698 = vmatprep.subr.bf16.mxu0 0
    %1699 = vmatpush1.bf16.msra.mxu0 0
    %1700 = vmatprep.subr.bf16.mxu0 0
    %1701 = vmatpush1.bf16.msra.mxu0 0
    %1702 = vmatprep.subr.bf16.mxu0 0
    %1703 = vmatpush1.bf16.msra.mxu0 0
    %1704 = vmatprep.subr.bf16.mxu0 0
    %1705 = vmatpush1.bf16.msra.mxu0 0
    %1706 = vmatprep.subr.bf16.mxu0 0
    %1707 = vmatpush1.bf16.msra.mxu0 0
    %1708 = vmatprep.mubr.bf16.mxu0 0
    %1709 = vmatmul.mubr.bf16.gmra.mrb[0].mxu0 %v1504
    %v1710 = vpop.f32.mrb[0].mxu0
    %v1711 = vadd.f32 %v1622, %v1710
    %v1712 = vpop.f32.mrb[0].mxu0
    %v1713 = vpop.f32.mrb[0].mxu0
    %v1714 = vadd.f32 %v1625, %v1713
    %v1715 = vpop.f32.mrb[0].mxu0
    %1716 = vdwg.mxu0
    %v1717 = vpack.c.bf16 %v1501, %v1496
    %s1718 = scalar_lea.vmem [#allocation10], 128
    %v1719 = vld [vmem:[%s1718] sm:$0xf]
    %v1720 = vld [vmem:[%s1718 + $0x4] sm:$0xf]
    %v1721 = vld [vmem:[%s1718 + $0x8] sm:$0xf]
    %v1722 = vld [vmem:[%s1718 + $0xc] sm:$0xf]
    %v1723 = vld [vmem:[%s1718 + $0x10] sm:$0xf]
    %v1724 = vld [vmem:[%s1718 + $0x14] sm:$0xf]
    %v1725 = vld [vmem:[%s1718 + $0x18] sm:$0xf]
    %v1726 = vld [vmem:[%s1718 + $0x1c] sm:$0xf]
    %v1727 = vld [vmem:[%s1718 + $0x20] sm:$0xf]
    %v1728 = vld [vmem:[%s1718 + $0x24] sm:$0xf]
    %v1729 = vld [vmem:[%s1718 + $0x28] sm:$0xf]
    %v1730 = vld [vmem:[%s1718 + $0x2c] sm:$0xf]
    %v1731 = vld [vmem:[%s1718 + $0x30] sm:$0xf]
    %v1732 = vld [vmem:[%s1718 + $0x34] sm:$0xf]
    %v1733 = vld [vmem:[%s1718 + $0x38] sm:$0xf]
    %v1734 = vld [vmem:[%s1718 + $0x3c] sm:$0xf]
    %v1751 = vunpack.c.l.b16 %v1719
    %v1752 = vunpack.c.l.b16 %v1720
    %v1753 = vunpack.c.l.b16 %v1721
    %v1754 = vunpack.c.l.b16 %v1722
    %v1755 = vunpack.c.l.b16 %v1723
    %v1756 = vunpack.c.l.b16 %v1724
    %v1757 = vunpack.c.l.b16 %v1725
    %v1758 = vunpack.c.l.b16 %v1726
    %v1759 = vunpack.c.l.b16 %v1727
    %v1760 = vunpack.c.l.b16 %v1728
    %v1761 = vunpack.c.l.b16 %v1729
    %v1762 = vunpack.c.l.b16 %v1730
    %v1763 = vunpack.c.l.b16 %v1731
    %v1764 = vunpack.c.l.b16 %v1732
    %v1765 = vunpack.c.l.b16 %v1733
    %v1766 = vunpack.c.l.b16 %v1734
    %v1767 = vpack.c.b16 %v1752, %v1751
    %v1768 = vpack.c.b16 %v1754, %v1753
    %v1769 = vpack.c.b16 %v1756, %v1755
    %v1770 = vpack.c.b16 %v1758, %v1757
    %v1771 = vpack.c.b16 %v1760, %v1759
    %v1772 = vpack.c.b16 %v1762, %v1761
    %v1773 = vpack.c.b16 %v1764, %v1763
    %v1774 = vpack.c.b16 %v1766, %v1765
    %1783 = vmatprep.subr.bf16.mxu0 0
    %1784 = vmatpush1.bf16.msra.mxu0 %v1767
    %1785 = vmatprep.subr.bf16.mxu0 0
    %1786 = vmatpush1.bf16.msra.mxu0 %v1768
    %1787 = vmatprep.subr.bf16.mxu0 0
    %1788 = vmatpush1.bf16.msra.mxu0 %v1769
    %1789 = vmatprep.subr.bf16.mxu0 0
    %1790 = vmatpush1.bf16.msra.mxu0 %v1770
    %1791 = vmatprep.subr.bf16.mxu0 0
    %1792 = vmatpush1.bf16.msra.mxu0 %v1771
    %1793 = vmatprep.subr.bf16.mxu0 0
    %1794 = vmatpush1.bf16.msra.mxu0 %v1772
    %1795 = vmatprep.subr.bf16.mxu0 0
    %1796 = vmatpush1.bf16.msra.mxu0 %v1773
    %1797 = vmatprep.subr.bf16.mxu0 0
    %1798 = vmatpush1.bf16.msra.mxu0 %v1774
    %1799 = vmatprep.subr.bf16.mxu0 0
    %1800 = vmatpush1.bf16.msra.mxu0 0
    %1801 = vmatprep.subr.bf16.mxu0 0
    %1802 = vmatpush1.bf16.msra.mxu0 0
    %1803 = vmatprep.subr.bf16.mxu0 0
    %1804 = vmatpush1.bf16.msra.mxu0 0
    %1805 = vmatprep.subr.bf16.mxu0 0
    %1806 = vmatpush1.bf16.msra.mxu0 0
    %1807 = vmatprep.subr.bf16.mxu0 0
    %1808 = vmatpush1.bf16.msra.mxu0 0
    %1809 = vmatprep.subr.bf16.mxu0 0
    %1810 = vmatpush1.bf16.msra.mxu0 0
    %1811 = vmatprep.subr.bf16.mxu0 0
    %1812 = vmatpush1.bf16.msra.mxu0 0
    %1813 = vmatprep.subr.bf16.mxu0 0
    %1814 = vmatpush1.bf16.msra.mxu0 0
    %1815 = vmatprep.mubr.bf16.mxu0 0
    %1816 = vmatmul.mubr.bf16.gmra.mrb[0].mxu0 %v1717
    %v1817 = vpop.f32.mrb[0].mxu0
    %v1818 = vadd.f32 0.0, %v1817
    %v1819 = vpop.f32.mrb[0].mxu0
    %v1820 = vpop.f32.mrb[0].mxu0
    %v1821 = vadd.f32 0.0, %v1820
    %v1822 = vpop.f32.mrb[0].mxu0
    %1823 = vdwg.mxu0
    %v1824 = vadd.f32 %v1711, %v1818
    %v1825 = vadd.f32 %v1714, %v1821
    %v1826 = vlaneseq
    %v1827 = vshrl.u32 %v1826, 7
    %v1828 = vsub.s32 0, %v1827
    %v1829 = vrot.slane %v1340, %v1828
    %v1830 = vadd.f32 %v1824, %v1829
    %v1831 = vadd.f32 %v1825, %v1829
    %v1832 = vmax.f32 %v1830, 0.0
    %v1833 = vmax.f32 %v1831, 0.0
    %v1834 = vld [vmem:[#allocation22 + $0x3] sm:$0x1]
    %1835 = vmatprep.subr.mxu0 0.0
    %1836 = vmatpush1.msra.mxu0 %v1832
    %1837 = vmatprep.subr.mxu0 0.0
    %1838 = vmatpush1.msra.mxu0 %v1833
    %1839 = vmatprep.subr.mxu0 0.0
    %1840 = vmatpush1.msra.mxu0 0.0
    %1841 = vmatprep.subr.mxu0 0.0
    %1842 = vmatpush1.msra.mxu0 0.0
    %1843 = vmatprep.subr.mxu0 0.0
    %1844 = vmatpush1.msra.mxu0 0.0
    %1845 = vmatprep.subr.mxu0 0.0
    %1846 = vmatpush1.msra.mxu0 0.0
    %1847 = vmatprep.subr.mxu0 0.0
    %1848 = vmatpush1.msra.mxu0 0.0
    %1849 = vmatprep.subr.mxu0 0.0
    %1850 = vmatpush1.msra.mxu0 0.0
    %1851 = vmatprep.subr.mxu0 0.0
    %1852 = vmatpush1.msra.mxu0 0.0
    %1853 = vmatprep.subr.mxu0 0.0
    %1854 = vmatpush1.msra.mxu0 0.0
    %1855 = vmatprep.subr.mxu0 0.0
    %1856 = vmatpush1.msra.mxu0 0.0
    %1857 = vmatprep.subr.mxu0 0.0
    %1858 = vmatpush1.msra.mxu0 0.0
    %1859 = vmatprep.subr.mxu0 0.0
    %1860 = vmatpush1.msra.mxu0 0.0
    %1861 = vmatprep.subr.mxu0 0.0
    %1862 = vmatpush1.msra.mxu0 0.0
    %1863 = vmatprep.subr.mxu0 0.0
    %1864 = vmatpush1.msra.mxu0 0.0
    %1865 = vmatprep.subr.mxu0 0.0
    %1866 = vmatpush1.msra.mxu0 0.0
    %1867 = vmatprep.subr.mxu0 0.0
    %1868 = vmatpush1.msra.mxu0 0.0
    %1869 = vmatprep.subr.mxu0 0.0
    %1870 = vmatpush1.msra.mxu0 0.0
    %1871 = vmatprep.subr.mxu0 0.0
    %1872 = vmatpush1.msra.mxu0 0.0
    %1873 = vmatprep.subr.mxu0 0.0
    %1874 = vmatpush1.msra.mxu0 0.0
    %1875 = vmatprep.subr.mxu0 0.0
    %1876 = vmatpush1.msra.mxu0 0.0
    %1877 = vmatprep.subr.mxu0 0.0
    %1878 = vmatpush1.msra.mxu0 0.0
    %1879 = vmatprep.subr.mxu0 0.0
    %1880 = vmatpush1.msra.mxu0 0.0
    %1881 = vmatprep.subr.mxu0 0.0
    %1882 = vmatpush1.msra.mxu0 0.0
    %1883 = vmatprep.subr.mxu0 0.0
    %1884 = vmatpush1.msra.mxu0 0.0
    %1885 = vmatprep.subr.mxu0 0.0
    %1886 = vmatpush1.msra.mxu0 0.0
    %1887 = vmatprep.subr.mxu0 0.0
    %1888 = vmatpush1.msra.mxu0 0.0
    %1889 = vmatprep.subr.mxu0 0.0
    %1890 = vmatpush1.msra.mxu0 0.0
    %1891 = vmatprep.subr.mxu0 0.0
    %1892 = vmatpush1.msra.mxu0 0.0
    %1893 = vmatprep.subr.mxu0 0.0
    %1894 = vmatpush1.msra.mxu0 0.0
    %1895 = vmatprep.subr.mxu0 0.0
    %1896 = vmatpush1.msra.mxu0 0.0
    %1897 = vmatprep.subr.mxu0 0.0
    %1898 = vmatpush1.msra.mxu0 0.0
    %1899 = vmatprep.mubr.f32.mxu0 0.0
    %1900 = vmatmul.mubr.f32.gmra.mrb[0].mxu0 %v1343
    %v1901 = vpop.f32.mrb[0].mxu0
    %v1902 = vadd.f32 0.0, %v1901
    %v1903 = vpop.f32.mrb[0].mxu0
    %1904 = vmatprep.mubr.f32.mxu0 0.0
    %1905 = vmatmul.mubr.f32.gmra.mrb[0].mxu0 %v1346
    %v1906 = vpop.f32.mrb[0].mxu0
    %v1907 = vadd.f32 0.0, %v1906
    %v1908 = vpop.f32.mrb[0].mxu0
    %1909 = vdwg.mxu0
    %1910 = vmatprep.subr.mxu0 0.0
    %1911 = vmatpush1.msra.mxu0 %v1832
    %1912 = vmatprep.subr.mxu0 0.0
    %1913 = vmatpush1.msra.mxu0 %v1833
    %1914 = vmatprep.subr.mxu0 0.0
    %1915 = vmatpush1.msra.mxu0 0.0
    %1916 = vmatprep.subr.mxu0 0.0
    %1917 = vmatpush1.msra.mxu0 0.0
    %1918 = vmatprep.subr.mxu0 0.0
    %1919 = vmatpush1.msra.mxu0 0.0
    %1920 = vmatprep.subr.mxu0 0.0
    %1921 = vmatpush1.msra.mxu0 0.0
    %1922 = vmatprep.subr.mxu0 0.0
    %1923 = vmatpush1.msra.mxu0 0.0
    %1924 = vmatprep.subr.mxu0 0.0
    %1925 = vmatpush1.msra.mxu0 0.0
    %1926 = vmatprep.subr.mxu0 0.0
    %1927 = vmatpush1.msra.mxu0 0.0
    %1928 = vmatprep.subr.mxu0 0.0
    %1929 = vmatpush1.msra.mxu0 0.0
    %1930 = vmatprep.subr.mxu0 0.0
    %1931 = vmatpush1.msra.mxu0 0.0
    %1932 = vmatprep.subr.mxu0 0.0
    %1933 = vmatpush1.msra.mxu0 0.0
    %1934 = vmatprep.subr.mxu0 0.0
    %1935 = vmatpush1.msra.mxu0 0.0
    %1936 = vmatprep.subr.mxu0 0.0
    %1937 = vmatpush1.msra.mxu0 0.0
    %1938 = vmatprep.subr.mxu0 0.0
    %1939 = vmatpush1.msra.mxu0 0.0
    %1940 = vmatprep.subr.mxu0 0.0
    %1941 = vmatpush1.msra.mxu0 0.0
    %1942 = vmatprep.subr.mxu0 0.0
    %1943 = vmatpush1.msra.mxu0 0.0
    %1944 = vmatprep.subr.mxu0 0.0
    %1945 = vmatpush1.msra.mxu0 0.0
    %1946 = vmatprep.subr.mxu0 0.0
    %1947 = vmatpush1.msra.mxu0 0.0
    %1948 = vmatprep.subr.mxu0 0.0
    %1949 = vmatpush1.msra.mxu0 0.0
    %1950 = vmatprep.subr.mxu0 0.0
    %1951 = vmatpush1.msra.mxu0 0.0
    %1952 = vmatprep.subr.mxu0 0.0
    %1953 = vmatpush1.msra.mxu0 0.0
    %1954 = vmatprep.subr.mxu0 0.0
    %1955 = vmatpush1.msra.mxu0 0.0
    %1956 = vmatprep.subr.mxu0 0.0
    %1957 = vmatpush1.msra.mxu0 0.0
    %1958 = vmatprep.subr.mxu0 0.0
    %1959 = vmatpush1.msra.mxu0 0.0
    %1960 = vmatprep.subr.mxu0 0.0
    %1961 = vmatpush1.msra.mxu0 0.0
    %1962 = vmatprep.subr.mxu0 0.0
    %1963 = vmatpush1.msra.mxu0 0.0
    %1964 = vmatprep.subr.mxu0 0.0
    %1965 = vmatpush1.msra.mxu0 0.0
    %1966 = vmatprep.subr.mxu0 0.0
    %1967 = vmatpush1.msra.mxu0 0.0
    %1968 = vmatprep.subr.mxu0 0.0
    %1969 = vmatpush1.msra.mxu0 0.0
    %1970 = vmatprep.subr.mxu0 0.0
    %1971 = vmatpush1.msra.mxu0 0.0
    %1972 = vmatprep.subr.mxu0 0.0
    %1973 = vmatpush1.msra.mxu0 0.0
    %1974 = vmatprep.mubr.f32.mxu0 0.0
    %1975 = vmatmul.mubr.f32.gmra.mrb[0].mxu0 %v1424
    %v1976 = vpop.f32.mrb[0].mxu0
    %v1977 = vadd.f32 0.0, %v1976
    %v1978 = vpop.f32.mrb[0].mxu0
    %1979 = vmatprep.mubr.f32.mxu0 0.0
    %1980 = vmatmul.mubr.f32.gmra.mrb[0].mxu0 %v1427
    %v1981 = vpop.f32.mrb[0].mxu0
    %v1982 = vadd.f32 0.0, %v1981
    %v1983 = vpop.f32.mrb[0].mxu0
    %1984 = vdwg.mxu0
    %v1985 = vpack.c.bf16 %v1907, %v1902
    %v1986 = vld [vmem:[#allocation11] sm:$0xf]
    %v1987 = vld [vmem:[#allocation11 + $0x4] sm:$0xf]
    %v1988 = vld [vmem:[#allocation11 + $0x8] sm:$0xf]
    %v1989 = vld [vmem:[#allocation11 + $0xc] sm:$0xf]
    %v1990 = vld [vmem:[#allocation11 + $0x10] sm:$0xf]
    %v1991 = vld [vmem:[#allocation11 + $0x14] sm:$0xf]
    %v1992 = vld [vmem:[#allocation11 + $0x18] sm:$0xf]
    %v1993 = vld [vmem:[#allocation11 + $0x1c] sm:$0xf]
    %v1994 = vld [vmem:[#allocation11 + $0x20] sm:$0xf]
    %v1995 = vld [vmem:[#allocation11 + $0x24] sm:$0xf]
    %v1996 = vld [vmem:[#allocation11 + $0x28] sm:$0xf]
    %v1997 = vld [vmem:[#allocation11 + $0x2c] sm:$0xf]
    %v1998 = vld [vmem:[#allocation11 + $0x30] sm:$0xf]
    %v1999 = vld [vmem:[#allocation11 + $0x34] sm:$0xf]
    %v2000 = vld [vmem:[#allocation11 + $0x38] sm:$0xf]
    %v2001 = vld [vmem:[#allocation11 + $0x3c] sm:$0xf]
    %v2002 = vpack.c.bf16 %v1833, %v1832
    %s2003 = scalar_lea.vmem [#allocation11], 64
    %v2004 = vld [vmem:[%s2003] sm:$0xf]
    %v2005 = vld [vmem:[%s2003 + $0x4] sm:$0xf]
    %v2006 = vld [vmem:[%s2003 + $0x8] sm:$0xf]
    %v2007 = vld [vmem:[%s2003 + $0xc] sm:$0xf]
    %v2008 = vld [vmem:[%s2003 + $0x10] sm:$0xf]
    %v2009 = vld [vmem:[%s2003 + $0x14] sm:$0xf]
    %v2010 = vld [vmem:[%s2003 + $0x18] sm:$0xf]
    %v2011 = vld [vmem:[%s2003 + $0x1c] sm:$0xf]
    %v2012 = vld [vmem:[%s2003 + $0x20] sm:$0xf]
    %v2013 = vld [vmem:[%s2003 + $0x24] sm:$0xf]
    %v2014 = vld [vmem:[%s2003 + $0x28] sm:$0xf]
    %v2015 = vld [vmem:[%s2003 + $0x2c] sm:$0xf]
    %v2016 = vld [vmem:[%s2003 + $0x30] sm:$0xf]
    %v2017 = vld [vmem:[%s2003 + $0x34] sm:$0xf]
    %v2018 = vld [vmem:[%s2003 + $0x38] sm:$0xf]
    %v2019 = vld [vmem:[%s2003 + $0x3c] sm:$0xf]
    %v2036 = vunpack.c.l.b16 %v2004
    %v2037 = vunpack.c.l.b16 %v2005
    %v2038 = vunpack.c.l.b16 %v2006
    %v2039 = vunpack.c.l.b16 %v2007
    %v2040 = vunpack.c.l.b16 %v2008
    %v2041 = vunpack.c.l.b16 %v2009
    %v2042 = vunpack.c.l.b16 %v2010
    %v2043 = vunpack.c.l.b16 %v2011
    %v2044 = vunpack.c.l.b16 %v2012
    %v2045 = vunpack.c.l.b16 %v2013
    %v2046 = vunpack.c.l.b16 %v2014
    %v2047 = vunpack.c.l.b16 %v2015
    %v2048 = vunpack.c.l.b16 %v2016
    %v2049 = vunpack.c.l.b16 %v2017
    %v2050 = vunpack.c.l.b16 %v2018
    %v2051 = vunpack.c.l.b16 %v2019
    %v2052 = vpack.c.b16 %v2037, %v2036
    %v2053 = vpack.c.b16 %v2039, %v2038
    %v2054 = vpack.c.b16 %v2041, %v2040
    %v2055 = vpack.c.b16 %v2043, %v2042
    %v2056 = vpack.c.b16 %v2045, %v2044
    %v2057 = vpack.c.b16 %v2047, %v2046
    %v2058 = vpack.c.b16 %v2049, %v2048
    %v2059 = vpack.c.b16 %v2051, %v2050
    %2068 = vmatprep.subr.bf16.mxu0 0
    %2069 = vmatpush1.bf16.msra.mxu0 %v2052
    %2070 = vmatprep.subr.bf16.mxu0 0
    %2071 = vmatpush1.bf16.msra.mxu0 %v2053
    %2072 = vmatprep.subr.bf16.mxu0 0
    %2073 = vmatpush1.bf16.msra.mxu0 %v2054
    %2074 = vmatprep.subr.bf16.mxu0 0
    %2075 = vmatpush1.bf16.msra.mxu0 %v2055
    %2076 = vmatprep.subr.bf16.mxu0 0
    %2077 = vmatpush1.bf16.msra.mxu0 %v2056
    %2078 = vmatprep.subr.bf16.mxu0 0
    %2079 = vmatpush1.bf16.msra.mxu0 %v2057
    %2080 = vmatprep.subr.bf16.mxu0 0
    %2081 = vmatpush1.bf16.msra.mxu0 %v2058
    %2082 = vmatprep.subr.bf16.mxu0 0
    %2083 = vmatpush1.bf16.msra.mxu0 %v2059
    %2084 = vmatprep.subr.bf16.mxu0 0
    %2085 = vmatpush1.bf16.msra.mxu0 0
    %2086 = vmatprep.subr.bf16.mxu0 0
    %2087 = vmatpush1.bf16.msra.mxu0 0
    %2088 = vmatprep.subr.bf16.mxu0 0
    %2089 = vmatpush1.bf16.msra.mxu0 0
    %2090 = vmatprep.subr.bf16.mxu0 0
    %2091 = vmatpush1.bf16.msra.mxu0 0
    %2092 = vmatprep.subr.bf16.mxu0 0
    %2093 = vmatpush1.bf16.msra.mxu0 0
    %2094 = vmatprep.subr.bf16.mxu0 0
    %2095 = vmatpush1.bf16.msra.mxu0 0
    %2096 = vmatprep.subr.bf16.mxu0 0
    %2097 = vmatpush1.bf16.msra.mxu0 0
    %2098 = vmatprep.subr.bf16.mxu0 0
    %2099 = vmatpush1.bf16.msra.mxu0 0
    %2100 = vmatprep.mubr.bf16.mxu0 0
    %2101 = vmatmul.mubr.bf16.gmra.mrb[0].mxu0 %v2002
    %v2102 = vpop.f32.mrb[0].mxu0
    %v2103 = vadd.f32 0.0, %v2102
    %v2104 = vpop.f32.mrb[0].mxu0
    %v2105 = vpop.f32.mrb[0].mxu0
    %v2106 = vadd.f32 0.0, %v2105
    %v2107 = vpop.f32.mrb[0].mxu0
    %2108 = vdwg.mxu0
    %v2125 = vunpack.c.l.b16 %v1986
    %v2126 = vunpack.c.l.b16 %v1987
    %v2127 = vunpack.c.l.b16 %v1988
    %v2128 = vunpack.c.l.b16 %v1989
    %v2129 = vunpack.c.l.b16 %v1990
    %v2130 = vunpack.c.l.b16 %v1991
    %v2131 = vunpack.c.l.b16 %v1992
    %v2132 = vunpack.c.l.b16 %v1993
    %v2133 = vunpack.c.l.b16 %v1994
    %v2134 = vunpack.c.l.b16 %v1995
    %v2135 = vunpack.c.l.b16 %v1996
    %v2136 = vunpack.c.l.b16 %v1997
    %v2137 = vunpack.c.l.b16 %v1998
    %v2138 = vunpack.c.l.b16 %v1999
    %v2139 = vunpack.c.l.b16 %v2000
    %v2140 = vunpack.c.l.b16 %v2001
    %v2141 = vpack.c.b16 %v2126, %v2125
    %v2142 = vpack.c.b16 %v2128, %v2127
    %v2143 = vpack.c.b16 %v2130, %v2129
    %v2144 = vpack.c.b16 %v2132, %v2131
    %v2145 = vpack.c.b16 %v2134, %v2133
    %v2146 = vpack.c.b16 %v2136, %v2135
    %v2147 = vpack.c.b16 %v2138, %v2137
    %v2148 = vpack.c.b16 %v2140, %v2139
    %2157 = vmatprep.subr.bf16.mxu0 0
    %2158 = vmatpush1.bf16.msra.mxu0 %v2141
    %2159 = vmatprep.subr.bf16.mxu0 0
    %2160 = vmatpush1.bf16.msra.mxu0 %v2142
    %2161 = vmatprep.subr.bf16.mxu0 0
    %2162 = vmatpush1.bf16.msra.mxu0 %v2143
    %2163 = vmatprep.subr.bf16.mxu0 0
    %2164 = vmatpush1.bf16.msra.mxu0 %v2144
    %2165 = vmatprep.subr.bf16.mxu0 0
    %2166 = vmatpush1.bf16.msra.mxu0 %v2145
    %2167 = vmatprep.subr.bf16.mxu0 0
    %2168 = vmatpush1.bf16.msra.mxu0 %v2146
    %2169 = vmatprep.subr.bf16.mxu0 0
    %2170 = vmatpush1.bf16.msra.mxu0 %v2147
    %2171 = vmatprep.subr.bf16.mxu0 0
    %2172 = vmatpush1.bf16.msra.mxu0 %v2148
    %2173 = vmatprep.subr.bf16.mxu0 0
    %2174 = vmatpush1.bf16.msra.mxu0 0
    %2175 = vmatprep.subr.bf16.mxu0 0
    %2176 = vmatpush1.bf16.msra.mxu0 0
    %2177 = vmatprep.subr.bf16.mxu0 0
    %2178 = vmatpush1.bf16.msra.mxu0 0
    %2179 = vmatprep.subr.bf16.mxu0 0
    %2180 = vmatpush1.bf16.msra.mxu0 0
    %2181 = vmatprep.subr.bf16.mxu0 0
    %2182 = vmatpush1.bf16.msra.mxu0 0
    %2183 = vmatprep.subr.bf16.mxu0 0
    %2184 = vmatpush1.bf16.msra.mxu0 0
    %2185 = vmatprep.subr.bf16.mxu0 0
    %2186 = vmatpush1.bf16.msra.mxu0 0
    %2187 = vmatprep.subr.bf16.mxu0 0
    %2188 = vmatpush1.bf16.msra.mxu0 0
    %2189 = vmatprep.mubr.bf16.mxu0 0
    %2190 = vmatmul.mubr.bf16.gmra.mrb[0].mxu0 %v1985
    %v2191 = vpop.f32.mrb[0].mxu0
    %v2192 = vadd.f32 %v2103, %v2191
    %v2193 = vpop.f32.mrb[0].mxu0
    %v2194 = vpop.f32.mrb[0].mxu0
    %v2195 = vadd.f32 %v2106, %v2194
    %v2196 = vpop.f32.mrb[0].mxu0
    %2197 = vdwg.mxu0
    %v2198 = vpack.c.bf16 %v1982, %v1977
    %s2199 = scalar_lea.vmem [#allocation11], 128
    %v2200 = vld [vmem:[%s2199] sm:$0xf]
    %v2201 = vld [vmem:[%s2199 + $0x4] sm:$0xf]
    %v2202 = vld [vmem:[%s2199 + $0x8] sm:$0xf]
    %v2203 = vld [vmem:[%s2199 + $0xc] sm:$0xf]
    %v2204 = vld [vmem:[%s2199 + $0x10] sm:$0xf]
    %v2205 = vld [vmem:[%s2199 + $0x14] sm:$0xf]
    %v2206 = vld [vmem:[%s2199 + $0x18] sm:$0xf]
    %v2207 = vld [vmem:[%s2199 + $0x1c] sm:$0xf]
    %v2208 = vld [vmem:[%s2199 + $0x20] sm:$0xf]
    %v2209 = vld [vmem:[%s2199 + $0x24] sm:$0xf]
    %v2210 = vld [vmem:[%s2199 + $0x28] sm:$0xf]
    %v2211 = vld [vmem:[%s2199 + $0x2c] sm:$0xf]
    %v2212 = vld [vmem:[%s2199 + $0x30] sm:$0xf]
    %v2213 = vld [vmem:[%s2199 + $0x34] sm:$0xf]
    %v2214 = vld [vmem:[%s2199 + $0x38] sm:$0xf]
    %v2215 = vld [vmem:[%s2199 + $0x3c] sm:$0xf]
    %v2232 = vunpack.c.l.b16 %v2200
    %v2233 = vunpack.c.l.b16 %v2201
    %v2234 = vunpack.c.l.b16 %v2202
    %v2235 = vunpack.c.l.b16 %v2203
    %v2236 = vunpack.c.l.b16 %v2204
    %v2237 = vunpack.c.l.b16 %v2205
    %v2238 = vunpack.c.l.b16 %v2206
    %v2239 = vunpack.c.l.b16 %v2207
    %v2240 = vunpack.c.l.b16 %v2208
    %v2241 = vunpack.c.l.b16 %v2209
    %v2242 = vunpack.c.l.b16 %v2210
    %v2243 = vunpack.c.l.b16 %v2211
    %v2244 = vunpack.c.l.b16 %v2212
    %v2245 = vunpack.c.l.b16 %v2213
    %v2246 = vunpack.c.l.b16 %v2214
    %v2247 = vunpack.c.l.b16 %v2215
    %v2248 = vpack.c.b16 %v2233, %v2232
    %v2249 = vpack.c.b16 %v2235, %v2234
    %v2250 = vpack.c.b16 %v2237, %v2236
    %v2251 = vpack.c.b16 %v2239, %v2238
    %v2252 = vpack.c.b16 %v2241, %v2240
    %v2253 = vpack.c.b16 %v2243, %v2242
    %v2254 = vpack.c.b16 %v2245, %v2244
    %v2255 = vpack.c.b16 %v2247, %v2246
    %2264 = vmatprep.subr.bf16.mxu0 0
    %2265 = vmatpush1.bf16.msra.mxu0 %v2248
    %2266 = vmatprep.subr.bf16.mxu0 0
    %2267 = vmatpush1.bf16.msra.mxu0 %v2249
    %2268 = vmatprep.subr.bf16.mxu0 0
    %2269 = vmatpush1.bf16.msra.mxu0 %v2250
    %2270 = vmatprep.subr.bf16.mxu0 0
    %2271 = vmatpush1.bf16.msra.mxu0 %v2251
    %2272 = vmatprep.subr.bf16.mxu0 0
    %2273 = vmatpush1.bf16.msra.mxu0 %v2252
    %2274 = vmatprep.subr.bf16.mxu0 0
    %2275 = vmatpush1.bf16.msra.mxu0 %v2253
    %2276 = vmatprep.subr.bf16.mxu0 0
    %2277 = vmatpush1.bf16.msra.mxu0 %v2254
    %2278 = vmatprep.subr.bf16.mxu0 0
    %2279 = vmatpush1.bf16.msra.mxu0 %v2255
    %2280 = vmatprep.subr.bf16.mxu0 0
    %2281 = vmatpush1.bf16.msra.mxu0 0
    %2282 = vmatprep.subr.bf16.mxu0 0
    %2283 = vmatpush1.bf16.msra.mxu0 0
    %2284 = vmatprep.subr.bf16.mxu0 0
    %2285 = vmatpush1.bf16.msra.mxu0 0
    %2286 = vmatprep.subr.bf16.mxu0 0
    %2287 = vmatpush1.bf16.msra.mxu0 0
    %2288 = vmatprep.subr.bf16.mxu0 0
    %2289 = vmatpush1.bf16.msra.mxu0 0
    %2290 = vmatprep.subr.bf16.mxu0 0
    %2291 = vmatpush1.bf16.msra.mxu0 0
    %2292 = vmatprep.subr.bf16.mxu0 0
    %2293 = vmatpush1.bf16.msra.mxu0 0
    %2294 = vmatprep.subr.bf16.mxu0 0
    %2295 = vmatpush1.bf16.msra.mxu0 0
    %2296 = vmatprep.mubr.bf16.mxu0 0
    %2297 = vmatmul.mubr.bf16.gmra.mrb[0].mxu0 %v2198
    %v2298 = vpop.f32.mrb[0].mxu0
    %v2299 = vadd.f32 0.0, %v2298
    %v2300 = vpop.f32.mrb[0].mxu0
    %v2301 = vpop.f32.mrb[0].mxu0
    %v2302 = vadd.f32 0.0, %v2301
    %v2303 = vpop.f32.mrb[0].mxu0
    %2304 = vdwg.mxu0
    %v2305 = vadd.f32 %v2192, %v2299
    %v2306 = vadd.f32 %v2195, %v2302
    %v2307 = vlaneseq
    %v2308 = vshrl.u32 %v2307, 7
    %v2309 = vsub.s32 0, %v2308
    %v2310 = vrot.slane %v1834, %v2309
    %v2311 = vadd.f32 %v2305, %v2310
    %v2312 = vadd.f32 %v2306, %v2310
    %v2313 = vadd.f32 %v2311, %v227
    %v2314 = vadd.f32 %v2312, %v228
    %v2315 = vmax.f32 %v2313, 0.0
    %v2316 = vmax.f32 %v2314, 0.0
    %v2317 = vld [vmem:[#allocation22 + $0x4] sm:$0x1]
    %v2318 = vld [vmem:[#allocation19] sm:$0xff]
    %v2319 = vld [vmem:[#allocation19 + $0x8] sm:$0xff]
    %v2321 = vsel %vm244, %v2318, 0
    %v2324 = vsel %vm244, %v2319, 0
    %2326 = vmatprep.subr.mxu0 0.0
    %2327 = vmatpush1.msra.mxu0 %v1336
    %2328 = vmatprep.subr.mxu0 0.0
    %2329 = vmatpush1.msra.mxu0 %v1337
    %2330 = vmatprep.subr.mxu0 0.0
    %2331 = vmatpush1.msra.mxu0 %v1338
    %2332 = vmatprep.subr.mxu0 0.0
    %2333 = vmatpush1.msra.mxu0 %v1339
    %2334 = vmatprep.subr.mxu0 0.0
    %2335 = vmatpush1.msra.mxu0 0.0
    %2336 = vmatprep.subr.mxu0 0.0
    %2337 = vmatpush1.msra.mxu0 0.0
    %2338 = vmatprep.subr.mxu0 0.0
    %2339 = vmatpush1.msra.mxu0 0.0
    %2340 = vmatprep.subr.mxu0 0.0
    %2341 = vmatpush1.msra.mxu0 0.0
    %2342 = vmatprep.subr.mxu0 0.0
    %2343 = vmatpush1.msra.mxu0 0.0
    %2344 = vmatprep.subr.mxu0 0.0
    %2345 = vmatpush1.msra.mxu0 0.0
    %2346 = vmatprep.subr.mxu0 0.0
    %2347 = vmatpush1.msra.mxu0 0.0
    %2348 = vmatprep.subr.mxu0 0.0
    %2349 = vmatpush1.msra.mxu0 0.0
    %2350 = vmatprep.subr.mxu0 0.0
    %2351 = vmatpush1.msra.mxu0 0.0
    %2352 = vmatprep.subr.mxu0 0.0
    %2353 = vmatpush1.msra.mxu0 0.0
    %2354 = vmatprep.subr.mxu0 0.0
    %2355 = vmatpush1.msra.mxu0 0.0
    %2356 = vmatprep.subr.mxu0 0.0
    %2357 = vmatpush1.msra.mxu0 0.0
    %2358 = vmatprep.subr.mxu0 0.0
    %2359 = vmatpush1.msra.mxu0 0.0
    %2360 = vmatprep.subr.mxu0 0.0
    %2361 = vmatpush1.msra.mxu0 0.0
    %2362 = vmatprep.subr.mxu0 0.0
    %2363 = vmatpush1.msra.mxu0 0.0
    %2364 = vmatprep.subr.mxu0 0.0
    %2365 = vmatpush1.msra.mxu0 0.0
    %2366 = vmatprep.subr.mxu0 0.0
    %2367 = vmatpush1.msra.mxu0 0.0
    %2368 = vmatprep.subr.mxu0 0.0
    %2369 = vmatpush1.msra.mxu0 0.0
    %2370 = vmatprep.subr.mxu0 0.0
    %2371 = vmatpush1.msra.mxu0 0.0
    %2372 = vmatprep.subr.mxu0 0.0
    %2373 = vmatpush1.msra.mxu0 0.0
    %2374 = vmatprep.subr.mxu0 0.0
    %2375 = vmatpush1.msra.mxu0 0.0
    %2376 = vmatprep.subr.mxu0 0.0
    %2377 = vmatpush1.msra.mxu0 0.0
    %2378 = vmatprep.subr.mxu0 0.0
    %2379 = vmatpush1.msra.mxu0 0.0
    %2380 = vmatprep.subr.mxu0 0.0
    %2381 = vmatpush1.msra.mxu0 0.0
    %2382 = vmatprep.subr.mxu0 0.0
    %2383 = vmatpush1.msra.mxu0 0.0
    %2384 = vmatprep.subr.mxu0 0.0
    %2385 = vmatpush1.msra.mxu0 0.0
    %2386 = vmatprep.subr.mxu0 0.0
    %2387 = vmatpush1.msra.mxu0 0.0
    %2388 = vmatprep.subr.mxu0 0.0
    %2389 = vmatpush1.msra.mxu0 0.0
    %2390 = vmatprep.mubr.f32.mxu0 0.0
    %2391 = vmatmul.mubr.f32.gmra.mrb[0].mxu0 %v2321
    %v2392 = vpop.f32.mrb[0].mxu0
    %v2393 = vadd.f32 0.0, %v2392
    %v2394 = vpop.f32.mrb[0].mxu0
    %2395 = vmatprep.mubr.f32.mxu0 0.0
    %2396 = vmatmul.mubr.f32.gmra.mrb[0].mxu0 %v2324
    %v2397 = vpop.f32.mrb[0].mxu0
    %v2398 = vadd.f32 0.0, %v2397
    %v2399 = vpop.f32.mrb[0].mxu0
    %2400 = vdwg.mxu0
    %v2401 = vpack.c.bf16 %v2398, %v2393
    %v2402 = vld [vmem:[#allocation13] sm:$0xf]
    %v2403 = vld [vmem:[#allocation13 + $0x4] sm:$0xf]
    %v2404 = vld [vmem:[#allocation13 + $0x8] sm:$0xf]
    %v2405 = vld [vmem:[#allocation13 + $0xc] sm:$0xf]
    %v2406 = vld [vmem:[#allocation13 + $0x10] sm:$0xf]
    %v2407 = vld [vmem:[#allocation13 + $0x14] sm:$0xf]
    %v2408 = vld [vmem:[#allocation13 + $0x18] sm:$0xf]
    %v2409 = vld [vmem:[#allocation13 + $0x1c] sm:$0xf]
    %v2410 = vld [vmem:[#allocation13 + $0x20] sm:$0xf]
    %v2411 = vld [vmem:[#allocation13 + $0x24] sm:$0xf]
    %v2412 = vld [vmem:[#allocation13 + $0x28] sm:$0xf]
    %v2413 = vld [vmem:[#allocation13 + $0x2c] sm:$0xf]
    %v2414 = vld [vmem:[#allocation13 + $0x30] sm:$0xf]
    %v2415 = vld [vmem:[#allocation13 + $0x34] sm:$0xf]
    %v2416 = vld [vmem:[#allocation13 + $0x38] sm:$0xf]
    %v2417 = vld [vmem:[#allocation13 + $0x3c] sm:$0xf]
    %v2434 = vunpack.c.l.b16 %v2402
    %v2435 = vunpack.c.l.b16 %v2403
    %v2436 = vunpack.c.l.b16 %v2404
    %v2437 = vunpack.c.l.b16 %v2405
    %v2438 = vunpack.c.l.b16 %v2406
    %v2439 = vunpack.c.l.b16 %v2407
    %v2440 = vunpack.c.l.b16 %v2408
    %v2441 = vunpack.c.l.b16 %v2409
    %v2442 = vunpack.c.l.b16 %v2410
    %v2443 = vunpack.c.l.b16 %v2411
    %v2444 = vunpack.c.l.b16 %v2412
    %v2445 = vunpack.c.l.b16 %v2413
    %v2446 = vunpack.c.l.b16 %v2414
    %v2447 = vunpack.c.l.b16 %v2415
    %v2448 = vunpack.c.l.b16 %v2416
    %v2449 = vunpack.c.l.b16 %v2417
    %v2450 = vpack.c.b16 %v2435, %v2434
    %v2451 = vpack.c.b16 %v2437, %v2436
    %v2452 = vpack.c.b16 %v2439, %v2438
    %v2453 = vpack.c.b16 %v2441, %v2440
    %v2454 = vpack.c.b16 %v2443, %v2442
    %v2455 = vpack.c.b16 %v2445, %v2444
    %v2456 = vpack.c.b16 %v2447, %v2446
    %v2457 = vpack.c.b16 %v2449, %v2448
    %2466 = vmatprep.subr.bf16.mxu0 0
    %2467 = vmatpush1.bf16.msra.mxu0 %v2450
    %2468 = vmatprep.subr.bf16.mxu0 0
    %2469 = vmatpush1.bf16.msra.mxu0 %v2451
    %2470 = vmatprep.subr.bf16.mxu0 0
    %2471 = vmatpush1.bf16.msra.mxu0 %v2452
    %2472 = vmatprep.subr.bf16.mxu0 0
    %2473 = vmatpush1.bf16.msra.mxu0 %v2453
    %2474 = vmatprep.subr.bf16.mxu0 0
    %2475 = vmatpush1.bf16.msra.mxu0 %v2454
    %2476 = vmatprep.subr.bf16.mxu0 0
    %2477 = vmatpush1.bf16.msra.mxu0 %v2455
    %2478 = vmatprep.subr.bf16.mxu0 0
    %2479 = vmatpush1.bf16.msra.mxu0 %v2456
    %2480 = vmatprep.subr.bf16.mxu0 0
    %2481 = vmatpush1.bf16.msra.mxu0 %v2457
    %2482 = vmatprep.subr.bf16.mxu0 0
    %2483 = vmatpush1.bf16.msra.mxu0 0
    %2484 = vmatprep.subr.bf16.mxu0 0
    %2485 = vmatpush1.bf16.msra.mxu0 0
    %2486 = vmatprep.subr.bf16.mxu0 0
    %2487 = vmatpush1.bf16.msra.mxu0 0
    %2488 = vmatprep.subr.bf16.mxu0 0
    %2489 = vmatpush1.bf16.msra.mxu0 0
    %2490 = vmatprep.subr.bf16.mxu0 0
    %2491 = vmatpush1.bf16.msra.mxu0 0
    %2492 = vmatprep.subr.bf16.mxu0 0
    %2493 = vmatpush1.bf16.msra.mxu0 0
    %2494 = vmatprep.subr.bf16.mxu0 0
    %2495 = vmatpush1.bf16.msra.mxu0 0
    %2496 = vmatprep.subr.bf16.mxu0 0
    %2497 = vmatpush1.bf16.msra.mxu0 0
    %2498 = vmatprep.mubr.bf16.mxu0 0
    %2499 = vmatmul.mubr.bf16.gmra.mrb[0].mxu0 %v2401
    %v2500 = vpop.f32.mrb[0].mxu0
    %v2501 = vadd.f32 0.0, %v2500
    %v2502 = vpop.f32.mrb[0].mxu0
    %v2503 = vpop.f32.mrb[0].mxu0
    %v2504 = vadd.f32 0.0, %v2503
    %v2505 = vpop.f32.mrb[0].mxu0
    %2506 = vdwg.mxu0
    %v2507 = vlaneseq
    %v2508 = vshrl.u32 %v2507, 7
    %v2509 = vsub.s32 0, %v2508
    %v2510 = vrot.slane %v2317, %v2509
    %v2511 = vadd.f32 %v2510, %v2501
    %v2512 = vadd.f32 %v2510, %v2504
    %s2513 = scalar_lea.vmem [#allocation19], 16
    %v2514 = vld [vmem:[%s2513] sm:$0xff]
    %v2515 = vld [vmem:[%s2513 + $0x8] sm:$0xff]
    %v2517 = vsel %vm244, %v2514, 0
    %v2520 = vsel %vm244, %v2515, 0
    %2522 = vmatprep.subr.mxu0 0.0
    %2523 = vmatpush1.msra.mxu0 %v1336
    %2524 = vmatprep.subr.mxu0 0.0
    %2525 = vmatpush1.msra.mxu0 %v1337
    %2526 = vmatprep.subr.mxu0 0.0
    %2527 = vmatpush1.msra.mxu0 %v1338
    %2528 = vmatprep.subr.mxu0 0.0
    %2529 = vmatpush1.msra.mxu0 %v1339
    %2530 = vmatprep.subr.mxu0 0.0
    %2531 = vmatpush1.msra.mxu0 0.0
    %2532 = vmatprep.subr.mxu0 0.0
    %2533 = vmatpush1.msra.mxu0 0.0
    %2534 = vmatprep.subr.mxu0 0.0
    %2535 = vmatpush1.msra.mxu0 0.0
    %2536 = vmatprep.subr.mxu0 0.0
    %2537 = vmatpush1.msra.mxu0 0.0
    %2538 = vmatprep.subr.mxu0 0.0
    %2539 = vmatpush1.msra.mxu0 0.0
    %2540 = vmatprep.subr.mxu0 0.0
    %2541 = vmatpush1.msra.mxu0 0.0
    %2542 = vmatprep.subr.mxu0 0.0
    %2543 = vmatpush1.msra.mxu0 0.0
    %2544 = vmatprep.subr.mxu0 0.0
    %2545 = vmatpush1.msra.mxu0 0.0
    %2546 = vmatprep.subr.mxu0 0.0
    %2547 = vmatpush1.msra.mxu0 0.0
    %2548 = vmatprep.subr.mxu0 0.0
    %2549 = vmatpush1.msra.mxu0 0.0
    %2550 = vmatprep.subr.mxu0 0.0
    %2551 = vmatpush1.msra.mxu0 0.0
    %2552 = vmatprep.subr.mxu0 0.0
    %2553 = vmatpush1.msra.mxu0 0.0
    %2554 = vmatprep.subr.mxu0 0.0
    %2555 = vmatpush1.msra.mxu0 0.0
    %2556 = vmatprep.subr.mxu0 0.0
    %2557 = vmatpush1.msra.mxu0 0.0
    %2558 = vmatprep.subr.mxu0 0.0
    %2559 = vmatpush1.msra.mxu0 0.0
    %2560 = vmatprep.subr.mxu0 0.0
    %2561 = vmatpush1.msra.mxu0 0.0
    %2562 = vmatprep.subr.mxu0 0.0
    %2563 = vmatpush1.msra.mxu0 0.0
    %2564 = vmatprep.subr.mxu0 0.0
    %2565 = vmatpush1.msra.mxu0 0.0
    %2566 = vmatprep.subr.mxu0 0.0
    %2567 = vmatpush1.msra.mxu0 0.0
    %2568 = vmatprep.subr.mxu0 0.0
    %2569 = vmatpush1.msra.mxu0 0.0
    %2570 = vmatprep.subr.mxu0 0.0
    %2571 = vmatpush1.msra.mxu0 0.0
    %2572 = vmatprep.subr.mxu0 0.0
    %2573 = vmatpush1.msra.mxu0 0.0
    %2574 = vmatprep.subr.mxu0 0.0
    %2575 = vmatpush1.msra.mxu0 0.0
    %2576 = vmatprep.subr.mxu0 0.0
    %2577 = vmatpush1.msra.mxu0 0.0
    %2578 = vmatprep.subr.mxu0 0.0
    %2579 = vmatpush1.msra.mxu0 0.0
    %2580 = vmatprep.subr.mxu0 0.0
    %2581 = vmatpush1.msra.mxu0 0.0
    %2582 = vmatprep.subr.mxu0 0.0
    %2583 = vmatpush1.msra.mxu0 0.0
    %2584 = vmatprep.subr.mxu0 0.0
    %2585 = vmatpush1.msra.mxu0 0.0
    %2586 = vmatprep.mubr.f32.mxu0 0.0
    %2587 = vmatmul.mubr.f32.gmra.mrb[0].mxu0 %v2517
    %v2588 = vpop.f32.mrb[0].mxu0
    %v2589 = vadd.f32 0.0, %v2588
    %v2590 = vpop.f32.mrb[0].mxu0
    %2591 = vmatprep.mubr.f32.mxu0 0.0
    %2592 = vmatmul.mubr.f32.gmra.mrb[0].mxu0 %v2520
    %v2593 = vpop.f32.mrb[0].mxu0
    %v2594 = vadd.f32 0.0, %v2593
    %v2595 = vpop.f32.mrb[0].mxu0
    %2596 = vdwg.mxu0
    %v2597 = vpack.c.bf16 %v2594, %v2589
    %s2598 = scalar_lea.vmem [#allocation13], 64
    %v2599 = vld [vmem:[%s2598] sm:$0xf]
    %v2600 = vld [vmem:[%s2598 + $0x4] sm:$0xf]
    %v2601 = vld [vmem:[%s2598 + $0x8] sm:$0xf]
    %v2602 = vld [vmem:[%s2598 + $0xc] sm:$0xf]
    %v2603 = vld [vmem:[%s2598 + $0x10] sm:$0xf]
    %v2604 = vld [vmem:[%s2598 + $0x14] sm:$0xf]
    %v2605 = vld [vmem:[%s2598 + $0x18] sm:$0xf]
    %v2606 = vld [vmem:[%s2598 + $0x1c] sm:$0xf]
    %v2607 = vld [vmem:[%s2598 + $0x20] sm:$0xf]
    %v2608 = vld [vmem:[%s2598 + $0x24] sm:$0xf]
    %v2609 = vld [vmem:[%s2598 + $0x28] sm:$0xf]
    %v2610 = vld [vmem:[%s2598 + $0x2c] sm:$0xf]
    %v2611 = vld [vmem:[%s2598 + $0x30] sm:$0xf]
    %v2612 = vld [vmem:[%s2598 + $0x34] sm:$0xf]
    %v2613 = vld [vmem:[%s2598 + $0x38] sm:$0xf]
    %v2614 = vld [vmem:[%s2598 + $0x3c] sm:$0xf]
    %v2631 = vunpack.c.l.b16 %v2599
    %v2632 = vunpack.c.l.b16 %v2600
    %v2633 = vunpack.c.l.b16 %v2601
    %v2634 = vunpack.c.l.b16 %v2602
    %v2635 = vunpack.c.l.b16 %v2603
    %v2636 = vunpack.c.l.b16 %v2604
    %v2637 = vunpack.c.l.b16 %v2605
    %v2638 = vunpack.c.l.b16 %v2606
    %v2639 = vunpack.c.l.b16 %v2607
    %v2640 = vunpack.c.l.b16 %v2608
    %v2641 = vunpack.c.l.b16 %v2609
    %v2642 = vunpack.c.l.b16 %v2610
    %v2643 = vunpack.c.l.b16 %v2611
    %v2644 = vunpack.c.l.b16 %v2612
    %v2645 = vunpack.c.l.b16 %v2613
    %v2646 = vunpack.c.l.b16 %v2614
    %v2647 = vpack.c.b16 %v2632, %v2631
    %v2648 = vpack.c.b16 %v2634, %v2633
    %v2649 = vpack.c.b16 %v2636, %v2635
    %v2650 = vpack.c.b16 %v2638, %v2637
    %v2651 = vpack.c.b16 %v2640, %v2639
    %v2652 = vpack.c.b16 %v2642, %v2641
    %v2653 = vpack.c.b16 %v2644, %v2643
    %v2654 = vpack.c.b16 %v2646, %v2645
    %2663 = vmatprep.subr.bf16.mxu0 0
    %2664 = vmatpush1.bf16.msra.mxu0 %v2647
    %2665 = vmatprep.subr.bf16.mxu0 0
    %2666 = vmatpush1.bf16.msra.mxu0 %v2648
    %2667 = vmatprep.subr.bf16.mxu0 0
    %2668 = vmatpush1.bf16.msra.mxu0 %v2649
    %2669 = vmatprep.subr.bf16.mxu0 0
    %2670 = vmatpush1.bf16.msra.mxu0 %v2650
    %2671 = vmatprep.subr.bf16.mxu0 0
    %2672 = vmatpush1.bf16.msra.mxu0 %v2651
    %2673 = vmatprep.subr.bf16.mxu0 0
    %2674 = vmatpush1.bf16.msra.mxu0 %v2652
    %2675 = vmatprep.subr.bf16.mxu0 0
    %2676 = vmatpush1.bf16.msra.mxu0 %v2653
    %2677 = vmatprep.subr.bf16.mxu0 0
    %2678 = vmatpush1.bf16.msra.mxu0 %v2654
    %2679 = vmatprep.subr.bf16.mxu0 0
    %2680 = vmatpush1.bf16.msra.mxu0 0
    %2681 = vmatprep.subr.bf16.mxu0 0
    %2682 = vmatpush1.bf16.msra.mxu0 0
    %2683 = vmatprep.subr.bf16.mxu0 0
    %2684 = vmatpush1.bf16.msra.mxu0 0
    %2685 = vmatprep.subr.bf16.mxu0 0
    %2686 = vmatpush1.bf16.msra.mxu0 0
    %2687 = vmatprep.subr.bf16.mxu0 0
    %2688 = vmatpush1.bf16.msra.mxu0 0
    %2689 = vmatprep.subr.bf16.mxu0 0
    %2690 = vmatpush1.bf16.msra.mxu0 0
    %2691 = vmatprep.subr.bf16.mxu0 0
    %2692 = vmatpush1.bf16.msra.mxu0 0
    %2693 = vmatprep.subr.bf16.mxu0 0
    %2694 = vmatpush1.bf16.msra.mxu0 0
    %2695 = vmatprep.mubr.bf16.mxu0 0
    %2696 = vmatmul.mubr.bf16.gmra.mrb[0].mxu0 %v2597
    %v2697 = vpop.f32.mrb[0].mxu0
    %v2698 = vadd.f32 0.0, %v2697
    %v2699 = vpop.f32.mrb[0].mxu0
    %v2700 = vpop.f32.mrb[0].mxu0
    %v2701 = vadd.f32 0.0, %v2700
    %v2702 = vpop.f32.mrb[0].mxu0
    %2703 = vdwg.mxu0
    %v2704 = vadd.f32 %v2511, %v2698
    %v2705 = vadd.f32 %v2512, %v2701
    %s2706 = scalar_lea.vmem [#allocation19], 32
    %v2707 = vld [vmem:[%s2706] sm:$0xff]
    %v2708 = vld [vmem:[%s2706 + $0x8] sm:$0xff]
    %v2710 = vsel %vm244, %v2707, 0
    %v2713 = vsel %vm244, %v2708, 0
    %2715 = vmatprep.subr.mxu0 0.0
    %2716 = vmatpush1.msra.mxu0 %v1336
    %2717 = vmatprep.subr.mxu0 0.0
    %2718 = vmatpush1.msra.mxu0 %v1337
    %2719 = vmatprep.subr.mxu0 0.0
    %2720 = vmatpush1.msra.mxu0 %v1338
    %2721 = vmatprep.subr.mxu0 0.0
    %2722 = vmatpush1.msra.mxu0 %v1339
    %2723 = vmatprep.subr.mxu0 0.0
    %2724 = vmatpush1.msra.mxu0 0.0
    %2725 = vmatprep.subr.mxu0 0.0
    %2726 = vmatpush1.msra.mxu0 0.0
    %2727 = vmatprep.subr.mxu0 0.0
    %2728 = vmatpush1.msra.mxu0 0.0
    %2729 = vmatprep.subr.mxu0 0.0
    %2730 = vmatpush1.msra.mxu0 0.0
    %2731 = vmatprep.subr.mxu0 0.0
    %2732 = vmatpush1.msra.mxu0 0.0
    %2733 = vmatprep.subr.mxu0 0.0
    %2734 = vmatpush1.msra.mxu0 0.0
    %2735 = vmatprep.subr.mxu0 0.0
    %2736 = vmatpush1.msra.mxu0 0.0
    %2737 = vmatprep.subr.mxu0 0.0
    %2738 = vmatpush1.msra.mxu0 0.0
    %2739 = vmatprep.subr.mxu0 0.0
    %2740 = vmatpush1.msra.mxu0 0.0
    %2741 = vmatprep.subr.mxu0 0.0
    %2742 = vmatpush1.msra.mxu0 0.0
    %2743 = vmatprep.subr.mxu0 0.0
    %2744 = vmatpush1.msra.mxu0 0.0
    %2745 = vmatprep.subr.mxu0 0.0
    %2746 = vmatpush1.msra.mxu0 0.0
    %2747 = vmatprep.subr.mxu0 0.0
    %2748 = vmatpush1.msra.mxu0 0.0
    %2749 = vmatprep.subr.mxu0 0.0
    %2750 = vmatpush1.msra.mxu0 0.0
    %2751 = vmatprep.subr.mxu0 0.0
    %2752 = vmatpush1.msra.mxu0 0.0
    %2753 = vmatprep.subr.mxu0 0.0
    %2754 = vmatpush1.msra.mxu0 0.0
    %2755 = vmatprep.subr.mxu0 0.0
    %2756 = vmatpush1.msra.mxu0 0.0
    %2757 = vmatprep.subr.mxu0 0.0
    %2758 = vmatpush1.msra.mxu0 0.0
    %2759 = vmatprep.subr.mxu0 0.0
    %2760 = vmatpush1.msra.mxu0 0.0
    %2761 = vmatprep.subr.mxu0 0.0
    %2762 = vmatpush1.msra.mxu0 0.0
    %2763 = vmatprep.subr.mxu0 0.0
    %2764 = vmatpush1.msra.mxu0 0.0
    %2765 = vmatprep.subr.mxu0 0.0
    %2766 = vmatpush1.msra.mxu0 0.0
    %2767 = vmatprep.subr.mxu0 0.0
    %2768 = vmatpush1.msra.mxu0 0.0
    %2769 = vmatprep.subr.mxu0 0.0
    %2770 = vmatpush1.msra.mxu0 0.0
    %2771 = vmatprep.subr.mxu0 0.0
    %2772 = vmatpush1.msra.mxu0 0.0
    %2773 = vmatprep.subr.mxu0 0.0
    %2774 = vmatpush1.msra.mxu0 0.0
    %2775 = vmatprep.subr.mxu0 0.0
    %2776 = vmatpush1.msra.mxu0 0.0
    %2777 = vmatprep.subr.mxu0 0.0
    %2778 = vmatpush1.msra.mxu0 0.0
    %2779 = vmatprep.mubr.f32.mxu0 0.0
    %2780 = vmatmul.mubr.f32.gmra.mrb[0].mxu0 %v2710
    %v2781 = vpop.f32.mrb[0].mxu0
    %v2782 = vadd.f32 0.0, %v2781
    %v2783 = vpop.f32.mrb[0].mxu0
    %2784 = vmatprep.mubr.f32.mxu0 0.0
    %2785 = vmatmul.mubr.f32.gmra.mrb[0].mxu0 %v2713
    %v2786 = vpop.f32.mrb[0].mxu0
    %v2787 = vadd.f32 0.0, %v2786
    %v2788 = vpop.f32.mrb[0].mxu0
    %2789 = vdwg.mxu0
    %v2790 = vpack.c.bf16 %v2787, %v2782
    %s2791 = scalar_lea.vmem [#allocation13], 128
    %v2792 = vld [vmem:[%s2791] sm:$0xf]
    %v2793 = vld [vmem:[%s2791 + $0x4] sm:$0xf]
    %v2794 = vld [vmem:[%s2791 + $0x8] sm:$0xf]
    %v2795 = vld [vmem:[%s2791 + $0xc] sm:$0xf]
    %v2796 = vld [vmem:[%s2791 + $0x10] sm:$0xf]
    %v2797 = vld [vmem:[%s2791 + $0x14] sm:$0xf]
    %v2798 = vld [vmem:[%s2791 + $0x18] sm:$0xf]
    %v2799 = vld [vmem:[%s2791 + $0x1c] sm:$0xf]
    %v2800 = vld [vmem:[%s2791 + $0x20] sm:$0xf]
    %v2801 = vld [vmem:[%s2791 + $0x24] sm:$0xf]
    %v2802 = vld [vmem:[%s2791 + $0x28] sm:$0xf]
    %v2803 = vld [vmem:[%s2791 + $0x2c] sm:$0xf]
    %v2804 = vld [vmem:[%s2791 + $0x30] sm:$0xf]
    %v2805 = vld [vmem:[%s2791 + $0x34] sm:$0xf]
    %v2806 = vld [vmem:[%s2791 + $0x38] sm:$0xf]
    %v2807 = vld [vmem:[%s2791 + $0x3c] sm:$0xf]
    %v2824 = vunpack.c.l.b16 %v2792
    %v2825 = vunpack.c.l.b16 %v2793
    %v2826 = vunpack.c.l.b16 %v2794
    %v2827 = vunpack.c.l.b16 %v2795
    %v2828 = vunpack.c.l.b16 %v2796
    %v2829 = vunpack.c.l.b16 %v2797
    %v2830 = vunpack.c.l.b16 %v2798
    %v2831 = vunpack.c.l.b16 %v2799
    %v2832 = vunpack.c.l.b16 %v2800
    %v2833 = vunpack.c.l.b16 %v2801
    %v2834 = vunpack.c.l.b16 %v2802
    %v2835 = vunpack.c.l.b16 %v2803
    %v2836 = vunpack.c.l.b16 %v2804
    %v2837 = vunpack.c.l.b16 %v2805
    %v2838 = vunpack.c.l.b16 %v2806
    %v2839 = vunpack.c.l.b16 %v2807
    %v2840 = vpack.c.b16 %v2825, %v2824
    %v2841 = vpack.c.b16 %v2827, %v2826
    %v2842 = vpack.c.b16 %v2829, %v2828
    %v2843 = vpack.c.b16 %v2831, %v2830
    %v2844 = vpack.c.b16 %v2833, %v2832
    %v2845 = vpack.c.b16 %v2835, %v2834
    %v2846 = vpack.c.b16 %v2837, %v2836
    %v2847 = vpack.c.b16 %v2839, %v2838
    %2856 = vmatprep.subr.bf16.mxu0 0
    %2857 = vmatpush1.bf16.msra.mxu0 %v2840
    %2858 = vmatprep.subr.bf16.mxu0 0
    %2859 = vmatpush1.bf16.msra.mxu0 %v2841
    %2860 = vmatprep.subr.bf16.mxu0 0
    %2861 = vmatpush1.bf16.msra.mxu0 %v2842
    %2862 = vmatprep.subr.bf16.mxu0 0
    %2863 = vmatpush1.bf16.msra.mxu0 %v2843
    %2864 = vmatprep.subr.bf16.mxu0 0
    %2865 = vmatpush1.bf16.msra.mxu0 %v2844
    %2866 = vmatprep.subr.bf16.mxu0 0
    %2867 = vmatpush1.bf16.msra.mxu0 %v2845
    %2868 = vmatprep.subr.bf16.mxu0 0
    %2869 = vmatpush1.bf16.msra.mxu0 %v2846
    %2870 = vmatprep.subr.bf16.mxu0 0
    %2871 = vmatpush1.bf16.msra.mxu0 %v2847
    %2872 = vmatprep.subr.bf16.mxu0 0
    %2873 = vmatpush1.bf16.msra.mxu0 0
    %2874 = vmatprep.subr.bf16.mxu0 0
    %2875 = vmatpush1.bf16.msra.mxu0 0
    %2876 = vmatprep.subr.bf16.mxu0 0
    %2877 = vmatpush1.bf16.msra.mxu0 0
    %2878 = vmatprep.subr.bf16.mxu0 0
    %2879 = vmatpush1.bf16.msra.mxu0 0
    %2880 = vmatprep.subr.bf16.mxu0 0
    %2881 = vmatpush1.bf16.msra.mxu0 0
    %2882 = vmatprep.subr.bf16.mxu0 0
    %2883 = vmatpush1.bf16.msra.mxu0 0
    %2884 = vmatprep.subr.bf16.mxu0 0
    %2885 = vmatpush1.bf16.msra.mxu0 0
    %2886 = vmatprep.subr.bf16.mxu0 0
    %2887 = vmatpush1.bf16.msra.mxu0 0
    %2888 = vmatprep.mubr.bf16.mxu0 0
    %2889 = vmatmul.mubr.bf16.gmra.mrb[0].mxu0 %v2790
    %v2890 = vpop.f32.mrb[0].mxu0
    %v2891 = vadd.f32 0.0, %v2890
    %v2892 = vpop.f32.mrb[0].mxu0
    %v2893 = vpop.f32.mrb[0].mxu0
    %v2894 = vadd.f32 0.0, %v2893
    %v2895 = vpop.f32.mrb[0].mxu0
    %2896 = vdwg.mxu0
    %v2897 = vadd.f32 %v2704, %v2891
    %v2898 = vadd.f32 %v2705, %v2894
    %v2899 = vadd.f32 %v2897, %v2315
    %v2900 = vadd.f32 %v2898, %v2316
    %v2901 = vmax.f32 %v2899, 0.0
    %v2902 = vmax.f32 %v2900, 0.0
    %2903 = vst [vmem:[#allocation24] sm:$0xff] %v2901
    %2904 = vst [vmem:[#allocation24 + $0x8] sm:$0xff] %v2902
    %v2905 = vpack.c.bf16 %v2316, %v2315
    %v2906 = vld [vmem:[#allocation14] sm:$0xf]
    %v2907 = vld [vmem:[#allocation14 + $0x4] sm:$0xf]
    %v2908 = vld [vmem:[#allocation14 + $0x8] sm:$0xf]
    %v2909 = vld [vmem:[#allocation14 + $0xc] sm:$0xf]
    %v2910 = vld [vmem:[#allocation14 + $0x10] sm:$0xf]
    %v2911 = vld [vmem:[#allocation14 + $0x14] sm:$0xf]
    %v2912 = vld [vmem:[#allocation14 + $0x18] sm:$0xf]
    %v2913 = vld [vmem:[#allocation14 + $0x1c] sm:$0xf]
    %v2914 = vld [vmem:[#allocation14 + $0x20] sm:$0xf]
    %v2915 = vld [vmem:[#allocation14 + $0x24] sm:$0xf]
    %v2916 = vld [vmem:[#allocation14 + $0x28] sm:$0xf]
    %v2917 = vld [vmem:[#allocation14 + $0x2c] sm:$0xf]
    %v2918 = vld [vmem:[#allocation14 + $0x30] sm:$0xf]
    %v2919 = vld [vmem:[#allocation14 + $0x34] sm:$0xf]
    %v2920 = vld [vmem:[#allocation14 + $0x38] sm:$0xf]
    %v2921 = vld [vmem:[#allocation14 + $0x3c] sm:$0xf]
    %v2938 = vunpack.c.l.b16 %v2906
    %v2939 = vunpack.c.l.b16 %v2907
    %v2940 = vunpack.c.l.b16 %v2908
    %v2941 = vunpack.c.l.b16 %v2909
    %v2942 = vunpack.c.l.b16 %v2910
    %v2943 = vunpack.c.l.b16 %v2911
    %v2944 = vunpack.c.l.b16 %v2912
    %v2945 = vunpack.c.l.b16 %v2913
    %v2946 = vunpack.c.l.b16 %v2914
    %v2947 = vunpack.c.l.b16 %v2915
    %v2948 = vunpack.c.l.b16 %v2916
    %v2949 = vunpack.c.l.b16 %v2917
    %v2950 = vunpack.c.l.b16 %v2918
    %v2951 = vunpack.c.l.b16 %v2919
    %v2952 = vunpack.c.l.b16 %v2920
    %v2953 = vunpack.c.l.b16 %v2921
    %v2954 = vpack.c.b16 %v2939, %v2938
    %v2955 = vpack.c.b16 %v2941, %v2940
    %v2956 = vpack.c.b16 %v2943, %v2942
    %v2957 = vpack.c.b16 %v2945, %v2944
    %v2958 = vpack.c.b16 %v2947, %v2946
    %v2959 = vpack.c.b16 %v2949, %v2948
    %v2960 = vpack.c.b16 %v2951, %v2950
    %v2961 = vpack.c.b16 %v2953, %v2952
    %2970 = vmatprep.subr.bf16.mxu0 0
    %2971 = vmatpush1.bf16.msra.mxu0 %v2954
    %2972 = vmatprep.subr.bf16.mxu0 0
    %2973 = vmatpush1.bf16.msra.mxu0 %v2955
    %2974 = vmatprep.subr.bf16.mxu0 0
    %2975 = vmatpush1.bf16.msra.mxu0 %v2956
    %2976 = vmatprep.subr.bf16.mxu0 0
    %2977 = vmatpush1.bf16.msra.mxu0 %v2957
    %2978 = vmatprep.subr.bf16.mxu0 0
    %2979 = vmatpush1.bf16.msra.mxu0 %v2958
    %2980 = vmatprep.subr.bf16.mxu0 0
    %2981 = vmatpush1.bf16.msra.mxu0 %v2959
    %2982 = vmatprep.subr.bf16.mxu0 0
    %2983 = vmatpush1.bf16.msra.mxu0 %v2960
    %2984 = vmatprep.subr.bf16.mxu0 0
    %2985 = vmatpush1.bf16.msra.mxu0 %v2961
    %2986 = vmatprep.subr.bf16.mxu0 0
    %2987 = vmatpush1.bf16.msra.mxu0 0
    %2988 = vmatprep.subr.bf16.mxu0 0
    %2989 = vmatpush1.bf16.msra.mxu0 0
    %2990 = vmatprep.subr.bf16.mxu0 0
    %2991 = vmatpush1.bf16.msra.mxu0 0
    %2992 = vmatprep.subr.bf16.mxu0 0
    %2993 = vmatpush1.bf16.msra.mxu0 0
    %2994 = vmatprep.subr.bf16.mxu0 0
    %2995 = vmatpush1.bf16.msra.mxu0 0
    %2996 = vmatprep.subr.bf16.mxu0 0
    %2997 = vmatpush1.bf16.msra.mxu0 0
    %2998 = vmatprep.subr.bf16.mxu0 0
    %2999 = vmatpush1.bf16.msra.mxu0 0
    %3000 = vmatprep.subr.bf16.mxu0 0
    %3001 = vmatpush1.bf16.msra.mxu0 0
    %3002 = vmatprep.mubr.bf16.mxu0 0
    %3003 = vmatmul.mubr.bf16.gmra.mrb[0].mxu0 %v2905
    %v3004 = vpop.f32.mrb[0].mxu0
    %v3005 = vadd.f32 0.0, %v3004
    %v3006 = vpop.f32.mrb[0].mxu0
    %v3007 = vpop.f32.mrb[0].mxu0
    %v3008 = vadd.f32 0.0, %v3007
    %v3009 = vpop.f32.mrb[0].mxu0
    %3010 = vdwg.mxu0
    %v3011 = vld [vmem:[#allocation20] sm:$0xff]
    %v3012 = vld [vmem:[#allocation20 + $0x8] sm:$0xff]
    %v3013 = vld [vmem:[#allocation20 + $0x10] sm:$0xff]
    %v3014 = vld [vmem:[#allocation20 + $0x18] sm:$0xff]
    %v3015 = vld [vmem:[#allocation22 + $0x5] sm:$0x1]
    %v3016 = vlaneseq
    %v3017 = vshrl.u32 %v3016, 7
    %v3018 = vsub.s32 0, %v3017
    %v3019 = vrot.slane %v3015, %v3018
    %v3021 = vsel %vm1341, %v3011, 0
    %v3024 = vsel %vm1341, %v3012, 0
    %v3027 = vsel %vm1341, %v3013, 0
    %v3030 = vsel %vm1341, %v3014, 0
    %3032 = vmatprep.subr.mxu0 0.0
    %3033 = vmatpush1.msra.mxu0 %v3005
    %3034 = vmatprep.subr.mxu0 0.0
    %3035 = vmatpush1.msra.mxu0 %v3008
    %3036 = vmatprep.subr.mxu0 0.0
    %3037 = vmatpush1.msra.mxu0 0.0
    %3038 = vmatprep.subr.mxu0 0.0
    %3039 = vmatpush1.msra.mxu0 0.0
    %3040 = vmatprep.subr.mxu0 0.0
    %3041 = vmatpush1.msra.mxu0 0.0
    %3042 = vmatprep.subr.mxu0 0.0
    %3043 = vmatpush1.msra.mxu0 0.0
    %3044 = vmatprep.subr.mxu0 0.0
    %3045 = vmatpush1.msra.mxu0 0.0
    %3046 = vmatprep.subr.mxu0 0.0
    %3047 = vmatpush1.msra.mxu0 0.0
    %3048 = vmatprep.subr.mxu0 0.0
    %3049 = vmatpush1.msra.mxu0 0.0
    %3050 = vmatprep.subr.mxu0 0.0
    %3051 = vmatpush1.msra.mxu0 0.0
    %3052 = vmatprep.subr.mxu0 0.0
    %3053 = vmatpush1.msra.mxu0 0.0
    %3054 = vmatprep.subr.mxu0 0.0
    %3055 = vmatpush1.msra.mxu0 0.0
    %3056 = vmatprep.subr.mxu0 0.0
    %3057 = vmatpush1.msra.mxu0 0.0
    %3058 = vmatprep.subr.mxu0 0.0
    %3059 = vmatpush1.msra.mxu0 0.0
    %3060 = vmatprep.subr.mxu0 0.0
    %3061 = vmatpush1.msra.mxu0 0.0
    %3062 = vmatprep.subr.mxu0 0.0
    %3063 = vmatpush1.msra.mxu0 0.0
    %3064 = vmatprep.subr.mxu0 0.0
    %3065 = vmatpush1.msra.mxu0 0.0
    %3066 = vmatprep.subr.mxu0 0.0
    %3067 = vmatpush1.msra.mxu0 0.0
    %3068 = vmatprep.subr.mxu0 0.0
    %3069 = vmatpush1.msra.mxu0 0.0
    %3070 = vmatprep.subr.mxu0 0.0
    %3071 = vmatpush1.msra.mxu0 0.0
    %3072 = vmatprep.subr.mxu0 0.0
    %3073 = vmatpush1.msra.mxu0 0.0
    %3074 = vmatprep.subr.mxu0 0.0
    %3075 = vmatpush1.msra.mxu0 0.0
    %3076 = vmatprep.subr.mxu0 0.0
    %3077 = vmatpush1.msra.mxu0 0.0
    %3078 = vmatprep.subr.mxu0 0.0
    %3079 = vmatpush1.msra.mxu0 0.0
    %3080 = vmatprep.subr.mxu0 0.0
    %3081 = vmatpush1.msra.mxu0 0.0
    %3082 = vmatprep.subr.mxu0 0.0
    %3083 = vmatpush1.msra.mxu0 0.0
    %3084 = vmatprep.subr.mxu0 0.0
    %3085 = vmatpush1.msra.mxu0 0.0
    %3086 = vmatprep.subr.mxu0 0.0
    %3087 = vmatpush1.msra.mxu0 0.0
    %3088 = vmatprep.subr.mxu0 0.0
    %3089 = vmatpush1.msra.mxu0 0.0
    %3090 = vmatprep.subr.mxu0 0.0
    %3091 = vmatpush1.msra.mxu0 0.0
    %3092 = vmatprep.subr.mxu0 0.0
    %3093 = vmatpush1.msra.mxu0 0.0
    %3094 = vmatprep.subr.mxu0 0.0
    %3095 = vmatpush1.msra.mxu0 0.0
    %3096 = vmatprep.mubr.f32.mxu0 0.0
    %3097 = vmatmul.mubr.f32.gmra.mrb[0].mxu0 %v3021
    %v3098 = vpop.f32.mrb[0].mxu0
    %v3099 = vadd.f32 %v3019, %v3098
    %v3100 = vpop.f32.mrb[0].mxu0
    %3101 = vmatprep.mubr.f32.mxu0 0.0
    %3102 = vmatmul.mubr.f32.gmra.mrb[0].mxu0 %v3024
    %v3103 = vpop.f32.mrb[0].mxu0
    %v3104 = vadd.f32 %v3019, %v3103
    %v3105 = vpop.f32.mrb[0].mxu0
    %3106 = vmatprep.mubr.f32.mxu0 0.0
    %3107 = vmatmul.mubr.f32.gmra.mrb[0].mxu0 %v3027
    %v3108 = vpop.f32.mrb[0].mxu0
    %v3109 = vadd.f32 %v3019, %v3108
    %v3110 = vpop.f32.mrb[0].mxu0
    %3111 = vmatprep.mubr.f32.mxu0 0.0
    %3112 = vmatmul.mubr.f32.gmra.mrb[0].mxu0 %v3030
    %v3113 = vpop.f32.mrb[0].mxu0
    %v3114 = vadd.f32 %v3019, %v3113
    %v3115 = vpop.f32.mrb[0].mxu0
    %3116 = vdwg.mxu0
    %v3117 = vadd.f32 %v1336, %v3099
    %v3118 = vadd.f32 %v1337, %v3104
    %v3119 = vadd.f32 %v1338, %v3109
    %v3120 = vadd.f32 %v1339, %v3114
    %v3121 = vmax.f32 %v3117, 0.0
    %v3122 = vmax.f32 %v3118, 0.0
    %v3123 = vmax.f32 %v3119, 0.0
    %v3124 = vmax.f32 %v3120, 0.0
    %3125 = vst [vmem:[#allocation23] sm:$0xff] %v3121
    %3126 = vst [vmem:[#allocation23 + $0x8] sm:$0xff] %v3122
    %3127 = vst [vmem:[#allocation23 + $0x10] sm:$0xff] %v3123
    %3128 = vst [vmem:[#allocation23 + $0x18] sm:$0xff] %v3124
    // Predicated region
    $region106: #{tpu_custom_call.1} parent=1 // pred_check
      _
    $region107: #{tpu_custom_call.1} parent=1 // pred_check_branch
      %3130 = sbr.rel (0) target = $region109
    $region108: #{tpu_custom_call.1} parent=1 // pred_region
      %s3132 = ssub.s32 512, 512
      %3133 = vsyncadd [#allocation4], %s3132
      %s3134 = sshll.u32 [#allocation23], 4
      %s3135 = int_to_ptr.vmem [resolvable:$true] %s3134
      %3140 = dma.vmem_to_hbm [thread:$0]  %s3135, 512, %s13, [#allocation4], 128, 128, 8
    $region109: #{tpu_custom_call.1} parent=1 // pred_fallthru
      _
    // Predicated region
    $region110: #{tpu_custom_call.1} parent=1 // pred_check
      _
    $region111: #{tpu_custom_call.1} parent=1 // pred_check_branch
      %3142 = sbr.rel (0) target = $region113
    $region112: #{tpu_custom_call.1} parent=1 // pred_region
      %s3144 = ssub.s32 256, 256
      %3145 = vsyncadd [#allocation25], %s3144
      %s3146 = sshll.u32 [#allocation24], 4
      %s3147 = int_to_ptr.vmem [resolvable:$true] %s3146
      %3152 = dma.vmem_to_hbm [thread:$0]  %s3147, 256, %s14, [#allocation25], 128, 128, 8
    $region113: #{tpu_custom_call.1} parent=1 // pred_fallthru
      _
    // Predicated region
    $region114: #{tpu_custom_call.1} parent=1 // pred_check
      _
    $region115: #{tpu_custom_call.1} parent=1 // pred_check_branch
      %3154 = sbr.rel (0) target = $region117
    $region116: #{tpu_custom_call.1} parent=1 // pred_region
      %3155 = dma.done [#allocation4], 512
    $region117: #{tpu_custom_call.1} parent=1 // pred_fallthru
      _
    // Predicated region
    $region118: #{tpu_custom_call.1} parent=1 // pred_check
      _
    $region119: #{tpu_custom_call.1} parent=1 // pred_check_branch
      %3157 = sbr.rel (0) target = $region121
    $region120: #{tpu_custom_call.1} parent=1 // pred_region
      %3158 = dma.done [#allocation25], 256
    $region121: #{tpu_custom_call.1} parent=1 // pred_fallthru
      _
    %3159 = vsyncpa [#allocation3], 1
    %3160 = vsyncpa [#allocation6], 1
    %3161 = vsyncpa [#allocation9], 1
    %3162 = vsyncpa [#allocation12], 1
    %3163 = vsyncpa [#allocation15], 1
    %3164 = vsyncpa [#allocation18], 1
    %3165 = vsyncpa [#allocation21], 1
    %3166 = vsyncpa [#allocation4], 1
    %3167 = vsyncpa [#allocation25], 1

</llo_original>
